<compile_context>
chip_gen: v5e
topology: v5e:2x2
jax: 0.10.0
libtpu: 0.0.40
codegen_flags: <defaults>
</compile_context>

<pallas_src>
import jax
import jax.numpy as jnp
from jax.experimental import pallas as pl
from jax.experimental.pallas import tpu as pltpu

# ----------------------------- model hyper-params ---------------------------
IN_CH = 3        # in_channels
OUT_CH = 1       # out_channels
F = 8            # n_features (small, synthetic)
DEPTH = 3        # depth (small, synthetic)
BN_EPS = 1e-5
CIN0 = IN_CH + (-IN_CH) % 8      # first conv input channels padded to a sublane group

_PARAMS = pltpu.CompilerParams(
    dimension_semantics=("arbitrary",),
    vmem_limit_bytes=32 * 1024 * 1024,   # plenty at these sizes; raise + tile for MRI res
)


def _full2d(shape):
    return pl.BlockSpec(shape, lambda i: (0, 0))


# ------------------------------ geometry helpers -----------------------------
def make_geom(N, H, W):
    """Lane-dense slab geometry for one resolution level.

    Activations live as (C, Rp): channels on sublanes, the flattened zero-padded
    spatial grid (N, H+2, W+2) on lanes, tail-padded to a multiple of 128 lanes.
    Padded-border pixels and tail lanes are kept at exactly 0, so every 3x3 tap
    of a conv is a pure lane rotation of the slab (interior taps never wrap).
    """
    Hp, Wp = H + 2, W + 2
    R = N * Hp * Wp
    Rp = ((R + 127) // 128) * 128
    hp = jnp.arange(Hp)
    wp = jnp.arange(Wp)
    m = ((hp >= 1) & (hp <= H))[:, None] & ((wp >= 1) & (wp <= W))[None, :]
    mask = jnp.broadcast_to(m[None], (N, Hp, Wp)).reshape(1, R)
    mask = jnp.pad(mask, ((0, 0), (0, Rp - R))).astype(jnp.float32)
    return dict(N=N, H=H, W=W, Hp=Hp, Wp=Wp, R=R, Rp=Rp, mask=mask, count=N * H * W)


def pack(x_cnhw, geom):
    """(C, N, H, W) -> bf16 slab (C, Rp) with zero borders / tail."""
    C = x_cnhw.shape[0]
    xp = jnp.pad(x_cnhw, ((0, 0), (0, 0), (1, 1), (1, 1)))
    flat = xp.reshape(C, geom["R"])
    return jnp.pad(flat, ((0, 0), (0, geom["Rp"] - geom["R"]))).astype(jnp.bfloat16)


def unpack(slab, geom, C):
    """Slab (C, Rp) -> interior pixels (C, N, H, W)."""
    g = geom
    x = slab[:, :g["R"]].reshape(C, g["N"], g["Hp"], g["Wp"])
    return x[:, :, 1:g["H"] + 1, 1:g["W"] + 1]


# ------------------------------ Pallas kernels -------------------------------
def _make_block_kernel(cins, cout, Wp, Rp, inv_count, mode):
    """Fused UNetBlock: conv3x3 -> BN -> ReLU -> conv3x3 -> BN -> ReLU [+ epilogue].

    Each conv is a single dot: the 9 taps of every input are lane-rotated copies
    of one aligned slab read (pltpu.roll -> XLU), stacked along the contraction
    dim (K = 9*sum(cin)), and contracted against a pre-flattened (cout, 9*cin)
    weight.  BN uses single-pass batch statistics over the valid (mask==1) lanes;
    the trailing *mask re-zeroes pad/tail lanes, which *is* the zero padding the
    next conv relies on.  All elementwise / BN math stays in f32.

    mode:
      "slab"  -> emit the bf16 activation slab (skip connection / pooling input)
      "convt" -> emit the ConvTranspose2d(k=2, s=2) taps (4*cout, Rp) = wT @ y2
      "head"  -> emit the final 1x1 conv + bias + sigmoid, (OUT_CH, Rp) f32
    """
    n_in = len(cins)
    offs = [(dy - 1) * Wp + (dx - 1) for dy in range(3) for dx in range(3)]

    def shifted(v, off):
        # tap value x[r + off] == roll(x, -off)[r]; shift kept non-negative.
        s = (-off) % Rp
        return v if s == 0 else pltpu.roll(v, s, axis=1)

    def kernel(*refs):
        xs = [refs[i][...].astype(jnp.float32) for i in range(n_in)]
        w1, g1, b1, w2, g2, b2, mask = (r[...] for r in refs[n_in:n_in + 7])
        extra = refs[n_in + 7:-1]
        out_ref = refs[-1]

        def conv_bn_relu(vals, w, g, b):
            # stacked taps: per tap, the channel blocks of each input in order
            taps = jnp.concatenate(
                [shifted(v, off) for off in offs for v in vals], axis=0)
            z = jnp.dot(w, taps, preferred_element_type=jnp.float32)
            zm = z * mask
            s1 = jnp.sum(zm, axis=1, keepdims=True)          # masked sum
            s2 = jnp.sum(zm * z, axis=1, keepdims=True)      # masked sum of squares
            mean = s1 * inv_count
            var = jnp.maximum(s2 * inv_count - mean * mean, 0.0)
            scale = jax.lax.rsqrt(var + BN_EPS) * g
            shift = b - mean * scale
            return jnp.maximum(z * scale + shift, 0.0) * mask   # ReLU, re-zero pads

        y1 = conv_bn_relu(xs, w1, g1, b1)
        y2 = conv_bn_relu([y1], w2, g2, b2)

        if mode == "slab":
            out_ref[...] = y2.astype(out_ref.dtype)
        elif mode == "convt":
            wt = extra[0][...]
            out_ref[...] = jnp.dot(
                wt, y2, preferred_element_type=jnp.float32).astype(out_ref.dtype)
        else:  # "head": 1x1 conv + bias + exact sigmoid
            wh = extra[0][...]
            bh = extra[1][...]
            zh = jnp.dot(wh, y2, preferred_element_type=jnp.float32) + bh
            out_ref[...] = (1.0 / (1.0 + jnp.exp(-zh))).astype(out_ref.dtype)

    return kernel


def unet_block(xs, p, geom, mode, wt=None, wh=None, bh=None):
    """xs: list of bf16 slabs (cin_i, Rp).  Returns the block's single fused output."""
    cins = tuple(int(x.shape[0]) for x in xs)
    cout = int(p["g1"].shape[0])
    Rp = geom["Rp"]
    kern = _make_block_kernel(cins, cout, geom["Wp"], Rp, 1.0 / geom["count"], mode)

    inputs = [*xs, p["w1"], p["g1"], p["b1"], p["w2"], p["g2"], p["b2"], geom["mask"]]
    if mode == "convt":
        inputs.append(wt)
        out_shape = jax.ShapeDtypeStruct((wt.shape[0], Rp), jnp.bfloat16)
    elif mode == "head":
        inputs += [wh, bh]
        out_shape = jax.ShapeDtypeStruct((wh.shape[0], Rp), jnp.float32)
    else:
        out_shape = jax.ShapeDtypeStruct((cout, Rp), jnp.bfloat16)

    return pl.pallas_call(
        kern,
        out_shape=out_shape,
        grid_spec=pltpu.PrefetchScalarGridSpec(
            num_scalar_prefetch=0, grid=(1,),
            in_specs=[_full2d(a.shape) for a in inputs],
            out_specs=pl.BlockSpec(out_shape.shape, lambda i: (0, 0))),
        compiler_params=_PARAMS,
        # TODO(synk): at MRI resolutions / batch>2, tile the lane (spatial) axis
        # with a halo + two-pass BN partial sums and mark it "parallel" so the two
        # v7x TensorCores split the rows and the slabs fit 64 MiB VMEM.
    )(*inputs)


# --------------------------- XLA data-movement glue ---------------------------
def pool_pack(slab, g_hi, g_lo):
    """2x2/stride-2 max pool of a slab, repacked into the next level's slab."""
    C = slab.shape[0]
    x = unpack(slab, g_hi, C)
    x = x.reshape(C, g_hi["N"], g_hi["H"] // 2, 2, g_hi["W"] // 2, 2)
    return pack(jnp.max(x, axis=(3, 5)), g_lo)
    # TODO(synk): fold the decimation + repack into the block kernel's store via
    # stride-2 lane slices so the pooled slab never round-trips through XLA.


def shuffle_pack(y4, g_lo, g_hi):
    """ConvTranspose taps (4F, Rp_lo) -> pixel-shuffled hi-res slab (F, Rp_hi)."""
    Fc = y4.shape[0] // 4
    yi = y4[:, :g_lo["R"]].reshape(2, 2, Fc, g_lo["N"], g_lo["Hp"], g_lo["Wp"])
    yi = yi[:, :, :, :, 1:g_lo["H"] + 1, 1:g_lo["W"] + 1]
    up = jnp.transpose(yi, (2, 3, 4, 0, 5, 1)).reshape(
        Fc, g_lo["N"], 2 * g_lo["H"], 2 * g_lo["W"])
    return pack(up, g_hi)
    # TODO(synk): this stride-2 lane interleave could be folded into the producing
    # kernel's store with strided lane scatters instead of an XLA transpose pass.


# ------------------------------ parameter prep --------------------------------
def prepare_params(params):
    """PyTorch-layout f32 params -> kernel-ready flattened weights.

    conv1/conv2 biases are *not* loaded: the batch-statistics BatchNorm that
    follows each conv subtracts the batch mean, which cancels them exactly.
    """
    def conv_w(w, cin_pad=0):     # (cout, cin, 3, 3) -> (cout, 9*(cin+pad)) f32
        cout, cin = w.shape[0], w.shape[1]
        if cin_pad:
            w = jnp.pad(w, ((0, 0), (0, cin_pad), (0, 0), (0, 0)))
        return jnp.transpose(w, (0, 2, 3, 1)).reshape(
            cout, 9 * (cin + cin_pad)).astype(jnp.float32)

    def bn_col(v):
        return v.reshape(-1, 1).astype(jnp.float32)

    blocks = []
    for i, p in enumerate(params["blocks"]):
        pad = (CIN0 - IN_CH) if i == 0 else 0
        blocks.append(dict(
            w1=conv_w(p["w1"], cin_pad=pad), g1=bn_col(p["g1"]), b1=bn_col(p["be1"]),
            w2=conv_w(p["w2"]), g2=bn_col(p["g2"]), b2=bn_col(p["be2"])))
    # ConvTranspose2d weight (cin, cout, 2, 2) -> (4*cout, cin), rows = (dy, dx, cout)
    convT = [jnp.transpose(w, (2, 3, 1, 0)).reshape(
                 4 * w.shape[1], w.shape[0]).astype(jnp.float32)
             for w in params["convT"]]
    wf = params["wf"].reshape(OUT_CH, F).astype(jnp.float32)
    bf = params["bf"].reshape(OUT_CH, 1).astype(jnp.float32)
    return dict(blocks=blocks, convT=convT, wf=wf, bf=bf)


# ------------------------------- UNet forward ---------------------------------
def unet_forward(x_nchw, params):
    prep = prepare_params(params)
    N, _, H, W = x_nchw.shape
    geoms = [make_geom(N, H >> l, W >> l) for l in range(DEPTH)]

    def block(idx, xs, geom, mode, wt=None):
        p = prep["blocks"][idx]
        if mode == "head":
            return unet_block(xs, p, geom, mode, wh=prep["wf"], bh=prep["bf"])
        return unet_block(xs, p, geom, mode, wt=wt)

    # NCHW -> (C, N, H, W), pad channels for the first conv, pack into a slab.
    x = jnp.transpose(x_nchw, (1, 0, 2, 3)).astype(jnp.float32)
    x = jnp.pad(x, ((0, CIN0 - IN_CH), (0, 0), (0, 0), (0, 0)))
    slab = pack(x, geoms[0])

    # Encoder: block -> (skip, 2x2 maxpool to the next level).
    skips = []
    for l in range(DEPTH - 1):
        slab = block(l, [slab], geoms[l], "slab")
        skips.append(slab)
        slab = pool_pack(slab, geoms[l], geoms[l + 1])

    # Bottleneck block with the first ConvTranspose fused as its epilogue.
    y4 = block(DEPTH - 1, [slab], geoms[DEPTH - 1], "convt", wt=prep["convT"][0])

    # Decoder: pixel-shuffle the ConvT taps, run the block on (up | skip);
    # non-final blocks emit the next ConvT taps, the final block emits the head.
    head = None
    for d in range(DEPTH - 1):
        lo, hi = DEPTH - 1 - d, DEPTH - 2 - d
        up = shuffle_pack(y4, geoms[lo], geoms[hi])
        skip = skips.pop()
        if d < DEPTH - 2:
            y4 = block(DEPTH + d, [up, skip], geoms[hi], "convt", wt=prep["convT"][d + 1])
        else:
            head = block(DEPTH + d, [up, skip], geoms[hi], "head")

    y = unpack(head, geoms[0], OUT_CH)            # (1, N, H, W)
    return jnp.transpose(y, (1, 0, 2, 3))         # NCHW


# ------------------------------ parameter init --------------------------------
def init_params(key):
    keys = iter(jax.random.split(key, 64))

    def conv_p(cin, cout, k):
        w = 0.1 * jax.random.normal(next(keys), (cout, cin, k, k), jnp.float32)
        b = 0.1 * jax.random.normal(next(keys), (cout,), jnp.float32)
        return w, b

    def block_p(cin, cout):
        # b1/b2 mirror nn.Conv2d's bias but are mathematically canceled by the
        # batch-statistics BatchNorm that follows (see prepare_params).
        w1, b1 = conv_p(cin, cout, 3)
        w2, b2 = conv_p(cout, cout, 3)
        return dict(w1=w1, b1=b1, g1=jnp.ones((cout,), jnp.float32),
                    be1=jnp.zeros((cout,), jnp.float32),
                    w2=w2, b2=b2, g2=jnp.ones((cout,), jnp.float32),
                    be2=jnp.zeros((cout,), jnp.float32))

    blocks = [block_p(IN_CH, F)]
    for _ in range(DEPTH - 2):
        blocks.append(block_p(F, F))
    blocks.append(block_p(F, F))                      # bottleneck
    for _ in range(DEPTH - 1):
        blocks.append(block_p(2 * F, F))              # decoder blocks
    convT = [0.1 * jax.random.normal(next(keys), (F, F, 2, 2), jnp.float32)
             for _ in range(DEPTH - 1)]
    wf, bf = conv_p(F, OUT_CH, 1)
    return dict(blocks=blocks, convT=convT, wf=wf, bf=bf)


# ------------------------------------ main ------------------------------------
if __name__ == "__main__":
    key = jax.random.PRNGKey(0)
    k_params, k_input = jax.random.split(key)
    params = init_params(k_params)

    # small input consistent with the module: (batch=2, in_channels=3, 16x16)
    x = jax.random.normal(k_input, (2, IN_CH, 16, 16), jnp.float32)

    fwd = jax.jit(unet_forward)
    out = jax.block_until_ready(fwd(x, params))

    assert out.shape == (2, OUT_CH, 16, 16), out.shape
    assert bool(jnp.all(jnp.isfinite(out)))
    assert bool(jnp.all((out >= 0.0) & (out <= 1.0)))   # sigmoid output range
    print("KERNEL_OK")
</pallas_src>

<mosaic_0001>
module attributes {stable_mosaic.version = 11 : i64} {
  func.func @kernel(%arg0: i32, %arg1: memref<8x768xbf16, #tpu.memory_space<vmem>>, %arg2: memref<8x72xf32, #tpu.memory_space<vmem>>, %arg3: memref<8x1xf32, #tpu.memory_space<vmem>>, %arg4: memref<8x1xf32, #tpu.memory_space<vmem>>, %arg5: memref<8x72xf32, #tpu.memory_space<vmem>>, %arg6: memref<8x1xf32, #tpu.memory_space<vmem>>, %arg7: memref<8x1xf32, #tpu.memory_space<vmem>>, %arg8: memref<1x768xf32, #tpu.memory_space<vmem>>, %arg9: memref<8x768xbf16, #tpu.memory_space<vmem>>) attributes {dimension_semantics = [#tpu.dimension_semantics<arbitrary>], iteration_bounds = array<i64: 1>, scalar_prefetch = 0 : i64, scratch_operands = 0 : i64, tpu.core_type = #tpu.core_type<tc>, window_params = [{pipeline_mode = #tpu.pipeline_mode<synchronous>, transform_indices = @transform_0, window_bounds = array<i64: 8, 768>}, {pipeline_mode = #tpu.pipeline_mode<synchronous>, transform_indices = @transform_1, window_bounds = array<i64: 8, 72>}, {pipeline_mode = #tpu.pipeline_mode<synchronous>, transform_indices = @transform_2, window_bounds = array<i64: 8, 1>}, {pipeline_mode = #tpu.pipeline_mode<synchronous>, transform_indices = @transform_3, window_bounds = array<i64: 8, 1>}, {pipeline_mode = #tpu.pipeline_mode<synchronous>, transform_indices = @transform_4, window_bounds = array<i64: 8, 72>}, {pipeline_mode = #tpu.pipeline_mode<synchronous>, transform_indices = @transform_5, window_bounds = array<i64: 8, 1>}, {pipeline_mode = #tpu.pipeline_mode<synchronous>, transform_indices = @transform_6, window_bounds = array<i64: 8, 1>}, {pipeline_mode = #tpu.pipeline_mode<synchronous>, transform_indices = @transform_7, window_bounds = array<i64: 1, 768>}, {pipeline_mode = #tpu.pipeline_mode<synchronous>, transform_indices = @transform_8, window_bounds = array<i64: 8, 768>}]} {
    %c0 = arith.constant 0 : index
    %c0_0 = arith.constant 0 : index
    %0 = vector.load %arg1[%c0, %c0_0] : memref<8x768xbf16, #tpu.memory_space<vmem>>, vector<8x768xbf16>
    %1 = arith.extf %0 : vector<8x768xbf16> to vector<8x768xf32>
    %c0_1 = arith.constant 0 : index
    %c0_2 = arith.constant 0 : index
    %2 = vector.load %arg2[%c0_1, %c0_2] : memref<8x72xf32, #tpu.memory_space<vmem>>, vector<8x72xf32>
    %c0_3 = arith.constant 0 : index
    %c0_4 = arith.constant 0 : index
    %3 = vector.load %arg3[%c0_3, %c0_4] : memref<8x1xf32, #tpu.memory_space<vmem>>, vector<8x1xf32>
    %c0_5 = arith.constant 0 : index
    %c0_6 = arith.constant 0 : index
    %4 = vector.load %arg4[%c0_5, %c0_6] : memref<8x1xf32, #tpu.memory_space<vmem>>, vector<8x1xf32>
    %c0_7 = arith.constant 0 : index
    %c0_8 = arith.constant 0 : index
    %5 = vector.load %arg5[%c0_7, %c0_8] : memref<8x72xf32, #tpu.memory_space<vmem>>, vector<8x72xf32>
    %c0_9 = arith.constant 0 : index
    %c0_10 = arith.constant 0 : index
    %6 = vector.load %arg6[%c0_9, %c0_10] : memref<8x1xf32, #tpu.memory_space<vmem>>, vector<8x1xf32>
    %c0_11 = arith.constant 0 : index
    %c0_12 = arith.constant 0 : index
    %7 = vector.load %arg7[%c0_11, %c0_12] : memref<8x1xf32, #tpu.memory_space<vmem>>, vector<8x1xf32>
    %c0_13 = arith.constant 0 : index
    %c0_14 = arith.constant 0 : index
    %8 = vector.load %arg8[%c0_13, %c0_14] : memref<1x768xf32, #tpu.memory_space<vmem>>, vector<1x768xf32>
    %c19_i32 = arith.constant 19 : i32
    %9 = tpu.dynamic_rotate %1 by %c19_i32 dim 1 : vector<8x768xf32>, i32 -> vector<8x768xf32>
    %c18_i32 = arith.constant 18 : i32
    %10 = tpu.dynamic_rotate %1 by %c18_i32 dim 1 : vector<8x768xf32>, i32 -> vector<8x768xf32>
    %c17_i32 = arith.constant 17 : i32
    %11 = tpu.dynamic_rotate %1 by %c17_i32 dim 1 : vector<8x768xf32>, i32 -> vector<8x768xf32>
    %c1_i32 = arith.constant 1 : i32
    %12 = tpu.dynamic_rotate %1 by %c1_i32 dim 1 : vector<8x768xf32>, i32 -> vector<8x768xf32>
    %c767_i32 = arith.constant 767 : i32
    %13 = tpu.dynamic_rotate %1 by %c767_i32 dim 1 : vector<8x768xf32>, i32 -> vector<8x768xf32>
    %c751_i32 = arith.constant 751 : i32
    %14 = tpu.dynamic_rotate %1 by %c751_i32 dim 1 : vector<8x768xf32>, i32 -> vector<8x768xf32>
    %c750_i32 = arith.constant 750 : i32
    %15 = tpu.dynamic_rotate %1 by %c750_i32 dim 1 : vector<8x768xf32>, i32 -> vector<8x768xf32>
    %c749_i32 = arith.constant 749 : i32
    %16 = tpu.dynamic_rotate %1 by %c749_i32 dim 1 : vector<8x768xf32>, i32 -> vector<8x768xf32>
    %17 = tpu.concatenate %9, %10, %11, %12, %1, %13, %14, %15, %16 in 0 : vector<8x768xf32>, vector<8x768xf32>, vector<8x768xf32>, vector<8x768xf32>, vector<8x768xf32>, vector<8x768xf32>, vector<8x768xf32>, vector<8x768xf32>, vector<8x768xf32> -> vector<72x768xf32>
    %cst = arith.constant dense<0.000000e+00> : vector<8x768xf32>
    %18 = tpu.matmul %2, %17, %cst {dimension_numbers = #tpu.dot_dimension_numbers<[1], [0], [0], [1], [0, 0, 1, 1], [], []>} : vector<8x72xf32>, vector<72x768xf32>, vector<8x768xf32> -> vector<8x768xf32>
    %19 = vector.broadcast %8 : vector<1x768xf32> to vector<8x768xf32>
    %20 = arith.mulf %18, %19 : vector<8x768xf32>
    %cst_15 = arith.constant dense<0.000000e+00> : vector<8xf32>
    %21 = vector.multi_reduction <add>, %20, %cst_15 [1] : vector<8x768xf32> to vector<8xf32>
    %22 = vector.shape_cast %21 : vector<8xf32> to vector<8x1xf32>
    %23 = arith.mulf %20, %18 : vector<8x768xf32>
    %cst_16 = arith.constant dense<0.000000e+00> : vector<8xf32>
    %24 = vector.multi_reduction <add>, %23, %cst_16 [1] : vector<8x768xf32> to vector<8xf32>
    %25 = vector.shape_cast %24 : vector<8xf32> to vector<8x1xf32>
    %cst_17 = arith.constant 0.001953125 : f32
    %26 = vector.broadcast %cst_17 : f32 to vector<8x1xf32>
    %27 = arith.mulf %22, %26 : vector<8x1xf32>
    %cst_18 = arith.constant 0.001953125 : f32
    %28 = vector.broadcast %cst_18 : f32 to vector<8x1xf32>
    %29 = arith.mulf %25, %28 : vector<8x1xf32>
    %30 = arith.mulf %27, %27 : vector<8x1xf32>
    %31 = arith.subf %29, %30 : vector<8x1xf32>
    %cst_19 = arith.constant 0.000000e+00 : f32
    %32 = vector.broadcast %cst_19 : f32 to vector<8x1xf32>
    %33 = arith.maximumf %31, %32 : vector<8x1xf32>
    %cst_20 = arith.constant 9.99999974E-6 : f32
    %34 = vector.broadcast %cst_20 : f32 to vector<8x1xf32>
    %35 = arith.addf %33, %34 : vector<8x1xf32>
    %36 = math.rsqrt %35 : vector<8x1xf32>
    %37 = arith.mulf %36, %3 : vector<8x1xf32>
    %38 = arith.mulf %27, %37 : vector<8x1xf32>
    %39 = arith.subf %4, %38 : vector<8x1xf32>
    %40 = vector.broadcast %37 : vector<8x1xf32> to vector<8x768xf32>
    %41 = arith.mulf %18, %40 : vector<8x768xf32>
    %42 = vector.broadcast %39 : vector<8x1xf32> to vector<8x768xf32>
    %43 = arith.addf %41, %42 : vector<8x768xf32>
    %cst_21 = arith.constant 0.000000e+00 : f32
    %44 = vector.broadcast %cst_21 : f32 to vector<8x768xf32>
    %45 = arith.maximumf %43, %44 : vector<8x768xf32>
    %46 = vector.broadcast %8 : vector<1x768xf32> to vector<8x768xf32>
    %47 = arith.mulf %45, %46 : vector<8x768xf32>
    %c19_i32_22 = arith.constant 19 : i32
    %48 = tpu.dynamic_rotate %47 by %c19_i32_22 dim 1 : vector<8x768xf32>, i32 -> vector<8x768xf32>
    %c18_i32_23 = arith.constant 18 : i32
    %49 = tpu.dynamic_rotate %47 by %c18_i32_23 dim 1 : vector<8x768xf32>, i32 -> vector<8x768xf32>
    %c17_i32_24 = arith.constant 17 : i32
    %50 = tpu.dynamic_rotate %47 by %c17_i32_24 dim 1 : vector<8x768xf32>, i32 -> vector<8x768xf32>
    %c1_i32_25 = arith.constant 1 : i32
    %51 = tpu.dynamic_rotate %47 by %c1_i32_25 dim 1 : vector<8x768xf32>, i32 -> vector<8x768xf32>
    %c767_i32_26 = arith.constant 767 : i32
    %52 = tpu.dynamic_rotate %47 by %c767_i32_26 dim 1 : vector<8x768xf32>, i32 -> vector<8x768xf32>
    %c751_i32_27 = arith.constant 751 : i32
    %53 = tpu.dynamic_rotate %47 by %c751_i32_27 dim 1 : vector<8x768xf32>, i32 -> vector<8x768xf32>
    %c750_i32_28 = arith.constant 750 : i32
    %54 = tpu.dynamic_rotate %47 by %c750_i32_28 dim 1 : vector<8x768xf32>, i32 -> vector<8x768xf32>
    %c749_i32_29 = arith.constant 749 : i32
    %55 = tpu.dynamic_rotate %47 by %c749_i32_29 dim 1 : vector<8x768xf32>, i32 -> vector<8x768xf32>
    %56 = tpu.concatenate %48, %49, %50, %51, %47, %52, %53, %54, %55 in 0 : vector<8x768xf32>, vector<8x768xf32>, vector<8x768xf32>, vector<8x768xf32>, vector<8x768xf32>, vector<8x768xf32>, vector<8x768xf32>, vector<8x768xf32>, vector<8x768xf32> -> vector<72x768xf32>
    %cst_30 = arith.constant dense<0.000000e+00> : vector<8x768xf32>
    %57 = tpu.matmul %5, %56, %cst_30 {dimension_numbers = #tpu.dot_dimension_numbers<[1], [0], [0], [1], [0, 0, 1, 1], [], []>} : vector<8x72xf32>, vector<72x768xf32>, vector<8x768xf32> -> vector<8x768xf32>
    %58 = vector.broadcast %8 : vector<1x768xf32> to vector<8x768xf32>
    %59 = arith.mulf %57, %58 : vector<8x768xf32>
    %cst_31 = arith.constant dense<0.000000e+00> : vector<8xf32>
    %60 = vector.multi_reduction <add>, %59, %cst_31 [1] : vector<8x768xf32> to vector<8xf32>
    %61 = vector.shape_cast %60 : vector<8xf32> to vector<8x1xf32>
    %62 = arith.mulf %59, %57 : vector<8x768xf32>
    %cst_32 = arith.constant dense<0.000000e+00> : vector<8xf32>
    %63 = vector.multi_reduction <add>, %62, %cst_32 [1] : vector<8x768xf32> to vector<8xf32>
    %64 = vector.shape_cast %63 : vector<8xf32> to vector<8x1xf32>
    %cst_33 = arith.constant 0.001953125 : f32
    %65 = vector.broadcast %cst_33 : f32 to vector<8x1xf32>
    %66 = arith.mulf %61, %65 : vector<8x1xf32>
    %cst_34 = arith.constant 0.001953125 : f32
    %67 = vector.broadcast %cst_34 : f32 to vector<8x1xf32>
    %68 = arith.mulf %64, %67 : vector<8x1xf32>
    %69 = arith.mulf %66, %66 : vector<8x1xf32>
    %70 = arith.subf %68, %69 : vector<8x1xf32>
    %cst_35 = arith.constant 0.000000e+00 : f32
    %71 = vector.broadcast %cst_35 : f32 to vector<8x1xf32>
    %72 = arith.maximumf %70, %71 : vector<8x1xf32>
    %cst_36 = arith.constant 9.99999974E-6 : f32
    %73 = vector.broadcast %cst_36 : f32 to vector<8x1xf32>
    %74 = arith.addf %72, %73 : vector<8x1xf32>
    %75 = math.rsqrt %74 : vector<8x1xf32>
    %76 = arith.mulf %75, %6 : vector<8x1xf32>
    %77 = arith.mulf %66, %76 : vector<8x1xf32>
    %78 = arith.subf %7, %77 : vector<8x1xf32>
    %79 = vector.broadcast %76 : vector<8x1xf32> to vector<8x768xf32>
    %80 = arith.mulf %57, %79 : vector<8x768xf32>
    %81 = vector.broadcast %78 : vector<8x1xf32> to vector<8x768xf32>
    %82 = arith.addf %80, %81 : vector<8x768xf32>
    %cst_37 = arith.constant 0.000000e+00 : f32
    %83 = vector.broadcast %cst_37 : f32 to vector<8x768xf32>
    %84 = arith.maximumf %82, %83 : vector<8x768xf32>
    %85 = vector.broadcast %8 : vector<1x768xf32> to vector<8x768xf32>
    %86 = arith.mulf %84, %85 : vector<8x768xf32>
    %87 = arith.truncf %86 : vector<8x768xf32> to vector<8x768xbf16>
    %c0_38 = arith.constant 0 : index
    %c0_39 = arith.constant 0 : index
    %88 = vector.load %arg9[%c0_38, %c0_39] : memref<8x768xbf16, #tpu.memory_space<vmem>>, vector<8x768xbf16>
    tpu.vector_store %arg9[%c0_38, %c0_39], %87 {strides = array<i32>} : memref<8x768xbf16, #tpu.memory_space<vmem>>, vector<8x768xbf16>,
    return
  }
  func.func @transform_0(%arg0: i32) -> (i32, i32) {
    %c0_i32 = arith.constant 0 : i32
    %c0_i32_0 = arith.constant 0 : i32
    %c0_i32_1 = arith.constant 0 : i32
    return %c0_i32, %c0_i32_0 : i32, i32
  }
  func.func @transform_1(%arg0: i32) -> (i32, i32) {
    %c0_i32 = arith.constant 0 : i32
    %c0_i32_0 = arith.constant 0 : i32
    %c0_i32_1 = arith.constant 0 : i32
    return %c0_i32, %c0_i32_0 : i32, i32
  }
  func.func @transform_2(%arg0: i32) -> (i32, i32) {
    %c0_i32 = arith.constant 0 : i32
    %c0_i32_0 = arith.constant 0 : i32
    %c0_i32_1 = arith.constant 0 : i32
    return %c0_i32, %c0_i32_0 : i32, i32
  }
  func.func @transform_3(%arg0: i32) -> (i32, i32) {
    %c0_i32 = arith.constant 0 : i32
    %c0_i32_0 = arith.constant 0 : i32
    %c0_i32_1 = arith.constant 0 : i32
    return %c0_i32, %c0_i32_0 : i32, i32
  }
  func.func @transform_4(%arg0: i32) -> (i32, i32) {
    %c0_i32 = arith.constant 0 : i32
    %c0_i32_0 = arith.constant 0 : i32
    %c0_i32_1 = arith.constant 0 : i32
    return %c0_i32, %c0_i32_0 : i32, i32
  }
  func.func @transform_5(%arg0: i32) -> (i32, i32) {
    %c0_i32 = arith.constant 0 : i32
    %c0_i32_0 = arith.constant 0 : i32
    %c0_i32_1 = arith.constant 0 : i32
    return %c0_i32, %c0_i32_0 : i32, i32
  }
  func.func @transform_6(%arg0: i32) -> (i32, i32) {
    %c0_i32 = arith.constant 0 : i32
    %c0_i32_0 = arith.constant 0 : i32
    %c0_i32_1 = arith.constant 0 : i32
    return %c0_i32, %c0_i32_0 : i32, i32
  }
  func.func @transform_7(%arg0: i32) -> (i32, i32) {
    %c0_i32 = arith.constant 0 : i32
    %c0_i32_0 = arith.constant 0 : i32
    %c0_i32_1 = arith.constant 0 : i32
    return %c0_i32, %c0_i32_0 : i32, i32
  }
  func.func @transform_8(%arg0: i32) -> (i32, i32) {
    %c0_i32 = arith.constant 0 : i32
    %c0_i32_0 = arith.constant 0 : i32
    %c0_i32_1 = arith.constant 0 : i32
    return %c0_i32, %c0_i32_0 : i32, i32
  }
}

module attributes {stable_mosaic.version = 11 : i64} {
  func.func @kernel(%arg0: i32, %arg1: memref<8x256xbf16, #tpu.memory_space<vmem>>, %arg2: memref<8x72xf32, #tpu.memory_space<vmem>>, %arg3: memref<8x1xf32, #tpu.memory_space<vmem>>, %arg4: memref<8x1xf32, #tpu.memory_space<vmem>>, %arg5: memref<8x72xf32, #tpu.memory_space<vmem>>, %arg6: memref<8x1xf32, #tpu.memory_space<vmem>>, %arg7: memref<8x1xf32, #tpu.memory_space<vmem>>, %arg8: memref<1x256xf32, #tpu.memory_space<vmem>>, %arg9: memref<8x256xbf16, #tpu.memory_space<vmem>>) attributes {dimension_semantics = [#tpu.dimension_semantics<arbitrary>], iteration_bounds = array<i64: 1>, scalar_prefetch = 0 : i64, scratch_operands = 0 : i64, tpu.core_type = #tpu.core_type<tc>, window_params = [{pipeline_mode = #tpu.pipeline_mode<synchronous>, transform_indices = @transform_0, window_bounds = array<i64: 8, 256>}, {pipeline_mode = #tpu.pipeline_mode<synchronous>, transform_indices = @transform_1, window_bounds = array<i64: 8, 72>}, {pipeline_mode = #tpu.pipeline_mode<synchronous>, transform_indices = @transform_2, window_bounds = array<i64: 8, 1>}, {pipeline_mode = #tpu.pipeline_mode<synchronous>, transform_indices = @transform_3, window_bounds = array<i64: 8, 1>}, {pipeline_mode = #tpu.pipeline_mode<synchronous>, transform_indices = @transform_4, window_bounds = array<i64: 8, 72>}, {pipeline_mode = #tpu.pipeline_mode<synchronous>, transform_indices = @transform_5, window_bounds = array<i64: 8, 1>}, {pipeline_mode = #tpu.pipeline_mode<synchronous>, transform_indices = @transform_6, window_bounds = array<i64: 8, 1>}, {pipeline_mode = #tpu.pipeline_mode<synchronous>, transform_indices = @transform_7, window_bounds = array<i64: 1, 256>}, {pipeline_mode = #tpu.pipeline_mode<synchronous>, transform_indices = @transform_8, window_bounds = array<i64: 8, 256>}]} {
    %c0 = arith.constant 0 : index
    %c0_0 = arith.constant 0 : index
    %0 = vector.load %arg1[%c0, %c0_0] : memref<8x256xbf16, #tpu.memory_space<vmem>>, vector<8x256xbf16>
    %1 = arith.extf %0 : vector<8x256xbf16> to vector<8x256xf32>
    %c0_1 = arith.constant 0 : index
    %c0_2 = arith.constant 0 : index
    %2 = vector.load %arg2[%c0_1, %c0_2] : memref<8x72xf32, #tpu.memory_space<vmem>>, vector<8x72xf32>
    %c0_3 = arith.constant 0 : index
    %c0_4 = arith.constant 0 : index
    %3 = vector.load %arg3[%c0_3, %c0_4] : memref<8x1xf32, #tpu.memory_space<vmem>>, vector<8x1xf32>
    %c0_5 = arith.constant 0 : index
    %c0_6 = arith.constant 0 : index
    %4 = vector.load %arg4[%c0_5, %c0_6] : memref<8x1xf32, #tpu.memory_space<vmem>>, vector<8x1xf32>
    %c0_7 = arith.constant 0 : index
    %c0_8 = arith.constant 0 : index
    %5 = vector.load %arg5[%c0_7, %c0_8] : memref<8x72xf32, #tpu.memory_space<vmem>>, vector<8x72xf32>
    %c0_9 = arith.constant 0 : index
    %c0_10 = arith.constant 0 : index
    %6 = vector.load %arg6[%c0_9, %c0_10] : memref<8x1xf32, #tpu.memory_space<vmem>>, vector<8x1xf32>
    %c0_11 = arith.constant 0 : index
    %c0_12 = arith.constant 0 : index
    %7 = vector.load %arg7[%c0_11, %c0_12] : memref<8x1xf32, #tpu.memory_space<vmem>>, vector<8x1xf32>
    %c0_13 = arith.constant 0 : index
    %c0_14 = arith.constant 0 : index
    %8 = vector.load %arg8[%c0_13, %c0_14] : memref<1x256xf32, #tpu.memory_space<vmem>>, vector<1x256xf32>
    %c11_i32 = arith.constant 11 : i32
    %9 = tpu.dynamic_rotate %1 by %c11_i32 dim 1 : vector<8x256xf32>, i32 -> vector<8x256xf32>
    %c10_i32 = arith.constant 10 : i32
    %10 = tpu.dynamic_rotate %1 by %c10_i32 dim 1 : vector<8x256xf32>, i32 -> vector<8x256xf32>
    %c9_i32 = arith.constant 9 : i32
    %11 = tpu.dynamic_rotate %1 by %c9_i32 dim 1 : vector<8x256xf32>, i32 -> vector<8x256xf32>
    %c1_i32 = arith.constant 1 : i32
    %12 = tpu.dynamic_rotate %1 by %c1_i32 dim 1 : vector<8x256xf32>, i32 -> vector<8x256xf32>
    %c255_i32 = arith.constant 255 : i32
    %13 = tpu.dynamic_rotate %1 by %c255_i32 dim 1 : vector<8x256xf32>, i32 -> vector<8x256xf32>
    %c247_i32 = arith.constant 247 : i32
    %14 = tpu.dynamic_rotate %1 by %c247_i32 dim 1 : vector<8x256xf32>, i32 -> vector<8x256xf32>
    %c246_i32 = arith.constant 246 : i32
    %15 = tpu.dynamic_rotate %1 by %c246_i32 dim 1 : vector<8x256xf32>, i32 -> vector<8x256xf32>
    %c245_i32 = arith.constant 245 : i32
    %16 = tpu.dynamic_rotate %1 by %c245_i32 dim 1 : vector<8x256xf32>, i32 -> vector<8x256xf32>
    %17 = tpu.concatenate %9, %10, %11, %12, %1, %13, %14, %15, %16 in 0 : vector<8x256xf32>, vector<8x256xf32>, vector<8x256xf32>, vector<8x256xf32>, vector<8x256xf32>, vector<8x256xf32>, vector<8x256xf32>, vector<8x256xf32>, vector<8x256xf32> -> vector<72x256xf32>
    %cst = arith.constant dense<0.000000e+00> : vector<8x256xf32>
    %18 = tpu.matmul %2, %17, %cst {dimension_numbers = #tpu.dot_dimension_numbers<[1], [0], [0], [1], [0, 0, 1, 1], [], []>} : vector<8x72xf32>, vector<72x256xf32>, vector<8x256xf32> -> vector<8x256xf32>
    %19 = vector.broadcast %8 : vector<1x256xf32> to vector<8x256xf32>
    %20 = arith.mulf %18, %19 : vector<8x256xf32>
    %cst_15 = arith.constant dense<0.000000e+00> : vector<8xf32>
    %21 = vector.multi_reduction <add>, %20, %cst_15 [1] : vector<8x256xf32> to vector<8xf32>
    %22 = vector.shape_cast %21 : vector<8xf32> to vector<8x1xf32>
    %23 = arith.mulf %20, %18 : vector<8x256xf32>
    %cst_16 = arith.constant dense<0.000000e+00> : vector<8xf32>
    %24 = vector.multi_reduction <add>, %23, %cst_16 [1] : vector<8x256xf32> to vector<8xf32>
    %25 = vector.shape_cast %24 : vector<8xf32> to vector<8x1xf32>
    %cst_17 = arith.constant 7.812500e-03 : f32
    %26 = vector.broadcast %cst_17 : f32 to vector<8x1xf32>
    %27 = arith.mulf %22, %26 : vector<8x1xf32>
    %cst_18 = arith.constant 7.812500e-03 : f32
    %28 = vector.broadcast %cst_18 : f32 to vector<8x1xf32>
    %29 = arith.mulf %25, %28 : vector<8x1xf32>
    %30 = arith.mulf %27, %27 : vector<8x1xf32>
    %31 = arith.subf %29, %30 : vector<8x1xf32>
    %cst_19 = arith.constant 0.000000e+00 : f32
    %32 = vector.broadcast %cst_19 : f32 to vector<8x1xf32>
    %33 = arith.maximumf %31, %32 : vector<8x1xf32>
    %cst_20 = arith.constant 9.99999974E-6 : f32
    %34 = vector.broadcast %cst_20 : f32 to vector<8x1xf32>
    %35 = arith.addf %33, %34 : vector<8x1xf32>
    %36 = math.rsqrt %35 : vector<8x1xf32>
    %37 = arith.mulf %36, %3 : vector<8x1xf32>
    %38 = arith.mulf %27, %37 : vector<8x1xf32>
    %39 = arith.subf %4, %38 : vector<8x1xf32>
    %40 = vector.broadcast %37 : vector<8x1xf32> to vector<8x256xf32>
    %41 = arith.mulf %18, %40 : vector<8x256xf32>
    %42 = vector.broadcast %39 : vector<8x1xf32> to vector<8x256xf32>
    %43 = arith.addf %41, %42 : vector<8x256xf32>
    %cst_21 = arith.constant 0.000000e+00 : f32
    %44 = vector.broadcast %cst_21 : f32 to vector<8x256xf32>
    %45 = arith.maximumf %43, %44 : vector<8x256xf32>
    %46 = vector.broadcast %8 : vector<1x256xf32> to vector<8x256xf32>
    %47 = arith.mulf %45, %46 : vector<8x256xf32>
    %c11_i32_22 = arith.constant 11 : i32
    %48 = tpu.dynamic_rotate %47 by %c11_i32_22 dim 1 : vector<8x256xf32>, i32 -> vector<8x256xf32>
    %c10_i32_23 = arith.constant 10 : i32
    %49 = tpu.dynamic_rotate %47 by %c10_i32_23 dim 1 : vector<8x256xf32>, i32 -> vector<8x256xf32>
    %c9_i32_24 = arith.constant 9 : i32
    %50 = tpu.dynamic_rotate %47 by %c9_i32_24 dim 1 : vector<8x256xf32>, i32 -> vector<8x256xf32>
    %c1_i32_25 = arith.constant 1 : i32
    %51 = tpu.dynamic_rotate %47 by %c1_i32_25 dim 1 : vector<8x256xf32>, i32 -> vector<8x256xf32>
    %c255_i32_26 = arith.constant 255 : i32
    %52 = tpu.dynamic_rotate %47 by %c255_i32_26 dim 1 : vector<8x256xf32>, i32 -> vector<8x256xf32>
    %c247_i32_27 = arith.constant 247 : i32
    %53 = tpu.dynamic_rotate %47 by %c247_i32_27 dim 1 : vector<8x256xf32>, i32 -> vector<8x256xf32>
    %c246_i32_28 = arith.constant 246 : i32
    %54 = tpu.dynamic_rotate %47 by %c246_i32_28 dim 1 : vector<8x256xf32>, i32 -> vector<8x256xf32>
    %c245_i32_29 = arith.constant 245 : i32
    %55 = tpu.dynamic_rotate %47 by %c245_i32_29 dim 1 : vector<8x256xf32>, i32 -> vector<8x256xf32>
    %56 = tpu.concatenate %48, %49, %50, %51, %47, %52, %53, %54, %55 in 0 : vector<8x256xf32>, vector<8x256xf32>, vector<8x256xf32>, vector<8x256xf32>, vector<8x256xf32>, vector<8x256xf32>, vector<8x256xf32>, vector<8x256xf32>, vector<8x256xf32> -> vector<72x256xf32>
    %cst_30 = arith.constant dense<0.000000e+00> : vector<8x256xf32>
    %57 = tpu.matmul %5, %56, %cst_30 {dimension_numbers = #tpu.dot_dimension_numbers<[1], [0], [0], [1], [0, 0, 1, 1], [], []>} : vector<8x72xf32>, vector<72x256xf32>, vector<8x256xf32> -> vector<8x256xf32>
    %58 = vector.broadcast %8 : vector<1x256xf32> to vector<8x256xf32>
    %59 = arith.mulf %57, %58 : vector<8x256xf32>
    %cst_31 = arith.constant dense<0.000000e+00> : vector<8xf32>
    %60 = vector.multi_reduction <add>, %59, %cst_31 [1] : vector<8x256xf32> to vector<8xf32>
    %61 = vector.shape_cast %60 : vector<8xf32> to vector<8x1xf32>
    %62 = arith.mulf %59, %57 : vector<8x256xf32>
    %cst_32 = arith.constant dense<0.000000e+00> : vector<8xf32>
    %63 = vector.multi_reduction <add>, %62, %cst_32 [1] : vector<8x256xf32> to vector<8xf32>
    %64 = vector.shape_cast %63 : vector<8xf32> to vector<8x1xf32>
    %cst_33 = arith.constant 7.812500e-03 : f32
    %65 = vector.broadcast %cst_33 : f32 to vector<8x1xf32>
    %66 = arith.mulf %61, %65 : vector<8x1xf32>
    %cst_34 = arith.constant 7.812500e-03 : f32
    %67 = vector.broadcast %cst_34 : f32 to vector<8x1xf32>
    %68 = arith.mulf %64, %67 : vector<8x1xf32>
    %69 = arith.mulf %66, %66 : vector<8x1xf32>
    %70 = arith.subf %68, %69 : vector<8x1xf32>
    %cst_35 = arith.constant 0.000000e+00 : f32
    %71 = vector.broadcast %cst_35 : f32 to vector<8x1xf32>
    %72 = arith.maximumf %70, %71 : vector<8x1xf32>
    %cst_36 = arith.constant 9.99999974E-6 : f32
    %73 = vector.broadcast %cst_36 : f32 to vector<8x1xf32>
    %74 = arith.addf %72, %73 : vector<8x1xf32>
    %75 = math.rsqrt %74 : vector<8x1xf32>
    %76 = arith.mulf %75, %6 : vector<8x1xf32>
    %77 = arith.mulf %66, %76 : vector<8x1xf32>
    %78 = arith.subf %7, %77 : vector<8x1xf32>
    %79 = vector.broadcast %76 : vector<8x1xf32> to vector<8x256xf32>
    %80 = arith.mulf %57, %79 : vector<8x256xf32>
    %81 = vector.broadcast %78 : vector<8x1xf32> to vector<8x256xf32>
    %82 = arith.addf %80, %81 : vector<8x256xf32>
    %cst_37 = arith.constant 0.000000e+00 : f32
    %83 = vector.broadcast %cst_37 : f32 to vector<8x256xf32>
    %84 = arith.maximumf %82, %83 : vector<8x256xf32>
    %85 = vector.broadcast %8 : vector<1x256xf32> to vector<8x256xf32>
    %86 = arith.mulf %84, %85 : vector<8x256xf32>
    %87 = arith.truncf %86 : vector<8x256xf32> to vector<8x256xbf16>
    %c0_38 = arith.constant 0 : index
    %c0_39 = arith.constant 0 : index
    %88 = vector.load %arg9[%c0_38, %c0_39] : memref<8x256xbf16, #tpu.memory_space<vmem>>, vector<8x256xbf16>
    tpu.vector_store %arg9[%c0_38, %c0_39], %87 {strides = array<i32>} : memref<8x256xbf16, #tpu.memory_space<vmem>>, vector<8x256xbf16>,
    return
  }
  func.func @transform_0(%arg0: i32) -> (i32, i32) {
    %c0_i32 = arith.constant 0 : i32
    %c0_i32_0 = arith.constant 0 : i32
    %c0_i32_1 = arith.constant 0 : i32
    return %c0_i32, %c0_i32_0 : i32, i32
  }
  func.func @transform_1(%arg0: i32) -> (i32, i32) {
    %c0_i32 = arith.constant 0 : i32
    %c0_i32_0 = arith.constant 0 : i32
    %c0_i32_1 = arith.constant 0 : i32
    return %c0_i32, %c0_i32_0 : i32, i32
  }
  func.func @transform_2(%arg0: i32) -> (i32, i32) {
    %c0_i32 = arith.constant 0 : i32
    %c0_i32_0 = arith.constant 0 : i32
    %c0_i32_1 = arith.constant 0 : i32
    return %c0_i32, %c0_i32_0 : i32, i32
  }
  func.func @transform_3(%arg0: i32) -> (i32, i32) {
    %c0_i32 = arith.constant 0 : i32
    %c0_i32_0 = arith.constant 0 : i32
    %c0_i32_1 = arith.constant 0 : i32
    return %c0_i32, %c0_i32_0 : i32, i32
  }
  func.func @transform_4(%arg0: i32) -> (i32, i32) {
    %c0_i32 = arith.constant 0 : i32
    %c0_i32_0 = arith.constant 0 : i32
    %c0_i32_1 = arith.constant 0 : i32
    return %c0_i32, %c0_i32_0 : i32, i32
  }
  func.func @transform_5(%arg0: i32) -> (i32, i32) {
    %c0_i32 = arith.constant 0 : i32
    %c0_i32_0 = arith.constant 0 : i32
    %c0_i32_1 = arith.constant 0 : i32
    return %c0_i32, %c0_i32_0 : i32, i32
  }
  func.func @transform_6(%arg0: i32) -> (i32, i32) {
    %c0_i32 = arith.constant 0 : i32
    %c0_i32_0 = arith.constant 0 : i32
    %c0_i32_1 = arith.constant 0 : i32
    return %c0_i32, %c0_i32_0 : i32, i32
  }
  func.func @transform_7(%arg0: i32) -> (i32, i32) {
    %c0_i32 = arith.constant 0 : i32
    %c0_i32_0 = arith.constant 0 : i32
    %c0_i32_1 = arith.constant 0 : i32
    return %c0_i32, %c0_i32_0 : i32, i32
  }
  func.func @transform_8(%arg0: i32) -> (i32, i32) {
    %c0_i32 = arith.constant 0 : i32
    %c0_i32_0 = arith.constant 0 : i32
    %c0_i32_1 = arith.constant 0 : i32
    return %c0_i32, %c0_i32_0 : i32, i32
  }
}

module attributes {stable_mosaic.version = 11 : i64} {
  func.func @kernel(%arg0: i32, %arg1: memref<8x128xbf16, #tpu.memory_space<vmem>>, %arg2: memref<8x72xf32, #tpu.memory_space<vmem>>, %arg3: memref<8x1xf32, #tpu.memory_space<vmem>>, %arg4: memref<8x1xf32, #tpu.memory_space<vmem>>, %arg5: memref<8x72xf32, #tpu.memory_space<vmem>>, %arg6: memref<8x1xf32, #tpu.memory_space<vmem>>, %arg7: memref<8x1xf32, #tpu.memory_space<vmem>>, %arg8: memref<1x128xf32, #tpu.memory_space<vmem>>, %arg9: memref<32x8xf32, #tpu.memory_space<vmem>>, %arg10: memref<32x128xbf16, #tpu.memory_space<vmem>>) attributes {dimension_semantics = [#tpu.dimension_semantics<arbitrary>], iteration_bounds = array<i64: 1>, scalar_prefetch = 0 : i64, scratch_operands = 0 : i64, tpu.core_type = #tpu.core_type<tc>, window_params = [{pipeline_mode = #tpu.pipeline_mode<synchronous>, transform_indices = @transform_0, window_bounds = array<i64: 8, 128>}, {pipeline_mode = #tpu.pipeline_mode<synchronous>, transform_indices = @transform_1, window_bounds = array<i64: 8, 72>}, {pipeline_mode = #tpu.pipeline_mode<synchronous>, transform_indices = @transform_2, window_bounds = array<i64: 8, 1>}, {pipeline_mode = #tpu.pipeline_mode<synchronous>, transform_indices = @transform_3, window_bounds = array<i64: 8, 1>}, {pipeline_mode = #tpu.pipeline_mode<synchronous>, transform_indices = @transform_4, window_bounds = array<i64: 8, 72>}, {pipeline_mode = #tpu.pipeline_mode<synchronous>, transform_indices = @transform_5, window_bounds = array<i64: 8, 1>}, {pipeline_mode = #tpu.pipeline_mode<synchronous>, transform_indices = @transform_6, window_bounds = array<i64: 8, 1>}, {pipeline_mode = #tpu.pipeline_mode<synchronous>, transform_indices = @transform_7, window_bounds = array<i64: 1, 128>}, {pipeline_mode = #tpu.pipeline_mode<synchronous>, transform_indices = @transform_8, window_bounds = array<i64: 32, 8>}, {pipeline_mode = #tpu.pipeline_mode<synchronous>, transform_indices = @transform_9, window_bounds = array<i64: 32, 128>}]} {
    %c0 = arith.constant 0 : index
    %c0_0 = arith.constant 0 : index
    %0 = vector.load %arg1[%c0, %c0_0] : memref<8x128xbf16, #tpu.memory_space<vmem>>, vector<8x128xbf16>
    %1 = arith.extf %0 : vector<8x128xbf16> to vector<8x128xf32>
    %c0_1 = arith.constant 0 : index
    %c0_2 = arith.constant 0 : index
    %2 = vector.load %arg2[%c0_1, %c0_2] : memref<8x72xf32, #tpu.memory_space<vmem>>, vector<8x72xf32>
    %c0_3 = arith.constant 0 : index
    %c0_4 = arith.constant 0 : index
    %3 = vector.load %arg3[%c0_3, %c0_4] : memref<8x1xf32, #tpu.memory_space<vmem>>, vector<8x1xf32>
    %c0_5 = arith.constant 0 : index
    %c0_6 = arith.constant 0 : index
    %4 = vector.load %arg4[%c0_5, %c0_6] : memref<8x1xf32, #tpu.memory_space<vmem>>, vector<8x1xf32>
    %c0_7 = arith.constant 0 : index
    %c0_8 = arith.constant 0 : index
    %5 = vector.load %arg5[%c0_7, %c0_8] : memref<8x72xf32, #tpu.memory_space<vmem>>, vector<8x72xf32>
    %c0_9 = arith.constant 0 : index
    %c0_10 = arith.constant 0 : index
    %6 = vector.load %arg6[%c0_9, %c0_10] : memref<8x1xf32, #tpu.memory_space<vmem>>, vector<8x1xf32>
    %c0_11 = arith.constant 0 : index
    %c0_12 = arith.constant 0 : index
    %7 = vector.load %arg7[%c0_11, %c0_12] : memref<8x1xf32, #tpu.memory_space<vmem>>, vector<8x1xf32>
    %c0_13 = arith.constant 0 : index
    %c0_14 = arith.constant 0 : index
    %8 = vector.load %arg8[%c0_13, %c0_14] : memref<1x128xf32, #tpu.memory_space<vmem>>, vector<1x128xf32>
    %c7_i32 = arith.constant 7 : i32
    %9 = tpu.dynamic_rotate %1 by %c7_i32 dim 1 : vector<8x128xf32>, i32 -> vector<8x128xf32>
    %c6_i32 = arith.constant 6 : i32
    %10 = tpu.dynamic_rotate %1 by %c6_i32 dim 1 : vector<8x128xf32>, i32 -> vector<8x128xf32>
    %c5_i32 = arith.constant 5 : i32
    %11 = tpu.dynamic_rotate %1 by %c5_i32 dim 1 : vector<8x128xf32>, i32 -> vector<8x128xf32>
    %c1_i32 = arith.constant 1 : i32
    %12 = tpu.dynamic_rotate %1 by %c1_i32 dim 1 : vector<8x128xf32>, i32 -> vector<8x128xf32>
    %c127_i32 = arith.constant 127 : i32
    %13 = tpu.dynamic_rotate %1 by %c127_i32 dim 1 : vector<8x128xf32>, i32 -> vector<8x128xf32>
    %c123_i32 = arith.constant 123 : i32
    %14 = tpu.dynamic_rotate %1 by %c123_i32 dim 1 : vector<8x128xf32>, i32 -> vector<8x128xf32>
    %c122_i32 = arith.constant 122 : i32
    %15 = tpu.dynamic_rotate %1 by %c122_i32 dim 1 : vector<8x128xf32>, i32 -> vector<8x128xf32>
    %c121_i32 = arith.constant 121 : i32
    %16 = tpu.dynamic_rotate %1 by %c121_i32 dim 1 : vector<8x128xf32>, i32 -> vector<8x128xf32>
    %17 = tpu.concatenate %9, %10, %11, %12, %1, %13, %14, %15, %16 in 0 : vector<8x128xf32>, vector<8x128xf32>, vector<8x128xf32>, vector<8x128xf32>, vector<8x128xf32>, vector<8x128xf32>, vector<8x128xf32>, vector<8x128xf32>, vector<8x128xf32> -> vector<72x128xf32>
    %cst = arith.constant dense<0.000000e+00> : vector<8x128xf32>
    %18 = tpu.matmul %2, %17, %cst {dimension_numbers = #tpu.dot_dimension_numbers<[1], [0], [0], [1], [0, 0, 1, 1], [], []>} : vector<8x72xf32>, vector<72x128xf32>, vector<8x128xf32> -> vector<8x128xf32>
    %19 = vector.broadcast %8 : vector<1x128xf32> to vector<8x128xf32>
    %20 = arith.mulf %18, %19 : vector<8x128xf32>
    %cst_15 = arith.constant dense<0.000000e+00> : vector<8xf32>
    %21 = vector.multi_reduction <add>, %20, %cst_15 [1] : vector<8x128xf32> to vector<8xf32>
    %22 = vector.shape_cast %21 : vector<8xf32> to vector<8x1xf32>
    %23 = arith.mulf %20, %18 : vector<8x128xf32>
    %cst_16 = arith.constant dense<0.000000e+00> : vector<8xf32>
    %24 = vector.multi_reduction <add>, %23, %cst_16 [1] : vector<8x128xf32> to vector<8xf32>
    %25 = vector.shape_cast %24 : vector<8xf32> to vector<8x1xf32>
    %cst_17 = arith.constant 3.125000e-02 : f32
    %26 = vector.broadcast %cst_17 : f32 to vector<8x1xf32>
    %27 = arith.mulf %22, %26 : vector<8x1xf32>
    %cst_18 = arith.constant 3.125000e-02 : f32
    %28 = vector.broadcast %cst_18 : f32 to vector<8x1xf32>
    %29 = arith.mulf %25, %28 : vector<8x1xf32>
    %30 = arith.mulf %27, %27 : vector<8x1xf32>
    %31 = arith.subf %29, %30 : vector<8x1xf32>
    %cst_19 = arith.constant 0.000000e+00 : f32
    %32 = vector.broadcast %cst_19 : f32 to vector<8x1xf32>
    %33 = arith.maximumf %31, %32 : vector<8x1xf32>
    %cst_20 = arith.constant 9.99999974E-6 : f32
    %34 = vector.broadcast %cst_20 : f32 to vector<8x1xf32>
    %35 = arith.addf %33, %34 : vector<8x1xf32>
    %36 = math.rsqrt %35 : vector<8x1xf32>
    %37 = arith.mulf %36, %3 : vector<8x1xf32>
    %38 = arith.mulf %27, %37 : vector<8x1xf32>
    %39 = arith.subf %4, %38 : vector<8x1xf32>
    %40 = vector.broadcast %37 : vector<8x1xf32> to vector<8x128xf32>
    %41 = arith.mulf %18, %40 : vector<8x128xf32>
    %42 = vector.broadcast %39 : vector<8x1xf32> to vector<8x128xf32>
    %43 = arith.addf %41, %42 : vector<8x128xf32>
    %cst_21 = arith.constant 0.000000e+00 : f32
    %44 = vector.broadcast %cst_21 : f32 to vector<8x128xf32>
    %45 = arith.maximumf %43, %44 : vector<8x128xf32>
    %46 = vector.broadcast %8 : vector<1x128xf32> to vector<8x128xf32>
    %47 = arith.mulf %45, %46 : vector<8x128xf32>
    %c7_i32_22 = arith.constant 7 : i32
    %48 = tpu.dynamic_rotate %47 by %c7_i32_22 dim 1 : vector<8x128xf32>, i32 -> vector<8x128xf32>
    %c6_i32_23 = arith.constant 6 : i32
    %49 = tpu.dynamic_rotate %47 by %c6_i32_23 dim 1 : vector<8x128xf32>, i32 -> vector<8x128xf32>
    %c5_i32_24 = arith.constant 5 : i32
    %50 = tpu.dynamic_rotate %47 by %c5_i32_24 dim 1 : vector<8x128xf32>, i32 -> vector<8x128xf32>
    %c1_i32_25 = arith.constant 1 : i32
    %51 = tpu.dynamic_rotate %47 by %c1_i32_25 dim 1 : vector<8x128xf32>, i32 -> vector<8x128xf32>
    %c127_i32_26 = arith.constant 127 : i32
    %52 = tpu.dynamic_rotate %47 by %c127_i32_26 dim 1 : vector<8x128xf32>, i32 -> vector<8x128xf32>
    %c123_i32_27 = arith.constant 123 : i32
    %53 = tpu.dynamic_rotate %47 by %c123_i32_27 dim 1 : vector<8x128xf32>, i32 -> vector<8x128xf32>
    %c122_i32_28 = arith.constant 122 : i32
    %54 = tpu.dynamic_rotate %47 by %c122_i32_28 dim 1 : vector<8x128xf32>, i32 -> vector<8x128xf32>
    %c121_i32_29 = arith.constant 121 : i32
    %55 = tpu.dynamic_rotate %47 by %c121_i32_29 dim 1 : vector<8x128xf32>, i32 -> vector<8x128xf32>
    %56 = tpu.concatenate %48, %49, %50, %51, %47, %52, %53, %54, %55 in 0 : vector<8x128xf32>, vector<8x128xf32>, vector<8x128xf32>, vector<8x128xf32>, vector<8x128xf32>, vector<8x128xf32>, vector<8x128xf32>, vector<8x128xf32>, vector<8x128xf32> -> vector<72x128xf32>
    %cst_30 = arith.constant dense<0.000000e+00> : vector<8x128xf32>
    %57 = tpu.matmul %5, %56, %cst_30 {dimension_numbers = #tpu.dot_dimension_numbers<[1], [0], [0], [1], [0, 0, 1, 1], [], []>} : vector<8x72xf32>, vector<72x128xf32>, vector<8x128xf32> -> vector<8x128xf32>
    %58 = vector.broadcast %8 : vector<1x128xf32> to vector<8x128xf32>
    %59 = arith.mulf %57, %58 : vector<8x128xf32>
    %cst_31 = arith.constant dense<0.000000e+00> : vector<8xf32>
    %60 = vector.multi_reduction <add>, %59, %cst_31 [1] : vector<8x128xf32> to vector<8xf32>
    %61 = vector.shape_cast %60 : vector<8xf32> to vector<8x1xf32>
    %62 = arith.mulf %59, %57 : vector<8x128xf32>
    %cst_32 = arith.constant dense<0.000000e+00> : vector<8xf32>
    %63 = vector.multi_reduction <add>, %62, %cst_32 [1] : vector<8x128xf32> to vector<8xf32>
    %64 = vector.shape_cast %63 : vector<8xf32> to vector<8x1xf32>
    %cst_33 = arith.constant 3.125000e-02 : f32
    %65 = vector.broadcast %cst_33 : f32 to vector<8x1xf32>
    %66 = arith.mulf %61, %65 : vector<8x1xf32>
    %cst_34 = arith.constant 3.125000e-02 : f32
    %67 = vector.broadcast %cst_34 : f32 to vector<8x1xf32>
    %68 = arith.mulf %64, %67 : vector<8x1xf32>
    %69 = arith.mulf %66, %66 : vector<8x1xf32>
    %70 = arith.subf %68, %69 : vector<8x1xf32>
    %cst_35 = arith.constant 0.000000e+00 : f32
    %71 = vector.broadcast %cst_35 : f32 to vector<8x1xf32>
    %72 = arith.maximumf %70, %71 : vector<8x1xf32>
    %cst_36 = arith.constant 9.99999974E-6 : f32
    %73 = vector.broadcast %cst_36 : f32 to vector<8x1xf32>
    %74 = arith.addf %72, %73 : vector<8x1xf32>
    %75 = math.rsqrt %74 : vector<8x1xf32>
    %76 = arith.mulf %75, %6 : vector<8x1xf32>
    %77 = arith.mulf %66, %76 : vector<8x1xf32>
    %78 = arith.subf %7, %77 : vector<8x1xf32>
    %79 = vector.broadcast %76 : vector<8x1xf32> to vector<8x128xf32>
    %80 = arith.mulf %57, %79 : vector<8x128xf32>
    %81 = vector.broadcast %78 : vector<8x1xf32> to vector<8x128xf32>
    %82 = arith.addf %80, %81 : vector<8x128xf32>
    %cst_37 = arith.constant 0.000000e+00 : f32
    %83 = vector.broadcast %cst_37 : f32 to vector<8x128xf32>
    %84 = arith.maximumf %82, %83 : vector<8x128xf32>
    %85 = vector.broadcast %8 : vector<1x128xf32> to vector<8x128xf32>
    %86 = arith.mulf %84, %85 : vector<8x128xf32>
    %c0_38 = arith.constant 0 : index
    %c0_39 = arith.constant 0 : index
    %87 = vector.load %arg9[%c0_38, %c0_39] : memref<32x8xf32, #tpu.memory_space<vmem>>, vector<32x8xf32>
    %cst_40 = arith.constant dense<0.000000e+00> : vector<32x128xf32>
    %88 = tpu.matmul %87, %86, %cst_40 {dimension_numbers = #tpu.dot_dimension_numbers<[1], [0], [0], [1], [0, 0, 1, 1], [], []>} : vector<32x8xf32>, vector<8x128xf32>, vector<32x128xf32> -> vector<32x128xf32>
    %89 = arith.truncf %88 : vector<32x128xf32> to vector<32x128xbf16>
    %c0_41 = arith.constant 0 : index
    %c0_42 = arith.constant 0 : index
    %90 = vector.load %arg10[%c0_41, %c0_42] : memref<32x128xbf16, #tpu.memory_space<vmem>>, vector<32x128xbf16>
    tpu.vector_store %arg10[%c0_41, %c0_42], %89 {strides = array<i32>} : memref<32x128xbf16, #tpu.memory_space<vmem>>, vector<32x128xbf16>,
    return
  }
  func.func @transform_0(%arg0: i32) -> (i32, i32) {
    %c0_i32 = arith.constant 0 : i32
    %c0_i32_0 = arith.constant 0 : i32
    %c0_i32_1 = arith.constant 0 : i32
    return %c0_i32, %c0_i32_0 : i32, i32
  }
  func.func @transform_1(%arg0: i32) -> (i32, i32) {
    %c0_i32 = arith.constant 0 : i32
    %c0_i32_0 = arith.constant 0 : i32
    %c0_i32_1 = arith.constant 0 : i32
    return %c0_i32, %c0_i32_0 : i32, i32
  }
  func.func @transform_2(%arg0: i32) -> (i32, i32) {
    %c0_i32 = arith.constant 0 : i32
    %c0_i32_0 = arith.constant 0 : i32
    %c0_i32_1 = arith.constant 0 : i32
    return %c0_i32, %c0_i32_0 : i32, i32
  }
  func.func @transform_3(%arg0: i32) -> (i32, i32) {
    %c0_i32 = arith.constant 0 : i32
    %c0_i32_0 = arith.constant 0 : i32
    %c0_i32_1 = arith.constant 0 : i32
    return %c0_i32, %c0_i32_0 : i32, i32
  }
  func.func @transform_4(%arg0: i32) -> (i32, i32) {
    %c0_i32 = arith.constant 0 : i32
    %c0_i32_0 = arith.constant 0 : i32
    %c0_i32_1 = arith.constant 0 : i32
    return %c0_i32, %c0_i32_0 : i32, i32
  }
  func.func @transform_5(%arg0: i32) -> (i32, i32) {
    %c0_i32 = arith.constant 0 : i32
    %c0_i32_0 = arith.constant 0 : i32
    %c0_i32_1 = arith.constant 0 : i32
    return %c0_i32, %c0_i32_0 : i32, i32
  }
  func.func @transform_6(%arg0: i32) -> (i32, i32) {
    %c0_i32 = arith.constant 0 : i32
    %c0_i32_0 = arith.constant 0 : i32
    %c0_i32_1 = arith.constant 0 : i32
    return %c0_i32, %c0_i32_0 : i32, i32
  }
  func.func @transform_7(%arg0: i32) -> (i32, i32) {
    %c0_i32 = arith.constant 0 : i32
    %c0_i32_0 = arith.constant 0 : i32
    %c0_i32_1 = arith.constant 0 : i32
    return %c0_i32, %c0_i32_0 : i32, i32
  }
  func.func @transform_8(%arg0: i32) -> (i32, i32) {
    %c0_i32 = arith.constant 0 : i32
    %c0_i32_0 = arith.constant 0 : i32
    %c0_i32_1 = arith.constant 0 : i32
    return %c0_i32, %c0_i32_0 : i32, i32
  }
  func.func @transform_9(%arg0: i32) -> (i32, i32) {
    %c0_i32 = arith.constant 0 : i32
    %c0_i32_0 = arith.constant 0 : i32
    %c0_i32_1 = arith.constant 0 : i32
    return %c0_i32, %c0_i32_0 : i32, i32
  }
}

module attributes {stable_mosaic.version = 11 : i64} {
  func.func @kernel(%arg0: i32, %arg1: memref<8x256xbf16, #tpu.memory_space<vmem>>, %arg2: memref<8x256xbf16, #tpu.memory_space<vmem>>, %arg3: memref<8x144xf32, #tpu.memory_space<vmem>>, %arg4: memref<8x1xf32, #tpu.memory_space<vmem>>, %arg5: memref<8x1xf32, #tpu.memory_space<vmem>>, %arg6: memref<8x72xf32, #tpu.memory_space<vmem>>, %arg7: memref<8x1xf32, #tpu.memory_space<vmem>>, %arg8: memref<8x1xf32, #tpu.memory_space<vmem>>, %arg9: memref<1x256xf32, #tpu.memory_space<vmem>>, %arg10: memref<32x8xf32, #tpu.memory_space<vmem>>, %arg11: memref<32x256xbf16, #tpu.memory_space<vmem>>) attributes {dimension_semantics = [#tpu.dimension_semantics<arbitrary>], iteration_bounds = array<i64: 1>, scalar_prefetch = 0 : i64, scratch_operands = 0 : i64, tpu.core_type = #tpu.core_type<tc>, window_params = [{pipeline_mode = #tpu.pipeline_mode<synchronous>, transform_indices = @transform_0, window_bounds = array<i64: 8, 256>}, {pipeline_mode = #tpu.pipeline_mode<synchronous>, transform_indices = @transform_1, window_bounds = array<i64: 8, 256>}, {pipeline_mode = #tpu.pipeline_mode<synchronous>, transform_indices = @transform_2, window_bounds = array<i64: 8, 144>}, {pipeline_mode = #tpu.pipeline_mode<synchronous>, transform_indices = @transform_3, window_bounds = array<i64: 8, 1>}, {pipeline_mode = #tpu.pipeline_mode<synchronous>, transform_indices = @transform_4, window_bounds = array<i64: 8, 1>}, {pipeline_mode = #tpu.pipeline_mode<synchronous>, transform_indices = @transform_5, window_bounds = array<i64: 8, 72>}, {pipeline_mode = #tpu.pipeline_mode<synchronous>, transform_indices = @transform_6, window_bounds = array<i64: 8, 1>}, {pipeline_mode = #tpu.pipeline_mode<synchronous>, transform_indices = @transform_7, window_bounds = array<i64: 8, 1>}, {pipeline_mode = #tpu.pipeline_mode<synchronous>, transform_indices = @transform_8, window_bounds = array<i64: 1, 256>}, {pipeline_mode = #tpu.pipeline_mode<synchronous>, transform_indices = @transform_9, window_bounds = array<i64: 32, 8>}, {pipeline_mode = #tpu.pipeline_mode<synchronous>, transform_indices = @transform_10, window_bounds = array<i64: 32, 256>}]} {
    %c0 = arith.constant 0 : index
    %c0_0 = arith.constant 0 : index
    %0 = vector.load %arg1[%c0, %c0_0] : memref<8x256xbf16, #tpu.memory_space<vmem>>, vector<8x256xbf16>
    %1 = arith.extf %0 : vector<8x256xbf16> to vector<8x256xf32>
    %c0_1 = arith.constant 0 : index
    %c0_2 = arith.constant 0 : index
    %2 = vector.load %arg2[%c0_1, %c0_2] : memref<8x256xbf16, #tpu.memory_space<vmem>>, vector<8x256xbf16>
    %3 = arith.extf %2 : vector<8x256xbf16> to vector<8x256xf32>
    %c0_3 = arith.constant 0 : index
    %c0_4 = arith.constant 0 : index
    %4 = vector.load %arg3[%c0_3, %c0_4] : memref<8x144xf32, #tpu.memory_space<vmem>>, vector<8x144xf32>
    %c0_5 = arith.constant 0 : index
    %c0_6 = arith.constant 0 : index
    %5 = vector.load %arg4[%c0_5, %c0_6] : memref<8x1xf32, #tpu.memory_space<vmem>>, vector<8x1xf32>
    %c0_7 = arith.constant 0 : index
    %c0_8 = arith.constant 0 : index
    %6 = vector.load %arg5[%c0_7, %c0_8] : memref<8x1xf32, #tpu.memory_space<vmem>>, vector<8x1xf32>
    %c0_9 = arith.constant 0 : index
    %c0_10 = arith.constant 0 : index
    %7 = vector.load %arg6[%c0_9, %c0_10] : memref<8x72xf32, #tpu.memory_space<vmem>>, vector<8x72xf32>
    %c0_11 = arith.constant 0 : index
    %c0_12 = arith.constant 0 : index
    %8 = vector.load %arg7[%c0_11, %c0_12] : memref<8x1xf32, #tpu.memory_space<vmem>>, vector<8x1xf32>
    %c0_13 = arith.constant 0 : index
    %c0_14 = arith.constant 0 : index
    %9 = vector.load %arg8[%c0_13, %c0_14] : memref<8x1xf32, #tpu.memory_space<vmem>>, vector<8x1xf32>
    %c0_15 = arith.constant 0 : index
    %c0_16 = arith.constant 0 : index
    %10 = vector.load %arg9[%c0_15, %c0_16] : memref<1x256xf32, #tpu.memory_space<vmem>>, vector<1x256xf32>
    %c11_i32 = arith.constant 11 : i32
    %11 = tpu.dynamic_rotate %1 by %c11_i32 dim 1 : vector<8x256xf32>, i32 -> vector<8x256xf32>
    %c11_i32_17 = arith.constant 11 : i32
    %12 = tpu.dynamic_rotate %3 by %c11_i32_17 dim 1 : vector<8x256xf32>, i32 -> vector<8x256xf32>
    %c10_i32 = arith.constant 10 : i32
    %13 = tpu.dynamic_rotate %1 by %c10_i32 dim 1 : vector<8x256xf32>, i32 -> vector<8x256xf32>
    %c10_i32_18 = arith.constant 10 : i32
    %14 = tpu.dynamic_rotate %3 by %c10_i32_18 dim 1 : vector<8x256xf32>, i32 -> vector<8x256xf32>
    %c9_i32 = arith.constant 9 : i32
    %15 = tpu.dynamic_rotate %1 by %c9_i32 dim 1 : vector<8x256xf32>, i32 -> vector<8x256xf32>
    %c9_i32_19 = arith.constant 9 : i32
    %16 = tpu.dynamic_rotate %3 by %c9_i32_19 dim 1 : vector<8x256xf32>, i32 -> vector<8x256xf32>
    %c1_i32 = arith.constant 1 : i32
    %17 = tpu.dynamic_rotate %1 by %c1_i32 dim 1 : vector<8x256xf32>, i32 -> vector<8x256xf32>
    %c1_i32_20 = arith.constant 1 : i32
    %18 = tpu.dynamic_rotate %3 by %c1_i32_20 dim 1 : vector<8x256xf32>, i32 -> vector<8x256xf32>
    %c255_i32 = arith.constant 255 : i32
    %19 = tpu.dynamic_rotate %1 by %c255_i32 dim 1 : vector<8x256xf32>, i32 -> vector<8x256xf32>
    %c255_i32_21 = arith.constant 255 : i32
    %20 = tpu.dynamic_rotate %3 by %c255_i32_21 dim 1 : vector<8x256xf32>, i32 -> vector<8x256xf32>
    %c247_i32 = arith.constant 247 : i32
    %21 = tpu.dynamic_rotate %1 by %c247_i32 dim 1 : vector<8x256xf32>, i32 -> vector<8x256xf32>
    %c247_i32_22 = arith.constant 247 : i32
    %22 = tpu.dynamic_rotate %3 by %c247_i32_22 dim 1 : vector<8x256xf32>, i32 -> vector<8x256xf32>
    %c246_i32 = arith.constant 246 : i32
    %23 = tpu.dynamic_rotate %1 by %c246_i32 dim 1 : vector<8x256xf32>, i32 -> vector<8x256xf32>
    %c246_i32_23 = arith.constant 246 : i32
    %24 = tpu.dynamic_rotate %3 by %c246_i32_23 dim 1 : vector<8x256xf32>, i32 -> vector<8x256xf32>
    %c245_i32 = arith.constant 245 : i32
    %25 = tpu.dynamic_rotate %1 by %c245_i32 dim 1 : vector<8x256xf32>, i32 -> vector<8x256xf32>
    %c245_i32_24 = arith.constant 245 : i32
    %26 = tpu.dynamic_rotate %3 by %c245_i32_24 dim 1 : vector<8x256xf32>, i32 -> vector<8x256xf32>
    %27 = tpu.concatenate %11, %12, %13, %14, %15, %16, %17, %18, %1, %3, %19, %20, %21, %22, %23, %24 in 0 : vector<8x256xf32>, vector<8x256xf32>, vector<8x256xf32>, vector<8x256xf32>, vector<8x256xf32>, vector<8x256xf32>, vector<8x256xf32>, vector<8x256xf32>, vector<8x256xf32>, vector<8x256xf32>, vector<8x256xf32>, vector<8x256xf32>, vector<8x256xf32>, vector<8x256xf32>, vector<8x256xf32>, vector<8x256xf32> -> vector<128x256xf32>
    %28 = tpu.concatenate %25, %26 in 0 : vector<8x256xf32>, vector<8x256xf32> -> vector<16x256xf32>
    %29 = tpu.concatenate %27, %28 in 0 : vector<128x256xf32>, vector<16x256xf32> -> vector<144x256xf32>
    %cst = arith.constant dense<0.000000e+00> : vector<8x256xf32>
    %30 = tpu.matmul %4, %29, %cst {dimension_numbers = #tpu.dot_dimension_numbers<[1], [0], [0], [1], [0, 0, 1, 1], [], []>} : vector<8x144xf32>, vector<144x256xf32>, vector<8x256xf32> -> vector<8x256xf32>
    %31 = vector.broadcast %10 : vector<1x256xf32> to vector<8x256xf32>
    %32 = arith.mulf %30, %31 : vector<8x256xf32>
    %cst_25 = arith.constant dense<0.000000e+00> : vector<8xf32>
    %33 = vector.multi_reduction <add>, %32, %cst_25 [1] : vector<8x256xf32> to vector<8xf32>
    %34 = vector.shape_cast %33 : vector<8xf32> to vector<8x1xf32>
    %35 = arith.mulf %32, %30 : vector<8x256xf32>
    %cst_26 = arith.constant dense<0.000000e+00> : vector<8xf32>
    %36 = vector.multi_reduction <add>, %35, %cst_26 [1] : vector<8x256xf32> to vector<8xf32>
    %37 = vector.shape_cast %36 : vector<8xf32> to vector<8x1xf32>
    %cst_27 = arith.constant 7.812500e-03 : f32
    %38 = vector.broadcast %cst_27 : f32 to vector<8x1xf32>
    %39 = arith.mulf %34, %38 : vector<8x1xf32>
    %cst_28 = arith.constant 7.812500e-03 : f32
    %40 = vector.broadcast %cst_28 : f32 to vector<8x1xf32>
    %41 = arith.mulf %37, %40 : vector<8x1xf32>
    %42 = arith.mulf %39, %39 : vector<8x1xf32>
    %43 = arith.subf %41, %42 : vector<8x1xf32>
    %cst_29 = arith.constant 0.000000e+00 : f32
    %44 = vector.broadcast %cst_29 : f32 to vector<8x1xf32>
    %45 = arith.maximumf %43, %44 : vector<8x1xf32>
    %cst_30 = arith.constant 9.99999974E-6 : f32
    %46 = vector.broadcast %cst_30 : f32 to vector<8x1xf32>
    %47 = arith.addf %45, %46 : vector<8x1xf32>
    %48 = math.rsqrt %47 : vector<8x1xf32>
    %49 = arith.mulf %48, %5 : vector<8x1xf32>
    %50 = arith.mulf %39, %49 : vector<8x1xf32>
    %51 = arith.subf %6, %50 : vector<8x1xf32>
    %52 = vector.broadcast %49 : vector<8x1xf32> to vector<8x256xf32>
    %53 = arith.mulf %30, %52 : vector<8x256xf32>
    %54 = vector.broadcast %51 : vector<8x1xf32> to vector<8x256xf32>
    %55 = arith.addf %53, %54 : vector<8x256xf32>
    %cst_31 = arith.constant 0.000000e+00 : f32
    %56 = vector.broadcast %cst_31 : f32 to vector<8x256xf32>
    %57 = arith.maximumf %55, %56 : vector<8x256xf32>
    %58 = vector.broadcast %10 : vector<1x256xf32> to vector<8x256xf32>
    %59 = arith.mulf %57, %58 : vector<8x256xf32>
    %c11_i32_32 = arith.constant 11 : i32
    %60 = tpu.dynamic_rotate %59 by %c11_i32_32 dim 1 : vector<8x256xf32>, i32 -> vector<8x256xf32>
    %c10_i32_33 = arith.constant 10 : i32
    %61 = tpu.dynamic_rotate %59 by %c10_i32_33 dim 1 : vector<8x256xf32>, i32 -> vector<8x256xf32>
    %c9_i32_34 = arith.constant 9 : i32
    %62 = tpu.dynamic_rotate %59 by %c9_i32_34 dim 1 : vector<8x256xf32>, i32 -> vector<8x256xf32>
    %c1_i32_35 = arith.constant 1 : i32
    %63 = tpu.dynamic_rotate %59 by %c1_i32_35 dim 1 : vector<8x256xf32>, i32 -> vector<8x256xf32>
    %c255_i32_36 = arith.constant 255 : i32
    %64 = tpu.dynamic_rotate %59 by %c255_i32_36 dim 1 : vector<8x256xf32>, i32 -> vector<8x256xf32>
    %c247_i32_37 = arith.constant 247 : i32
    %65 = tpu.dynamic_rotate %59 by %c247_i32_37 dim 1 : vector<8x256xf32>, i32 -> vector<8x256xf32>
    %c246_i32_38 = arith.constant 246 : i32
    %66 = tpu.dynamic_rotate %59 by %c246_i32_38 dim 1 : vector<8x256xf32>, i32 -> vector<8x256xf32>
    %c245_i32_39 = arith.constant 245 : i32
    %67 = tpu.dynamic_rotate %59 by %c245_i32_39 dim 1 : vector<8x256xf32>, i32 -> vector<8x256xf32>
    %68 = tpu.concatenate %60, %61, %62, %63, %59, %64, %65, %66, %67 in 0 : vector<8x256xf32>, vector<8x256xf32>, vector<8x256xf32>, vector<8x256xf32>, vector<8x256xf32>, vector<8x256xf32>, vector<8x256xf32>, vector<8x256xf32>, vector<8x256xf32> -> vector<72x256xf32>
    %cst_40 = arith.constant dense<0.000000e+00> : vector<8x256xf32>
    %69 = tpu.matmul %7, %68, %cst_40 {dimension_numbers = #tpu.dot_dimension_numbers<[1], [0], [0], [1], [0, 0, 1, 1], [], []>} : vector<8x72xf32>, vector<72x256xf32>, vector<8x256xf32> -> vector<8x256xf32>
    %70 = vector.broadcast %10 : vector<1x256xf32> to vector<8x256xf32>
    %71 = arith.mulf %69, %70 : vector<8x256xf32>
    %cst_41 = arith.constant dense<0.000000e+00> : vector<8xf32>
    %72 = vector.multi_reduction <add>, %71, %cst_41 [1] : vector<8x256xf32> to vector<8xf32>
    %73 = vector.shape_cast %72 : vector<8xf32> to vector<8x1xf32>
    %74 = arith.mulf %71, %69 : vector<8x256xf32>
    %cst_42 = arith.constant dense<0.000000e+00> : vector<8xf32>
    %75 = vector.multi_reduction <add>, %74, %cst_42 [1] : vector<8x256xf32> to vector<8xf32>
    %76 = vector.shape_cast %75 : vector<8xf32> to vector<8x1xf32>
    %cst_43 = arith.constant 7.812500e-03 : f32
    %77 = vector.broadcast %cst_43 : f32 to vector<8x1xf32>
    %78 = arith.mulf %73, %77 : vector<8x1xf32>
    %cst_44 = arith.constant 7.812500e-03 : f32
    %79 = vector.broadcast %cst_44 : f32 to vector<8x1xf32>
    %80 = arith.mulf %76, %79 : vector<8x1xf32>
    %81 = arith.mulf %78, %78 : vector<8x1xf32>
    %82 = arith.subf %80, %81 : vector<8x1xf32>
    %cst_45 = arith.constant 0.000000e+00 : f32
    %83 = vector.broadcast %cst_45 : f32 to vector<8x1xf32>
    %84 = arith.maximumf %82, %83 : vector<8x1xf32>
    %cst_46 = arith.constant 9.99999974E-6 : f32
    %85 = vector.broadcast %cst_46 : f32 to vector<8x1xf32>
    %86 = arith.addf %84, %85 : vector<8x1xf32>
    %87 = math.rsqrt %86 : vector<8x1xf32>
    %88 = arith.mulf %87, %8 : vector<8x1xf32>
    %89 = arith.mulf %78, %88 : vector<8x1xf32>
    %90 = arith.subf %9, %89 : vector<8x1xf32>
    %91 = vector.broadcast %88 : vector<8x1xf32> to vector<8x256xf32>
    %92 = arith.mulf %69, %91 : vector<8x256xf32>
    %93 = vector.broadcast %90 : vector<8x1xf32> to vector<8x256xf32>
    %94 = arith.addf %92, %93 : vector<8x256xf32>
    %cst_47 = arith.constant 0.000000e+00 : f32
    %95 = vector.broadcast %cst_47 : f32 to vector<8x256xf32>
    %96 = arith.maximumf %94, %95 : vector<8x256xf32>
    %97 = vector.broadcast %10 : vector<1x256xf32> to vector<8x256xf32>
    %98 = arith.mulf %96, %97 : vector<8x256xf32>
    %c0_48 = arith.constant 0 : index
    %c0_49 = arith.constant 0 : index
    %99 = vector.load %arg10[%c0_48, %c0_49] : memref<32x8xf32, #tpu.memory_space<vmem>>, vector<32x8xf32>
    %cst_50 = arith.constant dense<0.000000e+00> : vector<32x256xf32>
    %100 = tpu.matmul %99, %98, %cst_50 {dimension_numbers = #tpu.dot_dimension_numbers<[1], [0], [0], [1], [0, 0, 1, 1], [], []>} : vector<32x8xf32>, vector<8x256xf32>, vector<32x256xf32> -> vector<32x256xf32>
    %101 = arith.truncf %100 : vector<32x256xf32> to vector<32x256xbf16>
    %c0_51 = arith.constant 0 : index
    %c0_52 = arith.constant 0 : index
    %102 = vector.load %arg11[%c0_51, %c0_52] : memref<32x256xbf16, #tpu.memory_space<vmem>>, vector<32x256xbf16>
    tpu.vector_store %arg11[%c0_51, %c0_52], %101 {strides = array<i32>} : memref<32x256xbf16, #tpu.memory_space<vmem>>, vector<32x256xbf16>,
    return
  }
  func.func @transform_0(%arg0: i32) -> (i32, i32) {
    %c0_i32 = arith.constant 0 : i32
    %c0_i32_0 = arith.constant 0 : i32
    %c0_i32_1 = arith.constant 0 : i32
    return %c0_i32, %c0_i32_0 : i32, i32
  }
  func.func @transform_1(%arg0: i32) -> (i32, i32) {
    %c0_i32 = arith.constant 0 : i32
    %c0_i32_0 = arith.constant 0 : i32
    %c0_i32_1 = arith.constant 0 : i32
    return %c0_i32, %c0_i32_0 : i32, i32
  }
  func.func @transform_2(%arg0: i32) -> (i32, i32) {
    %c0_i32 = arith.constant 0 : i32
    %c0_i32_0 = arith.constant 0 : i32
    %c0_i32_1 = arith.constant 0 : i32
    return %c0_i32, %c0_i32_0 : i32, i32
  }
  func.func @transform_3(%arg0: i32) -> (i32, i32) {
    %c0_i32 = arith.constant 0 : i32
    %c0_i32_0 = arith.constant 0 : i32
    %c0_i32_1 = arith.constant 0 : i32
    return %c0_i32, %c0_i32_0 : i32, i32
  }
  func.func @transform_4(%arg0: i32) -> (i32, i32) {
    %c0_i32 = arith.constant 0 : i32
    %c0_i32_0 = arith.constant 0 : i32
    %c0_i32_1 = arith.constant 0 : i32
    return %c0_i32, %c0_i32_0 : i32, i32
  }
  func.func @transform_5(%arg0: i32) -> (i32, i32) {
    %c0_i32 = arith.constant 0 : i32
    %c0_i32_0 = arith.constant 0 : i32
    %c0_i32_1 = arith.constant 0 : i32
    return %c0_i32, %c0_i32_0 : i32, i32
  }
  func.func @transform_6(%arg0: i32) -> (i32, i32) {
    %c0_i32 = arith.constant 0 : i32
    %c0_i32_0 = arith.constant 0 : i32
    %c0_i32_1 = arith.constant 0 : i32
    return %c0_i32, %c0_i32_0 : i32, i32
  }
  func.func @transform_7(%arg0: i32) -> (i32, i32) {
    %c0_i32 = arith.constant 0 : i32
    %c0_i32_0 = arith.constant 0 : i32
    %c0_i32_1 = arith.constant 0 : i32
    return %c0_i32, %c0_i32_0 : i32, i32
  }
  func.func @transform_8(%arg0: i32) -> (i32, i32) {
    %c0_i32 = arith.constant 0 : i32
    %c0_i32_0 = arith.constant 0 : i32
    %c0_i32_1 = arith.constant 0 : i32
    return %c0_i32, %c0_i32_0 : i32, i32
  }
  func.func @transform_9(%arg0: i32) -> (i32, i32) {
    %c0_i32 = arith.constant 0 : i32
    %c0_i32_0 = arith.constant 0 : i32
    %c0_i32_1 = arith.constant 0 : i32
    return %c0_i32, %c0_i32_0 : i32, i32
  }
  func.func @transform_10(%arg0: i32) -> (i32, i32) {
    %c0_i32 = arith.constant 0 : i32
    %c0_i32_0 = arith.constant 0 : i32
    %c0_i32_1 = arith.constant 0 : i32
    return %c0_i32, %c0_i32_0 : i32, i32
  }
}

module attributes {stable_mosaic.version = 11 : i64} {
  func.func @kernel(%arg0: i32, %arg1: memref<8x768xbf16, #tpu.memory_space<vmem>>, %arg2: memref<8x768xbf16, #tpu.memory_space<vmem>>, %arg3: memref<8x144xf32, #tpu.memory_space<vmem>>, %arg4: memref<8x1xf32, #tpu.memory_space<vmem>>, %arg5: memref<8x1xf32, #tpu.memory_space<vmem>>, %arg6: memref<8x72xf32, #tpu.memory_space<vmem>>, %arg7: memref<8x1xf32, #tpu.memory_space<vmem>>, %arg8: memref<8x1xf32, #tpu.memory_space<vmem>>, %arg9: memref<1x768xf32, #tpu.memory_space<vmem>>, %arg10: memref<1x8xf32, #tpu.memory_space<vmem>>, %arg11: memref<1x1xf32, #tpu.memory_space<vmem>>, %arg12: memref<1x768xf32, #tpu.memory_space<vmem>>) attributes {dimension_semantics = [#tpu.dimension_semantics<arbitrary>], iteration_bounds = array<i64: 1>, scalar_prefetch = 0 : i64, scratch_operands = 0 : i64, tpu.core_type = #tpu.core_type<tc>, window_params = [{pipeline_mode = #tpu.pipeline_mode<synchronous>, transform_indices = @transform_0, window_bounds = array<i64: 8, 768>}, {pipeline_mode = #tpu.pipeline_mode<synchronous>, transform_indices = @transform_1, window_bounds = array<i64: 8, 768>}, {pipeline_mode = #tpu.pipeline_mode<synchronous>, transform_indices = @transform_2, window_bounds = array<i64: 8, 144>}, {pipeline_mode = #tpu.pipeline_mode<synchronous>, transform_indices = @transform_3, window_bounds = array<i64: 8, 1>}, {pipeline_mode = #tpu.pipeline_mode<synchronous>, transform_indices = @transform_4, window_bounds = array<i64: 8, 1>}, {pipeline_mode = #tpu.pipeline_mode<synchronous>, transform_indices = @transform_5, window_bounds = array<i64: 8, 72>}, {pipeline_mode = #tpu.pipeline_mode<synchronous>, transform_indices = @transform_6, window_bounds = array<i64: 8, 1>}, {pipeline_mode = #tpu.pipeline_mode<synchronous>, transform_indices = @transform_7, window_bounds = array<i64: 8, 1>}, {pipeline_mode = #tpu.pipeline_mode<synchronous>, transform_indices = @transform_8, window_bounds = array<i64: 1, 768>}, {pipeline_mode = #tpu.pipeline_mode<synchronous>, transform_indices = @transform_9, window_bounds = array<i64: 1, 8>}, {pipeline_mode = #tpu.pipeline_mode<synchronous>, transform_indices = @transform_10, window_bounds = array<i64: 1, 1>}, {pipeline_mode = #tpu.pipeline_mode<synchronous>, transform_indices = @transform_11, window_bounds = array<i64: 1, 768>}]} {
    %c0 = arith.constant 0 : index
    %c0_0 = arith.constant 0 : index
    %0 = vector.load %arg1[%c0, %c0_0] : memref<8x768xbf16, #tpu.memory_space<vmem>>, vector<8x768xbf16>
    %1 = arith.extf %0 : vector<8x768xbf16> to vector<8x768xf32>
    %c0_1 = arith.constant 0 : index
    %c0_2 = arith.constant 0 : index
    %2 = vector.load %arg2[%c0_1, %c0_2] : memref<8x768xbf16, #tpu.memory_space<vmem>>, vector<8x768xbf16>
    %3 = arith.extf %2 : vector<8x768xbf16> to vector<8x768xf32>
    %c0_3 = arith.constant 0 : index
    %c0_4 = arith.constant 0 : index
    %4 = vector.load %arg3[%c0_3, %c0_4] : memref<8x144xf32, #tpu.memory_space<vmem>>, vector<8x144xf32>
    %c0_5 = arith.constant 0 : index
    %c0_6 = arith.constant 0 : index
    %5 = vector.load %arg4[%c0_5, %c0_6] : memref<8x1xf32, #tpu.memory_space<vmem>>, vector<8x1xf32>
    %c0_7 = arith.constant 0 : index
    %c0_8 = arith.constant 0 : index
    %6 = vector.load %arg5[%c0_7, %c0_8] : memref<8x1xf32, #tpu.memory_space<vmem>>, vector<8x1xf32>
    %c0_9 = arith.constant 0 : index
    %c0_10 = arith.constant 0 : index
    %7 = vector.load %arg6[%c0_9, %c0_10] : memref<8x72xf32, #tpu.memory_space<vmem>>, vector<8x72xf32>
    %c0_11 = arith.constant 0 : index
    %c0_12 = arith.constant 0 : index
    %8 = vector.load %arg7[%c0_11, %c0_12] : memref<8x1xf32, #tpu.memory_space<vmem>>, vector<8x1xf32>
    %c0_13 = arith.constant 0 : index
    %c0_14 = arith.constant 0 : index
    %9 = vector.load %arg8[%c0_13, %c0_14] : memref<8x1xf32, #tpu.memory_space<vmem>>, vector<8x1xf32>
    %c0_15 = arith.constant 0 : index
    %c0_16 = arith.constant 0 : index
    %10 = vector.load %arg9[%c0_15, %c0_16] : memref<1x768xf32, #tpu.memory_space<vmem>>, vector<1x768xf32>
    %c19_i32 = arith.constant 19 : i32
    %11 = tpu.dynamic_rotate %1 by %c19_i32 dim 1 : vector<8x768xf32>, i32 -> vector<8x768xf32>
    %c19_i32_17 = arith.constant 19 : i32
    %12 = tpu.dynamic_rotate %3 by %c19_i32_17 dim 1 : vector<8x768xf32>, i32 -> vector<8x768xf32>
    %c18_i32 = arith.constant 18 : i32
    %13 = tpu.dynamic_rotate %1 by %c18_i32 dim 1 : vector<8x768xf32>, i32 -> vector<8x768xf32>
    %c18_i32_18 = arith.constant 18 : i32
    %14 = tpu.dynamic_rotate %3 by %c18_i32_18 dim 1 : vector<8x768xf32>, i32 -> vector<8x768xf32>
    %c17_i32 = arith.constant 17 : i32
    %15 = tpu.dynamic_rotate %1 by %c17_i32 dim 1 : vector<8x768xf32>, i32 -> vector<8x768xf32>
    %c17_i32_19 = arith.constant 17 : i32
    %16 = tpu.dynamic_rotate %3 by %c17_i32_19 dim 1 : vector<8x768xf32>, i32 -> vector<8x768xf32>
    %c1_i32 = arith.constant 1 : i32
    %17 = tpu.dynamic_rotate %1 by %c1_i32 dim 1 : vector<8x768xf32>, i32 -> vector<8x768xf32>
    %c1_i32_20 = arith.constant 1 : i32
    %18 = tpu.dynamic_rotate %3 by %c1_i32_20 dim 1 : vector<8x768xf32>, i32 -> vector<8x768xf32>
    %c767_i32 = arith.constant 767 : i32
    %19 = tpu.dynamic_rotate %1 by %c767_i32 dim 1 : vector<8x768xf32>, i32 -> vector<8x768xf32>
    %c767_i32_21 = arith.constant 767 : i32
    %20 = tpu.dynamic_rotate %3 by %c767_i32_21 dim 1 : vector<8x768xf32>, i32 -> vector<8x768xf32>
    %c751_i32 = arith.constant 751 : i32
    %21 = tpu.dynamic_rotate %1 by %c751_i32 dim 1 : vector<8x768xf32>, i32 -> vector<8x768xf32>
    %c751_i32_22 = arith.constant 751 : i32
    %22 = tpu.dynamic_rotate %3 by %c751_i32_22 dim 1 : vector<8x768xf32>, i32 -> vector<8x768xf32>
    %c750_i32 = arith.constant 750 : i32
    %23 = tpu.dynamic_rotate %1 by %c750_i32 dim 1 : vector<8x768xf32>, i32 -> vector<8x768xf32>
    %c750_i32_23 = arith.constant 750 : i32
    %24 = tpu.dynamic_rotate %3 by %c750_i32_23 dim 1 : vector<8x768xf32>, i32 -> vector<8x768xf32>
    %c749_i32 = arith.constant 749 : i32
    %25 = tpu.dynamic_rotate %1 by %c749_i32 dim 1 : vector<8x768xf32>, i32 -> vector<8x768xf32>
    %c749_i32_24 = arith.constant 749 : i32
    %26 = tpu.dynamic_rotate %3 by %c749_i32_24 dim 1 : vector<8x768xf32>, i32 -> vector<8x768xf32>
    %27 = tpu.concatenate %11, %12, %13, %14, %15, %16, %17, %18, %1, %3, %19, %20, %21, %22, %23, %24 in 0 : vector<8x768xf32>, vector<8x768xf32>, vector<8x768xf32>, vector<8x768xf32>, vector<8x768xf32>, vector<8x768xf32>, vector<8x768xf32>, vector<8x768xf32>, vector<8x768xf32>, vector<8x768xf32>, vector<8x768xf32>, vector<8x768xf32>, vector<8x768xf32>, vector<8x768xf32>, vector<8x768xf32>, vector<8x768xf32> -> vector<128x768xf32>
    %28 = tpu.concatenate %25, %26 in 0 : vector<8x768xf32>, vector<8x768xf32> -> vector<16x768xf32>
    %29 = tpu.concatenate %27, %28 in 0 : vector<128x768xf32>, vector<16x768xf32> -> vector<144x768xf32>
    %cst = arith.constant dense<0.000000e+00> : vector<8x768xf32>
    %30 = tpu.matmul %4, %29, %cst {dimension_numbers = #tpu.dot_dimension_numbers<[1], [0], [0], [1], [0, 0, 1, 1], [], []>} : vector<8x144xf32>, vector<144x768xf32>, vector<8x768xf32> -> vector<8x768xf32>
    %31 = vector.broadcast %10 : vector<1x768xf32> to vector<8x768xf32>
    %32 = arith.mulf %30, %31 : vector<8x768xf32>
    %cst_25 = arith.constant dense<0.000000e+00> : vector<8xf32>
    %33 = vector.multi_reduction <add>, %32, %cst_25 [1] : vector<8x768xf32> to vector<8xf32>
    %34 = vector.shape_cast %33 : vector<8xf32> to vector<8x1xf32>
    %35 = arith.mulf %32, %30 : vector<8x768xf32>
    %cst_26 = arith.constant dense<0.000000e+00> : vector<8xf32>
    %36 = vector.multi_reduction <add>, %35, %cst_26 [1] : vector<8x768xf32> to vector<8xf32>
    %37 = vector.shape_cast %36 : vector<8xf32> to vector<8x1xf32>
    %cst_27 = arith.constant 0.001953125 : f32
    %38 = vector.broadcast %cst_27 : f32 to vector<8x1xf32>
    %39 = arith.mulf %34, %38 : vector<8x1xf32>
    %cst_28 = arith.constant 0.001953125 : f32
    %40 = vector.broadcast %cst_28 : f32 to vector<8x1xf32>
    %41 = arith.mulf %37, %40 : vector<8x1xf32>
    %42 = arith.mulf %39, %39 : vector<8x1xf32>
    %43 = arith.subf %41, %42 : vector<8x1xf32>
    %cst_29 = arith.constant 0.000000e+00 : f32
    %44 = vector.broadcast %cst_29 : f32 to vector<8x1xf32>
    %45 = arith.maximumf %43, %44 : vector<8x1xf32>
    %cst_30 = arith.constant 9.99999974E-6 : f32
    %46 = vector.broadcast %cst_30 : f32 to vector<8x1xf32>
    %47 = arith.addf %45, %46 : vector<8x1xf32>
    %48 = math.rsqrt %47 : vector<8x1xf32>
    %49 = arith.mulf %48, %5 : vector<8x1xf32>
    %50 = arith.mulf %39, %49 : vector<8x1xf32>
    %51 = arith.subf %6, %50 : vector<8x1xf32>
    %52 = vector.broadcast %49 : vector<8x1xf32> to vector<8x768xf32>
    %53 = arith.mulf %30, %52 : vector<8x768xf32>
    %54 = vector.broadcast %51 : vector<8x1xf32> to vector<8x768xf32>
    %55 = arith.addf %53, %54 : vector<8x768xf32>
    %cst_31 = arith.constant 0.000000e+00 : f32
    %56 = vector.broadcast %cst_31 : f32 to vector<8x768xf32>
    %57 = arith.maximumf %55, %56 : vector<8x768xf32>
    %58 = vector.broadcast %10 : vector<1x768xf32> to vector<8x768xf32>
    %59 = arith.mulf %57, %58 : vector<8x768xf32>
    %c19_i32_32 = arith.constant 19 : i32
    %60 = tpu.dynamic_rotate %59 by %c19_i32_32 dim 1 : vector<8x768xf32>, i32 -> vector<8x768xf32>
    %c18_i32_33 = arith.constant 18 : i32
    %61 = tpu.dynamic_rotate %59 by %c18_i32_33 dim 1 : vector<8x768xf32>, i32 -> vector<8x768xf32>
    %c17_i32_34 = arith.constant 17 : i32
    %62 = tpu.dynamic_rotate %59 by %c17_i32_34 dim 1 : vector<8x768xf32>, i32 -> vector<8x768xf32>
    %c1_i32_35 = arith.constant 1 : i32
    %63 = tpu.dynamic_rotate %59 by %c1_i32_35 dim 1 : vector<8x768xf32>, i32 -> vector<8x768xf32>
    %c767_i32_36 = arith.constant 767 : i32
    %64 = tpu.dynamic_rotate %59 by %c767_i32_36 dim 1 : vector<8x768xf32>, i32 -> vector<8x768xf32>
    %c751_i32_37 = arith.constant 751 : i32
    %65 = tpu.dynamic_rotate %59 by %c751_i32_37 dim 1 : vector<8x768xf32>, i32 -> vector<8x768xf32>
    %c750_i32_38 = arith.constant 750 : i32
    %66 = tpu.dynamic_rotate %59 by %c750_i32_38 dim 1 : vector<8x768xf32>, i32 -> vector<8x768xf32>
    %c749_i32_39 = arith.constant 749 : i32
    %67 = tpu.dynamic_rotate %59 by %c749_i32_39 dim 1 : vector<8x768xf32>, i32 -> vector<8x768xf32>
    %68 = tpu.concatenate %60, %61, %62, %63, %59, %64, %65, %66, %67 in 0 : vector<8x768xf32>, vector<8x768xf32>, vector<8x768xf32>, vector<8x768xf32>, vector<8x768xf32>, vector<8x768xf32>, vector<8x768xf32>, vector<8x768xf32>, vector<8x768xf32> -> vector<72x768xf32>
    %cst_40 = arith.constant dense<0.000000e+00> : vector<8x768xf32>
    %69 = tpu.matmul %7, %68, %cst_40 {dimension_numbers = #tpu.dot_dimension_numbers<[1], [0], [0], [1], [0, 0, 1, 1], [], []>} : vector<8x72xf32>, vector<72x768xf32>, vector<8x768xf32> -> vector<8x768xf32>
    %70 = vector.broadcast %10 : vector<1x768xf32> to vector<8x768xf32>
    %71 = arith.mulf %69, %70 : vector<8x768xf32>
    %cst_41 = arith.constant dense<0.000000e+00> : vector<8xf32>
    %72 = vector.multi_reduction <add>, %71, %cst_41 [1] : vector<8x768xf32> to vector<8xf32>
    %73 = vector.shape_cast %72 : vector<8xf32> to vector<8x1xf32>
    %74 = arith.mulf %71, %69 : vector<8x768xf32>
    %cst_42 = arith.constant dense<0.000000e+00> : vector<8xf32>
    %75 = vector.multi_reduction <add>, %74, %cst_42 [1] : vector<8x768xf32> to vector<8xf32>
    %76 = vector.shape_cast %75 : vector<8xf32> to vector<8x1xf32>
    %cst_43 = arith.constant 0.001953125 : f32
    %77 = vector.broadcast %cst_43 : f32 to vector<8x1xf32>
    %78 = arith.mulf %73, %77 : vector<8x1xf32>
    %cst_44 = arith.constant 0.001953125 : f32
    %79 = vector.broadcast %cst_44 : f32 to vector<8x1xf32>
    %80 = arith.mulf %76, %79 : vector<8x1xf32>
    %81 = arith.mulf %78, %78 : vector<8x1xf32>
    %82 = arith.subf %80, %81 : vector<8x1xf32>
    %cst_45 = arith.constant 0.000000e+00 : f32
    %83 = vector.broadcast %cst_45 : f32 to vector<8x1xf32>
    %84 = arith.maximumf %82, %83 : vector<8x1xf32>
    %cst_46 = arith.constant 9.99999974E-6 : f32
    %85 = vector.broadcast %cst_46 : f32 to vector<8x1xf32>
    %86 = arith.addf %84, %85 : vector<8x1xf32>
    %87 = math.rsqrt %86 : vector<8x1xf32>
    %88 = arith.mulf %87, %8 : vector<8x1xf32>
    %89 = arith.mulf %78, %88 : vector<8x1xf32>
    %90 = arith.subf %9, %89 : vector<8x1xf32>
    %91 = vector.broadcast %88 : vector<8x1xf32> to vector<8x768xf32>
    %92 = arith.mulf %69, %91 : vector<8x768xf32>
    %93 = vector.broadcast %90 : vector<8x1xf32> to vector<8x768xf32>
    %94 = arith.addf %92, %93 : vector<8x768xf32>
    %cst_47 = arith.constant 0.000000e+00 : f32
    %95 = vector.broadcast %cst_47 : f32 to vector<8x768xf32>
    %96 = arith.maximumf %94, %95 : vector<8x768xf32>
    %97 = vector.broadcast %10 : vector<1x768xf32> to vector<8x768xf32>
    %98 = arith.mulf %96, %97 : vector<8x768xf32>
    %c0_48 = arith.constant 0 : index
    %c0_49 = arith.constant 0 : index
    %99 = vector.load %arg10[%c0_48, %c0_49] : memref<1x8xf32, #tpu.memory_space<vmem>>, vector<1x8xf32>
    %c0_50 = arith.constant 0 : index
    %c0_51 = arith.constant 0 : index
    %100 = vector.load %arg11[%c0_50, %c0_51] : memref<1x1xf32, #tpu.memory_space<vmem>>, vector<1x1xf32>
    %cst_52 = arith.constant dense<0.000000e+00> : vector<1x768xf32>
    %101 = tpu.matmul %99, %98, %cst_52 {dimension_numbers = #tpu.dot_dimension_numbers<[1], [0], [0], [1], [0, 0, 1, 1], [], []>} : vector<1x8xf32>, vector<8x768xf32>, vector<1x768xf32> -> vector<1x768xf32>
    %102 = vector.broadcast %100 : vector<1x1xf32> to vector<1x768xf32>
    %103 = arith.addf %101, %102 : vector<1x768xf32>
    %cst_53 = arith.constant 0.000000e+00 : f32
    %104 = vector.broadcast %cst_53 : f32 to vector<1x768xf32>
    %105 = arith.subf %104, %103 : vector<1x768xf32>
    %106 = math.exp %105 : vector<1x768xf32>
    %cst_54 = arith.constant 1.000000e+00 : f32
    %107 = vector.broadcast %cst_54 : f32 to vector<1x768xf32>
    %108 = arith.addf %107, %106 : vector<1x768xf32>
    %cst_55 = arith.constant 1.000000e+00 : f32
    %109 = vector.broadcast %cst_55 : f32 to vector<1x768xf32>
    %110 = arith.divf %109, %108 : vector<1x768xf32>
    %c0_56 = arith.constant 0 : index
    %c0_57 = arith.constant 0 : index
    %111 = vector.load %arg12[%c0_56, %c0_57] : memref<1x768xf32, #tpu.memory_space<vmem>>, vector<1x768xf32>
    tpu.vector_store %arg12[%c0_56, %c0_57], %110 {strides = array<i32>} : memref<1x768xf32, #tpu.memory_space<vmem>>, vector<1x768xf32>,
    return
  }
  func.func @transform_0(%arg0: i32) -> (i32, i32) {
    %c0_i32 = arith.constant 0 : i32
    %c0_i32_0 = arith.constant 0 : i32
    %c0_i32_1 = arith.constant 0 : i32
    return %c0_i32, %c0_i32_0 : i32, i32
  }
  func.func @transform_1(%arg0: i32) -> (i32, i32) {
    %c0_i32 = arith.constant 0 : i32
    %c0_i32_0 = arith.constant 0 : i32
    %c0_i32_1 = arith.constant 0 : i32
    return %c0_i32, %c0_i32_0 : i32, i32
  }
  func.func @transform_2(%arg0: i32) -> (i32, i32) {
    %c0_i32 = arith.constant 0 : i32
    %c0_i32_0 = arith.constant 0 : i32
    %c0_i32_1 = arith.constant 0 : i32
    return %c0_i32, %c0_i32_0 : i32, i32
  }
  func.func @transform_3(%arg0: i32) -> (i32, i32) {
    %c0_i32 = arith.constant 0 : i32
    %c0_i32_0 = arith.constant 0 : i32
    %c0_i32_1 = arith.constant 0 : i32
    return %c0_i32, %c0_i32_0 : i32, i32
  }
  func.func @transform_4(%arg0: i32) -> (i32, i32) {
    %c0_i32 = arith.constant 0 : i32
    %c0_i32_0 = arith.constant 0 : i32
    %c0_i32_1 = arith.constant 0 : i32
    return %c0_i32, %c0_i32_0 : i32, i32
  }
  func.func @transform_5(%arg0: i32) -> (i32, i32) {
    %c0_i32 = arith.constant 0 : i32
    %c0_i32_0 = arith.constant 0 : i32
    %c0_i32_1 = arith.constant 0 : i32
    return %c0_i32, %c0_i32_0 : i32, i32
  }
  func.func @transform_6(%arg0: i32) -> (i32, i32) {
    %c0_i32 = arith.constant 0 : i32
    %c0_i32_0 = arith.constant 0 : i32
    %c0_i32_1 = arith.constant 0 : i32
    return %c0_i32, %c0_i32_0 : i32, i32
  }
  func.func @transform_7(%arg0: i32) -> (i32, i32) {
    %c0_i32 = arith.constant 0 : i32
    %c0_i32_0 = arith.constant 0 : i32
    %c0_i32_1 = arith.constant 0 : i32
    return %c0_i32, %c0_i32_0 : i32, i32
  }
  func.func @transform_8(%arg0: i32) -> (i32, i32) {
    %c0_i32 = arith.constant 0 : i32
    %c0_i32_0 = arith.constant 0 : i32
    %c0_i32_1 = arith.constant 0 : i32
    return %c0_i32, %c0_i32_0 : i32, i32
  }
  func.func @transform_9(%arg0: i32) -> (i32, i32) {
    %c0_i32 = arith.constant 0 : i32
    %c0_i32_0 = arith.constant 0 : i32
    %c0_i32_1 = arith.constant 0 : i32
    return %c0_i32, %c0_i32_0 : i32, i32
  }
  func.func @transform_10(%arg0: i32) -> (i32, i32) {
    %c0_i32 = arith.constant 0 : i32
    %c0_i32_0 = arith.constant 0 : i32
    %c0_i32_1 = arith.constant 0 : i32
    return %c0_i32, %c0_i32_0 : i32, i32
  }
  func.func @transform_11(%arg0: i32) -> (i32, i32) {
    %c0_i32 = arith.constant 0 : i32
    %c0_i32_0 = arith.constant 0 : i32
    %c0_i32_1 = arith.constant 0 : i32
    return %c0_i32, %c0_i32_0 : i32, i32
  }
}

</mosaic_0001>

<llo_original>
// kernel: unet_forward.5
$region0: #{unet_forward.5}
  #allocation0 [shape = 'u32[]', space=smem, size = 0x4, offset = 0x4, fixed_abs, tag = 'smem constant byte address 0x4 - core index']
  #allocation1 [shape = 'u32[72,128]{1,0:T(1,128)}', space=vmem, size = 0x9000, scoped, tag = 'internal scratch']
  %s0 = inlined_call_operand.vmem [shape: bf16[8,768], index: 0, kind: input, shape index: {}]
  %s1 = inlined_call_operand.vmem [shape: f32[8,72], index: 1, kind: input, shape index: {}]
  %s2 = inlined_call_operand.vmem [shape: f32[8,1], index: 2, kind: input, shape index: {}]
  %s3 = inlined_call_operand.vmem [shape: f32[8,1], index: 3, kind: input, shape index: {}]
  %s4 = inlined_call_operand.vmem [shape: f32[8,72], index: 4, kind: input, shape index: {}]
  %s5 = inlined_call_operand.vmem [shape: f32[8,1], index: 5, kind: input, shape index: {}]
  %s6 = inlined_call_operand.vmem [shape: f32[8,1], index: 6, kind: input, shape index: {}]
  %s7 = inlined_call_operand.vmem [shape: f32[1,768], index: 7, kind: input, shape index: {}]
  %s8 = inlined_call_operand.vmem [shape: bf16[8,768], index: 8, kind: output, shape index: {}]
  %s9 = sld [smem:[#allocation0]]
  $region42: #{unet_forward.5} parent=0
    _
  %s11 = ssub.s32 1, %s9
  %s12 = scalar_select 0, %s11, %s9
  // Predicated region
  $region2: #{unet_forward.5} parent=0 // pred_check
    _
  $region3: #{unet_forward.5} parent=0 // pred_check_branch
    %14 = sbr.rel (0) target = $region5
  $region4: #{unet_forward.5} parent=0 // pred_region
    _
  $region5: #{unet_forward.5} parent=0 // pred_fallthru
    _
  // Predicated region
  $region6: #{unet_forward.5} parent=0 // pred_check
    _
  $region7: #{unet_forward.5} parent=0 // pred_check_branch
    %16 = sbr.rel (0) target = $region9
  $region8: #{unet_forward.5} parent=0 // pred_region
    _
  $region9: #{unet_forward.5} parent=0 // pred_fallthru
    _
  // Predicated region
  $region10: #{unet_forward.5} parent=0 // pred_check
    _
  $region11: #{unet_forward.5} parent=0 // pred_check_branch
    %18 = sbr.rel (0) target = $region13
  $region12: #{unet_forward.5} parent=0 // pred_region
    _
  $region13: #{unet_forward.5} parent=0 // pred_fallthru
    _
  // Predicated region
  $region14: #{unet_forward.5} parent=0 // pred_check
    _
  $region15: #{unet_forward.5} parent=0 // pred_check_branch
    %20 = sbr.rel (0) target = $region17
  $region16: #{unet_forward.5} parent=0 // pred_region
    _
  $region17: #{unet_forward.5} parent=0 // pred_fallthru
    _
  // Predicated region
  $region18: #{unet_forward.5} parent=0 // pred_check
    _
  $region19: #{unet_forward.5} parent=0 // pred_check_branch
    %22 = sbr.rel (0) target = $region21
  $region20: #{unet_forward.5} parent=0 // pred_region
    _
  $region21: #{unet_forward.5} parent=0 // pred_fallthru
    _
  // Predicated region
  $region22: #{unet_forward.5} parent=0 // pred_check
    _
  $region23: #{unet_forward.5} parent=0 // pred_check_branch
    %24 = sbr.rel (0) target = $region25
  $region24: #{unet_forward.5} parent=0 // pred_region
    _
  $region25: #{unet_forward.5} parent=0 // pred_fallthru
    _
  // Predicated region
  $region26: #{unet_forward.5} parent=0 // pred_check
    _
  $region27: #{unet_forward.5} parent=0 // pred_check_branch
    %26 = sbr.rel (0) target = $region29
  $region28: #{unet_forward.5} parent=0 // pred_region
    _
  $region29: #{unet_forward.5} parent=0 // pred_fallthru
    _
  // Predicated region
  $region30: #{unet_forward.5} parent=0 // pred_check
    _
  $region31: #{unet_forward.5} parent=0 // pred_check_branch
    %28 = sbr.rel (0) target = $region33
  $region32: #{unet_forward.5} parent=0 // pred_region
    _
  $region33: #{unet_forward.5} parent=0 // pred_fallthru
    _
  %v29 = vld [vmem:[%s0] sm:$0xff]
  %v30 = vld [vmem:[%s0 + $0x8] sm:$0xff]
  %v31 = vld [vmem:[%s0 + $0x10] sm:$0xff]
  %v32 = vunpack.c.l.bf16 %v29
  %v33 = vunpack.c.h.bf16 %v29
  %v34 = vunpack.c.l.bf16 %v30
  %v35 = vunpack.c.h.bf16 %v30
  %v36 = vunpack.c.l.bf16 %v31
  %v37 = vunpack.c.h.bf16 %v31
  %v38 = vld [vmem:[%s1] sm:$0xff]
  %v39 = vld [vmem:[%s2] sm:$0xff]
  %v40 = vld [vmem:[%s3] sm:$0xff]
  %v41 = vld [vmem:[%s4] sm:$0xff]
  %v42 = vld [vmem:[%s5] sm:$0xff]
  %v43 = vld [vmem:[%s6] sm:$0xff]
  %v44 = vld [vmem:[%s7] sm:$0x3f]
  %45 = vrot.lane.b32.xlu0 %v32, 19
  %v46 = vpop.permute.xlu0 %45
  %47 = vrot.lane.b32.xlu0 %v33, 19
  %v48 = vpop.permute.xlu0 %47
  %49 = vrot.lane.b32.xlu0 %v34, 19
  %v50 = vpop.permute.xlu0 %49
  %51 = vrot.lane.b32.xlu0 %v35, 19
  %v52 = vpop.permute.xlu0 %51
  %53 = vrot.lane.b32.xlu0 %v36, 19
  %v54 = vpop.permute.xlu0 %53
  %55 = vrot.lane.b32.xlu0 %v37, 19
  %v56 = vpop.permute.xlu0 %55
  %v57 = vlaneseq
  %v58 = vand.u32 %v57, 127
  %vm59 = vcmp.lt.s32.totalorder %v58, 19
  %v60 = vsel %vm59, %v54, %v56
  %v61 = vsel %vm59, %v52, %v54
  %v62 = vsel %vm59, %v50, %v52
  %v63 = vsel %vm59, %v48, %v50
  %v64 = vsel %vm59, %v46, %v48
  %v65 = vsel %vm59, %v56, %v46
  %66 = vrot.lane.b32.xlu0 %v32, 18
  %v67 = vpop.permute.xlu0 %66
  %68 = vrot.lane.b32.xlu0 %v33, 18
  %v69 = vpop.permute.xlu0 %68
  %70 = vrot.lane.b32.xlu0 %v34, 18
  %v71 = vpop.permute.xlu0 %70
  %72 = vrot.lane.b32.xlu0 %v35, 18
  %v73 = vpop.permute.xlu0 %72
  %74 = vrot.lane.b32.xlu0 %v36, 18
  %v75 = vpop.permute.xlu0 %74
  %76 = vrot.lane.b32.xlu0 %v37, 18
  %v77 = vpop.permute.xlu0 %76
  %vm78 = vcmp.lt.s32.totalorder %v58, 18
  %v79 = vsel %vm78, %v75, %v77
  %v80 = vsel %vm78, %v73, %v75
  %v81 = vsel %vm78, %v71, %v73
  %v82 = vsel %vm78, %v69, %v71
  %v83 = vsel %vm78, %v67, %v69
  %v84 = vsel %vm78, %v77, %v67
  %85 = vrot.lane.b32.xlu0 %v32, 17
  %v86 = vpop.permute.xlu0 %85
  %87 = vrot.lane.b32.xlu0 %v33, 17
  %v88 = vpop.permute.xlu0 %87
  %89 = vrot.lane.b32.xlu0 %v34, 17
  %v90 = vpop.permute.xlu0 %89
  %91 = vrot.lane.b32.xlu0 %v35, 17
  %v92 = vpop.permute.xlu0 %91
  %93 = vrot.lane.b32.xlu0 %v36, 17
  %v94 = vpop.permute.xlu0 %93
  %95 = vrot.lane.b32.xlu0 %v37, 17
  %v96 = vpop.permute.xlu0 %95
  %vm97 = vcmp.lt.s32.totalorder %v58, 17
  %v98 = vsel %vm97, %v94, %v96
  %v99 = vsel %vm97, %v92, %v94
  %v100 = vsel %vm97, %v90, %v92
  %v101 = vsel %vm97, %v88, %v90
  %v102 = vsel %vm97, %v86, %v88
  %v103 = vsel %vm97, %v96, %v86
  %104 = vrot.lane.b32.xlu0 %v32, 1
  %v105 = vpop.permute.xlu0 %104
  %106 = vrot.lane.b32.xlu0 %v33, 1
  %v107 = vpop.permute.xlu0 %106
  %108 = vrot.lane.b32.xlu0 %v34, 1
  %v109 = vpop.permute.xlu0 %108
  %110 = vrot.lane.b32.xlu0 %v35, 1
  %v111 = vpop.permute.xlu0 %110
  %112 = vrot.lane.b32.xlu0 %v36, 1
  %v113 = vpop.permute.xlu0 %112
  %114 = vrot.lane.b32.xlu0 %v37, 1
  %v115 = vpop.permute.xlu0 %114
  %vm116 = vcmp.lt.s32.totalorder %v58, 1
  %v117 = vsel %vm116, %v113, %v115
  %v118 = vsel %vm116, %v111, %v113
  %v119 = vsel %vm116, %v109, %v111
  %v120 = vsel %vm116, %v107, %v109
  %v121 = vsel %vm116, %v105, %v107
  %v122 = vsel %vm116, %v115, %v105
  %123 = vrot.lane.b32.xlu0 %v32, 127
  %v124 = vpop.permute.xlu0 %123
  %125 = vrot.lane.b32.xlu0 %v33, 127
  %v126 = vpop.permute.xlu0 %125
  %127 = vrot.lane.b32.xlu0 %v34, 127
  %v128 = vpop.permute.xlu0 %127
  %129 = vrot.lane.b32.xlu0 %v35, 127
  %v130 = vpop.permute.xlu0 %129
  %131 = vrot.lane.b32.xlu0 %v36, 127
  %v132 = vpop.permute.xlu0 %131
  %133 = vrot.lane.b32.xlu0 %v37, 127
  %v134 = vpop.permute.xlu0 %133
  %vm135 = vcmp.lt.s32.totalorder %v58, 127
  %v136 = vsel %vm135, %v132, %v134
  %v137 = vsel %vm135, %v130, %v132
  %v138 = vsel %vm135, %v128, %v130
  %v139 = vsel %vm135, %v126, %v128
  %v140 = vsel %vm135, %v124, %v126
  %v141 = vsel %vm135, %v134, %v124
  %142 = vrot.lane.b32.xlu0 %v32, 111
  %v143 = vpop.permute.xlu0 %142
  %144 = vrot.lane.b32.xlu0 %v33, 111
  %v145 = vpop.permute.xlu0 %144
  %146 = vrot.lane.b32.xlu0 %v34, 111
  %v147 = vpop.permute.xlu0 %146
  %148 = vrot.lane.b32.xlu0 %v35, 111
  %v149 = vpop.permute.xlu0 %148
  %150 = vrot.lane.b32.xlu0 %v36, 111
  %v151 = vpop.permute.xlu0 %150
  %152 = vrot.lane.b32.xlu0 %v37, 111
  %v153 = vpop.permute.xlu0 %152
  %vm154 = vcmp.lt.s32.totalorder %v58, 111
  %v155 = vsel %vm154, %v151, %v153
  %v156 = vsel %vm154, %v149, %v151
  %v157 = vsel %vm154, %v147, %v149
  %v158 = vsel %vm154, %v145, %v147
  %v159 = vsel %vm154, %v143, %v145
  %v160 = vsel %vm154, %v153, %v143
  %161 = vrot.lane.b32.xlu0 %v32, 110
  %v162 = vpop.permute.xlu0 %161
  %163 = vrot.lane.b32.xlu0 %v33, 110
  %v164 = vpop.permute.xlu0 %163
  %165 = vrot.lane.b32.xlu0 %v34, 110
  %v166 = vpop.permute.xlu0 %165
  %167 = vrot.lane.b32.xlu0 %v35, 110
  %v168 = vpop.permute.xlu0 %167
  %169 = vrot.lane.b32.xlu0 %v36, 110
  %v170 = vpop.permute.xlu0 %169
  %171 = vrot.lane.b32.xlu0 %v37, 110
  %v172 = vpop.permute.xlu0 %171
  %vm173 = vcmp.lt.s32.totalorder %v58, 110
  %v174 = vsel %vm173, %v170, %v172
  %v175 = vsel %vm173, %v168, %v170
  %v176 = vsel %vm173, %v166, %v168
  %v177 = vsel %vm173, %v164, %v166
  %v178 = vsel %vm173, %v162, %v164
  %v179 = vsel %vm173, %v172, %v162
  %180 = vrot.lane.b32.xlu0 %v32, 109
  %v181 = vpop.permute.xlu0 %180
  %182 = vrot.lane.b32.xlu0 %v33, 109
  %v183 = vpop.permute.xlu0 %182
  %184 = vrot.lane.b32.xlu0 %v34, 109
  %v185 = vpop.permute.xlu0 %184
  %186 = vrot.lane.b32.xlu0 %v35, 109
  %v187 = vpop.permute.xlu0 %186
  %188 = vrot.lane.b32.xlu0 %v36, 109
  %v189 = vpop.permute.xlu0 %188
  %190 = vrot.lane.b32.xlu0 %v37, 109
  %v191 = vpop.permute.xlu0 %190
  %vm192 = vcmp.lt.s32.totalorder %v58, 109
  %v193 = vsel %vm192, %v189, %v191
  %v194 = vsel %vm192, %v187, %v189
  %v195 = vsel %vm192, %v185, %v187
  %v196 = vsel %vm192, %v183, %v185
  %v197 = vsel %vm192, %v181, %v183
  %v198 = vsel %vm192, %v191, %v181
  %vm199 = vcmask 588800
  %v201 = vsel %vm199, %v38, 0
  %203 = vmatpush.msra.mxu0 0.0
  %204 = vmatpush.msra.mxu0 0.0
  %205 = vmatpush.msra.mxu0 0.0
  %206 = vmatpush.msra.mxu0 0.0
  %207 = vmatpush.msra.mxu0 0.0
  %208 = vmatpush.msra.mxu0 0.0
  %209 = vmatpush.msra.mxu0 0.0
  %210 = vmatpush.msra.mxu0 %v197
  %211 = vmatpush.msra.mxu0 %v178
  %212 = vmatpush.msra.mxu0 %v159
  %213 = vmatpush.msra.mxu0 %v140
  %214 = vmatpush.msra.mxu0 %v32
  %215 = vmatpush.msra.mxu0 %v122
  %216 = vmatpush.msra.mxu0 %v103
  %217 = vmatpush.msra.mxu0 %v84
  %218 = vmatpush.msra.mxu0 %v65
  %219 = vmatmul.f32.gmra.mxu0 %v201
  %v220 = vpop.f32.mrf.mxu0
  %v221 = vadd.f32 0.0, %v220
  %222 = vdwg.mxu0
  %223 = vmatpush.msra.mxu0 0.0
  %224 = vmatpush.msra.mxu0 0.0
  %225 = vmatpush.msra.mxu0 0.0
  %226 = vmatpush.msra.mxu0 0.0
  %227 = vmatpush.msra.mxu0 0.0
  %228 = vmatpush.msra.mxu0 0.0
  %229 = vmatpush.msra.mxu0 0.0
  %230 = vmatpush.msra.mxu0 %v196
  %231 = vmatpush.msra.mxu0 %v177
  %232 = vmatpush.msra.mxu0 %v158
  %233 = vmatpush.msra.mxu0 %v139
  %234 = vmatpush.msra.mxu0 %v33
  %235 = vmatpush.msra.mxu0 %v121
  %236 = vmatpush.msra.mxu0 %v102
  %237 = vmatpush.msra.mxu0 %v83
  %238 = vmatpush.msra.mxu0 %v64
  %239 = vmatmul.f32.gmra.mxu0 %v201
  %v240 = vpop.f32.mrf.mxu0
  %v241 = vadd.f32 0.0, %v240
  %242 = vdwg.mxu0
  %243 = vmatpush.msra.mxu0 0.0
  %244 = vmatpush.msra.mxu0 0.0
  %245 = vmatpush.msra.mxu0 0.0
  %246 = vmatpush.msra.mxu0 0.0
  %247 = vmatpush.msra.mxu0 0.0
  %248 = vmatpush.msra.mxu0 0.0
  %249 = vmatpush.msra.mxu0 0.0
  %250 = vmatpush.msra.mxu0 %v195
  %251 = vmatpush.msra.mxu0 %v176
  %252 = vmatpush.msra.mxu0 %v157
  %253 = vmatpush.msra.mxu0 %v138
  %254 = vmatpush.msra.mxu0 %v34
  %255 = vmatpush.msra.mxu0 %v120
  %256 = vmatpush.msra.mxu0 %v101
  %257 = vmatpush.msra.mxu0 %v82
  %258 = vmatpush.msra.mxu0 %v63
  %259 = vmatmul.f32.gmra.mxu0 %v201
  %v260 = vpop.f32.mrf.mxu0
  %v261 = vadd.f32 0.0, %v260
  %262 = vdwg.mxu0
  %263 = vmatpush.msra.mxu0 0.0
  %264 = vmatpush.msra.mxu0 0.0
  %265 = vmatpush.msra.mxu0 0.0
  %266 = vmatpush.msra.mxu0 0.0
  %267 = vmatpush.msra.mxu0 0.0
  %268 = vmatpush.msra.mxu0 0.0
  %269 = vmatpush.msra.mxu0 0.0
  %270 = vmatpush.msra.mxu0 %v194
  %271 = vmatpush.msra.mxu0 %v175
  %272 = vmatpush.msra.mxu0 %v156
  %273 = vmatpush.msra.mxu0 %v137
  %274 = vmatpush.msra.mxu0 %v35
  %275 = vmatpush.msra.mxu0 %v119
  %276 = vmatpush.msra.mxu0 %v100
  %277 = vmatpush.msra.mxu0 %v81
  %278 = vmatpush.msra.mxu0 %v62
  %279 = vmatmul.f32.gmra.mxu0 %v201
  %v280 = vpop.f32.mrf.mxu0
  %v281 = vadd.f32 0.0, %v280
  %282 = vdwg.mxu0
  %283 = vmatpush.msra.mxu0 0.0
  %284 = vmatpush.msra.mxu0 0.0
  %285 = vmatpush.msra.mxu0 0.0
  %286 = vmatpush.msra.mxu0 0.0
  %287 = vmatpush.msra.mxu0 0.0
  %288 = vmatpush.msra.mxu0 0.0
  %289 = vmatpush.msra.mxu0 0.0
  %290 = vmatpush.msra.mxu0 %v193
  %291 = vmatpush.msra.mxu0 %v174
  %292 = vmatpush.msra.mxu0 %v155
  %293 = vmatpush.msra.mxu0 %v136
  %294 = vmatpush.msra.mxu0 %v36
  %295 = vmatpush.msra.mxu0 %v118
  %296 = vmatpush.msra.mxu0 %v99
  %297 = vmatpush.msra.mxu0 %v80
  %298 = vmatpush.msra.mxu0 %v61
  %299 = vmatmul.f32.gmra.mxu0 %v201
  %v300 = vpop.f32.mrf.mxu0
  %v301 = vadd.f32 0.0, %v300
  %302 = vdwg.mxu0
  %303 = vmatpush.msra.mxu0 0.0
  %304 = vmatpush.msra.mxu0 0.0
  %305 = vmatpush.msra.mxu0 0.0
  %306 = vmatpush.msra.mxu0 0.0
  %307 = vmatpush.msra.mxu0 0.0
  %308 = vmatpush.msra.mxu0 0.0
  %309 = vmatpush.msra.mxu0 0.0
  %310 = vmatpush.msra.mxu0 %v198
  %311 = vmatpush.msra.mxu0 %v179
  %312 = vmatpush.msra.mxu0 %v160
  %313 = vmatpush.msra.mxu0 %v141
  %314 = vmatpush.msra.mxu0 %v37
  %315 = vmatpush.msra.mxu0 %v117
  %316 = vmatpush.msra.mxu0 %v98
  %317 = vmatpush.msra.mxu0 %v79
  %318 = vmatpush.msra.mxu0 %v60
  %319 = vmatmul.f32.gmra.mxu0 %v201
  %v320 = vpop.f32.mrf.mxu0
  %v321 = vadd.f32 0.0, %v320
  %322 = vdwg.mxu0
  %v324 = vperm.slane %v44, 0
  %v325 = vperm.slane %v44, 1
  %v326 = vperm.slane %v44, 2
  %v327 = vperm.slane %v44, 3
  %v328 = vperm.slane %v44, 4
  %v329 = vperm.slane %v44, 5
  %v336 = vmul.f32 %v221, %v324
  %v337 = vmul.f32 %v241, %v325
  %v338 = vmul.f32 %v261, %v326
  %v339 = vmul.f32 %v281, %v327
  %v340 = vmul.f32 %v301, %v328
  %v341 = vmul.f32 %v321, %v329
  %v342 = vadd.f32 %v336, %v337
  %v343 = vadd.f32 %v342, %v338
  %v344 = vadd.f32 %v343, %v339
  %v345 = vadd.f32 %v344, %v340
  %v346 = vadd.f32 %v345, %v341
  %347 = vadd.xlane.f32.xlu0 %v346
  %v348 = vpop.xlane.xlu0 %347
  %v349 = vmul.f32 %v336, %v221
  %v350 = vmul.f32 %v337, %v241
  %v351 = vmul.f32 %v338, %v261
  %v352 = vmul.f32 %v339, %v281
  %v353 = vmul.f32 %v340, %v301
  %v354 = vmul.f32 %v341, %v321
  %v355 = vadd.f32 %v349, %v350
  %v356 = vadd.f32 %v355, %v351
  %v357 = vadd.f32 %v356, %v352
  %v358 = vadd.f32 %v357, %v353
  %v359 = vadd.f32 %v358, %v354
  %360 = vadd.xlane.f32.xlu0 %v359
  %v361 = vpop.xlane.xlu0 %360
  %v362 = vmul.f32 %v348, 0.001953125
  %v363 = vmul.f32 %v361, 0.001953125
  %v364 = vmul.f32 %v362, %v362
  %v365 = vsub.f32 %v363, %v364
  %v366 = vmax.f32 %v365, 0.0
  %v367 = vadd.f32 %v366, 1e-05
  %v368 = vrsqrt.pop %v367
  %v369 = vmul.f32 %v368, %v367
  %v370 = vmul.f32 %v369, %v368
  %v371 = vmul.f32 0.5, %v370
  %v372 = vsub.f32 1.5, %v371
  %v373 = vmul.f32 %v368, %v372
  %vm374 = vweird.f32 %v367
  %vm375 = vweird.f32 %v368
  %vm376 = vmor %vm374, %vm375
  %v377 = vsel %vm376, %v368, %v373
  %v378 = vmul.f32 %v377, %v39
  %v379 = vmul.f32 %v362, %v378
  %v380 = vsub.f32 %v40, %v379
  %382 = vset.pattern.permute.xlu0 0
  %383 = vperm.xlu0 %382, %v378
  %v384 = vpop.permute.xlu0 %383
  %v386 = vmul.f32 %v221, %v384
  %v387 = vmul.f32 %v241, %v384
  %v388 = vmul.f32 %v261, %v384
  %v389 = vmul.f32 %v281, %v384
  %v390 = vmul.f32 %v301, %v384
  %v391 = vmul.f32 %v321, %v384
  %393 = vset.pattern.permute.xlu0 0
  %394 = vperm.xlu0 %393, %v380
  %v395 = vpop.permute.xlu0 %394
  %v397 = vadd.f32 %v386, %v395
  %v398 = vadd.f32 %v387, %v395
  %v399 = vadd.f32 %v388, %v395
  %v400 = vadd.f32 %v389, %v395
  %v401 = vadd.f32 %v390, %v395
  %v402 = vadd.f32 %v391, %v395
  %v403 = vmax.f32 %v397, 0.0
  %v404 = vmax.f32 %v398, 0.0
  %v405 = vmax.f32 %v399, 0.0
  %v406 = vmax.f32 %v400, 0.0
  %v407 = vmax.f32 %v401, 0.0
  %v408 = vmax.f32 %v402, 0.0
  %v409 = vmul.f32 %v403, %v324
  %v410 = vmul.f32 %v404, %v325
  %v411 = vmul.f32 %v405, %v326
  %v412 = vmul.f32 %v406, %v327
  %v413 = vmul.f32 %v407, %v328
  %v414 = vmul.f32 %v408, %v329
  %415 = vrot.lane.b32.xlu0 %v409, 19
  %v416 = vpop.permute.xlu0 %415
  %417 = vrot.lane.b32.xlu0 %v410, 19
  %v418 = vpop.permute.xlu0 %417
  %419 = vrot.lane.b32.xlu0 %v411, 19
  %v420 = vpop.permute.xlu0 %419
  %421 = vrot.lane.b32.xlu0 %v412, 19
  %v422 = vpop.permute.xlu0 %421
  %423 = vrot.lane.b32.xlu0 %v413, 19
  %v424 = vpop.permute.xlu0 %423
  %425 = vrot.lane.b32.xlu0 %v414, 19
  %v426 = vpop.permute.xlu0 %425
  %v427 = vsel %vm59, %v424, %v426
  %v428 = vsel %vm59, %v422, %v424
  %v429 = vsel %vm59, %v420, %v422
  %v430 = vsel %vm59, %v418, %v420
  %v431 = vsel %vm59, %v416, %v418
  %v432 = vsel %vm59, %v426, %v416
  %433 = vrot.lane.b32.xlu0 %v409, 18
  %v434 = vpop.permute.xlu0 %433
  %435 = vrot.lane.b32.xlu0 %v410, 18
  %v436 = vpop.permute.xlu0 %435
  %437 = vrot.lane.b32.xlu0 %v411, 18
  %v438 = vpop.permute.xlu0 %437
  %439 = vrot.lane.b32.xlu0 %v412, 18
  %v440 = vpop.permute.xlu0 %439
  %441 = vrot.lane.b32.xlu0 %v413, 18
  %v442 = vpop.permute.xlu0 %441
  %443 = vrot.lane.b32.xlu0 %v414, 18
  %v444 = vpop.permute.xlu0 %443
  %v445 = vsel %vm78, %v442, %v444
  %v446 = vsel %vm78, %v440, %v442
  %v447 = vsel %vm78, %v438, %v440
  %v448 = vsel %vm78, %v436, %v438
  %v449 = vsel %vm78, %v434, %v436
  %v450 = vsel %vm78, %v444, %v434
  %451 = vrot.lane.b32.xlu0 %v409, 17
  %v452 = vpop.permute.xlu0 %451
  %453 = vrot.lane.b32.xlu0 %v410, 17
  %v454 = vpop.permute.xlu0 %453
  %455 = vrot.lane.b32.xlu0 %v411, 17
  %v456 = vpop.permute.xlu0 %455
  %457 = vrot.lane.b32.xlu0 %v412, 17
  %v458 = vpop.permute.xlu0 %457
  %459 = vrot.lane.b32.xlu0 %v413, 17
  %v460 = vpop.permute.xlu0 %459
  %461 = vrot.lane.b32.xlu0 %v414, 17
  %v462 = vpop.permute.xlu0 %461
  %v463 = vsel %vm97, %v460, %v462
  %v464 = vsel %vm97, %v458, %v460
  %v465 = vsel %vm97, %v456, %v458
  %v466 = vsel %vm97, %v454, %v456
  %v467 = vsel %vm97, %v452, %v454
  %v468 = vsel %vm97, %v462, %v452
  %469 = vrot.lane.b32.xlu0 %v409, 1
  %v470 = vpop.permute.xlu0 %469
  %471 = vrot.lane.b32.xlu0 %v410, 1
  %v472 = vpop.permute.xlu0 %471
  %473 = vrot.lane.b32.xlu0 %v411, 1
  %v474 = vpop.permute.xlu0 %473
  %475 = vrot.lane.b32.xlu0 %v412, 1
  %v476 = vpop.permute.xlu0 %475
  %477 = vrot.lane.b32.xlu0 %v413, 1
  %v478 = vpop.permute.xlu0 %477
  %479 = vrot.lane.b32.xlu0 %v414, 1
  %v480 = vpop.permute.xlu0 %479
  %v481 = vsel %vm116, %v478, %v480
  %v482 = vsel %vm116, %v476, %v478
  %v483 = vsel %vm116, %v474, %v476
  %v484 = vsel %vm116, %v472, %v474
  %v485 = vsel %vm116, %v470, %v472
  %v486 = vsel %vm116, %v480, %v470
  %487 = vrot.lane.b32.xlu0 %v409, 127
  %v488 = vpop.permute.xlu0 %487
  %489 = vrot.lane.b32.xlu0 %v410, 127
  %v490 = vpop.permute.xlu0 %489
  %491 = vrot.lane.b32.xlu0 %v411, 127
  %v492 = vpop.permute.xlu0 %491
  %493 = vrot.lane.b32.xlu0 %v412, 127
  %v494 = vpop.permute.xlu0 %493
  %495 = vrot.lane.b32.xlu0 %v413, 127
  %v496 = vpop.permute.xlu0 %495
  %497 = vrot.lane.b32.xlu0 %v414, 127
  %v498 = vpop.permute.xlu0 %497
  %v499 = vsel %vm135, %v496, %v498
  %v500 = vsel %vm135, %v494, %v496
  %v501 = vsel %vm135, %v492, %v494
  %v502 = vsel %vm135, %v490, %v492
  %v503 = vsel %vm135, %v488, %v490
  %v504 = vsel %vm135, %v498, %v488
  %505 = vrot.lane.b32.xlu0 %v409, 111
  %v506 = vpop.permute.xlu0 %505
  %507 = vrot.lane.b32.xlu0 %v410, 111
  %v508 = vpop.permute.xlu0 %507
  %509 = vrot.lane.b32.xlu0 %v411, 111
  %v510 = vpop.permute.xlu0 %509
  %511 = vrot.lane.b32.xlu0 %v412, 111
  %v512 = vpop.permute.xlu0 %511
  %513 = vrot.lane.b32.xlu0 %v413, 111
  %v514 = vpop.permute.xlu0 %513
  %515 = vrot.lane.b32.xlu0 %v414, 111
  %v516 = vpop.permute.xlu0 %515
  %v517 = vsel %vm154, %v514, %v516
  %v518 = vsel %vm154, %v512, %v514
  %v519 = vsel %vm154, %v510, %v512
  %v520 = vsel %vm154, %v508, %v510
  %v521 = vsel %vm154, %v506, %v508
  %v522 = vsel %vm154, %v516, %v506
  %523 = vrot.lane.b32.xlu0 %v409, 110
  %v524 = vpop.permute.xlu0 %523
  %525 = vrot.lane.b32.xlu0 %v410, 110
  %v526 = vpop.permute.xlu0 %525
  %527 = vrot.lane.b32.xlu0 %v411, 110
  %v528 = vpop.permute.xlu0 %527
  %529 = vrot.lane.b32.xlu0 %v412, 110
  %v530 = vpop.permute.xlu0 %529
  %531 = vrot.lane.b32.xlu0 %v413, 110
  %v532 = vpop.permute.xlu0 %531
  %533 = vrot.lane.b32.xlu0 %v414, 110
  %v534 = vpop.permute.xlu0 %533
  %v535 = vsel %vm173, %v532, %v534
  %v536 = vsel %vm173, %v530, %v532
  %v537 = vsel %vm173, %v528, %v530
  %v538 = vsel %vm173, %v526, %v528
  %v539 = vsel %vm173, %v524, %v526
  %v540 = vsel %vm173, %v534, %v524
  %541 = vrot.lane.b32.xlu0 %v409, 109
  %v542 = vpop.permute.xlu0 %541
  %543 = vrot.lane.b32.xlu0 %v410, 109
  %v544 = vpop.permute.xlu0 %543
  %545 = vrot.lane.b32.xlu0 %v411, 109
  %v546 = vpop.permute.xlu0 %545
  %547 = vrot.lane.b32.xlu0 %v412, 109
  %v548 = vpop.permute.xlu0 %547
  %549 = vrot.lane.b32.xlu0 %v413, 109
  %v550 = vpop.permute.xlu0 %549
  %551 = vrot.lane.b32.xlu0 %v414, 109
  %v552 = vpop.permute.xlu0 %551
  %v553 = vsel %vm192, %v550, %v552
  %v554 = vsel %vm192, %v548, %v550
  %v555 = vsel %vm192, %v546, %v548
  %v556 = vsel %vm192, %v544, %v546
  %v557 = vsel %vm192, %v542, %v544
  %v558 = vsel %vm192, %v552, %v542
  %v560 = vsel %vm199, %v41, 0
  %562 = vmatpush.msra.mxu0 0.0
  %563 = vmatpush.msra.mxu0 0.0
  %564 = vmatpush.msra.mxu0 0.0
  %565 = vmatpush.msra.mxu0 0.0
  %566 = vmatpush.msra.mxu0 0.0
  %567 = vmatpush.msra.mxu0 0.0
  %568 = vmatpush.msra.mxu0 0.0
  %569 = vmatpush.msra.mxu0 %v557
  %570 = vmatpush.msra.mxu0 %v539
  %571 = vmatpush.msra.mxu0 %v521
  %572 = vmatpush.msra.mxu0 %v503
  %573 = vmatpush.msra.mxu0 %v409
  %574 = vmatpush.msra.mxu0 %v486
  %575 = vmatpush.msra.mxu0 %v468
  %576 = vmatpush.msra.mxu0 %v450
  %577 = vmatpush.msra.mxu0 %v432
  %578 = vmatmul.f32.gmra.mxu0 %v560
  %v579 = vpop.f32.mrf.mxu0
  %v580 = vadd.f32 0.0, %v579
  %581 = vdwg.mxu0
  %582 = vmatpush.msra.mxu0 0.0
  %583 = vmatpush.msra.mxu0 0.0
  %584 = vmatpush.msra.mxu0 0.0
  %585 = vmatpush.msra.mxu0 0.0
  %586 = vmatpush.msra.mxu0 0.0
  %587 = vmatpush.msra.mxu0 0.0
  %588 = vmatpush.msra.mxu0 0.0
  %589 = vmatpush.msra.mxu0 %v556
  %590 = vmatpush.msra.mxu0 %v538
  %591 = vmatpush.msra.mxu0 %v520
  %592 = vmatpush.msra.mxu0 %v502
  %593 = vmatpush.msra.mxu0 %v410
  %594 = vmatpush.msra.mxu0 %v485
  %595 = vmatpush.msra.mxu0 %v467
  %596 = vmatpush.msra.mxu0 %v449
  %597 = vmatpush.msra.mxu0 %v431
  %598 = vmatmul.f32.gmra.mxu0 %v560
  %v599 = vpop.f32.mrf.mxu0
  %v600 = vadd.f32 0.0, %v599
  %601 = vdwg.mxu0
  %602 = vmatpush.msra.mxu0 0.0
  %603 = vmatpush.msra.mxu0 0.0
  %604 = vmatpush.msra.mxu0 0.0
  %605 = vmatpush.msra.mxu0 0.0
  %606 = vmatpush.msra.mxu0 0.0
  %607 = vmatpush.msra.mxu0 0.0
  %608 = vmatpush.msra.mxu0 0.0
  %609 = vmatpush.msra.mxu0 %v555
  %610 = vmatpush.msra.mxu0 %v537
  %611 = vmatpush.msra.mxu0 %v519
  %612 = vmatpush.msra.mxu0 %v501
  %613 = vmatpush.msra.mxu0 %v411
  %614 = vmatpush.msra.mxu0 %v484
  %615 = vmatpush.msra.mxu0 %v466
  %616 = vmatpush.msra.mxu0 %v448
  %617 = vmatpush.msra.mxu0 %v430
  %618 = vmatmul.f32.gmra.mxu0 %v560
  %v619 = vpop.f32.mrf.mxu0
  %v620 = vadd.f32 0.0, %v619
  %621 = vdwg.mxu0
  %622 = vmatpush.msra.mxu0 0.0
  %623 = vmatpush.msra.mxu0 0.0
  %624 = vmatpush.msra.mxu0 0.0
  %625 = vmatpush.msra.mxu0 0.0
  %626 = vmatpush.msra.mxu0 0.0
  %627 = vmatpush.msra.mxu0 0.0
  %628 = vmatpush.msra.mxu0 0.0
  %629 = vmatpush.msra.mxu0 %v554
  %630 = vmatpush.msra.mxu0 %v536
  %631 = vmatpush.msra.mxu0 %v518
  %632 = vmatpush.msra.mxu0 %v500
  %633 = vmatpush.msra.mxu0 %v412
  %634 = vmatpush.msra.mxu0 %v483
  %635 = vmatpush.msra.mxu0 %v465
  %636 = vmatpush.msra.mxu0 %v447
  %637 = vmatpush.msra.mxu0 %v429
  %638 = vmatmul.f32.gmra.mxu0 %v560
  %v639 = vpop.f32.mrf.mxu0
  %v640 = vadd.f32 0.0, %v639
  %641 = vdwg.mxu0
  %642 = vmatpush.msra.mxu0 0.0
  %643 = vmatpush.msra.mxu0 0.0
  %644 = vmatpush.msra.mxu0 0.0
  %645 = vmatpush.msra.mxu0 0.0
  %646 = vmatpush.msra.mxu0 0.0
  %647 = vmatpush.msra.mxu0 0.0
  %648 = vmatpush.msra.mxu0 0.0
  %649 = vmatpush.msra.mxu0 %v553
  %650 = vmatpush.msra.mxu0 %v535
  %651 = vmatpush.msra.mxu0 %v517
  %652 = vmatpush.msra.mxu0 %v499
  %653 = vmatpush.msra.mxu0 %v413
  %654 = vmatpush.msra.mxu0 %v482
  %655 = vmatpush.msra.mxu0 %v464
  %656 = vmatpush.msra.mxu0 %v446
  %657 = vmatpush.msra.mxu0 %v428
  %658 = vmatmul.f32.gmra.mxu0 %v560
  %v659 = vpop.f32.mrf.mxu0
  %v660 = vadd.f32 0.0, %v659
  %661 = vdwg.mxu0
  %662 = vmatpush.msra.mxu0 0.0
  %663 = vmatpush.msra.mxu0 0.0
  %664 = vmatpush.msra.mxu0 0.0
  %665 = vmatpush.msra.mxu0 0.0
  %666 = vmatpush.msra.mxu0 0.0
  %667 = vmatpush.msra.mxu0 0.0
  %668 = vmatpush.msra.mxu0 0.0
  %669 = vmatpush.msra.mxu0 %v558
  %670 = vmatpush.msra.mxu0 %v540
  %671 = vmatpush.msra.mxu0 %v522
  %672 = vmatpush.msra.mxu0 %v504
  %673 = vmatpush.msra.mxu0 %v414
  %674 = vmatpush.msra.mxu0 %v481
  %675 = vmatpush.msra.mxu0 %v463
  %676 = vmatpush.msra.mxu0 %v445
  %677 = vmatpush.msra.mxu0 %v427
  %678 = vmatmul.f32.gmra.mxu0 %v560
  %v679 = vpop.f32.mrf.mxu0
  %v680 = vadd.f32 0.0, %v679
  %681 = vdwg.mxu0
  %v682 = vmul.f32 %v580, %v324
  %v683 = vmul.f32 %v600, %v325
  %v684 = vmul.f32 %v620, %v326
  %v685 = vmul.f32 %v640, %v327
  %v686 = vmul.f32 %v660, %v328
  %v687 = vmul.f32 %v680, %v329
  %v688 = vadd.f32 %v682, %v683
  %v689 = vadd.f32 %v688, %v684
  %v690 = vadd.f32 %v689, %v685
  %v691 = vadd.f32 %v690, %v686
  %v692 = vadd.f32 %v691, %v687
  %693 = vadd.xlane.f32.xlu0 %v692
  %v694 = vpop.xlane.xlu0 %693
  %v695 = vmul.f32 %v682, %v580
  %v696 = vmul.f32 %v683, %v600
  %v697 = vmul.f32 %v684, %v620
  %v698 = vmul.f32 %v685, %v640
  %v699 = vmul.f32 %v686, %v660
  %v700 = vmul.f32 %v687, %v680
  %v701 = vadd.f32 %v695, %v696
  %v702 = vadd.f32 %v701, %v697
  %v703 = vadd.f32 %v702, %v698
  %v704 = vadd.f32 %v703, %v699
  %v705 = vadd.f32 %v704, %v700
  %706 = vadd.xlane.f32.xlu0 %v705
  %v707 = vpop.xlane.xlu0 %706
  %v708 = vmul.f32 %v694, 0.001953125
  %v709 = vmul.f32 %v707, 0.001953125
  %v710 = vmul.f32 %v708, %v708
  %v711 = vsub.f32 %v709, %v710
  %v712 = vmax.f32 %v711, 0.0
  %v713 = vadd.f32 %v712, 1e-05
  %v714 = vrsqrt.pop %v713
  %v715 = vmul.f32 %v714, %v713
  %v716 = vmul.f32 %v715, %v714
  %v717 = vmul.f32 0.5, %v716
  %v718 = vsub.f32 1.5, %v717
  %v719 = vmul.f32 %v714, %v718
  %vm720 = vweird.f32 %v713
  %vm721 = vweird.f32 %v714
  %vm722 = vmor %vm720, %vm721
  %v723 = vsel %vm722, %v714, %v719
  %v724 = vmul.f32 %v723, %v42
  %v725 = vmul.f32 %v708, %v724
  %v726 = vsub.f32 %v43, %v725
  %728 = vset.pattern.permute.xlu0 0
  %729 = vperm.xlu0 %728, %v724
  %v730 = vpop.permute.xlu0 %729
  %v732 = vmul.f32 %v580, %v730
  %v733 = vmul.f32 %v600, %v730
  %v734 = vmul.f32 %v620, %v730
  %v735 = vmul.f32 %v640, %v730
  %v736 = vmul.f32 %v660, %v730
  %v737 = vmul.f32 %v680, %v730
  %739 = vset.pattern.permute.xlu0 0
  %740 = vperm.xlu0 %739, %v726
  %v741 = vpop.permute.xlu0 %740
  %v743 = vadd.f32 %v732, %v741
  %v744 = vadd.f32 %v733, %v741
  %v745 = vadd.f32 %v734, %v741
  %v746 = vadd.f32 %v735, %v741
  %v747 = vadd.f32 %v736, %v741
  %v748 = vadd.f32 %v737, %v741
  %v749 = vmax.f32 %v743, 0.0
  %v750 = vmax.f32 %v744, 0.0
  %v751 = vmax.f32 %v745, 0.0
  %v752 = vmax.f32 %v746, 0.0
  %v753 = vmax.f32 %v747, 0.0
  %v754 = vmax.f32 %v748, 0.0
  %v755 = vmul.f32 %v749, %v324
  %v756 = vmul.f32 %v750, %v325
  %v757 = vmul.f32 %v751, %v326
  %v758 = vmul.f32 %v752, %v327
  %v759 = vmul.f32 %v753, %v328
  %v760 = vmul.f32 %v754, %v329
  %v761 = vpack.c.bf16 %v756, %v755
  %v762 = vpack.c.bf16 %v758, %v757
  %v763 = vpack.c.bf16 %v760, %v759
  %764 = vst [vmem:[%s8] sm:$0xff] %v761
  %765 = vst [vmem:[%s8 + $0x8] sm:$0xff] %v762
  %766 = vst [vmem:[%s8 + $0x10] sm:$0xff] %v763
  // Predicated region
  $region34: #{unet_forward.5} parent=0 // pred_check
    _
  $region35: #{unet_forward.5} parent=0 // pred_check_branch
    %768 = sbr.rel (0) target = $region37
  $region36: #{unet_forward.5} parent=0 // pred_region
    _
  $region37: #{unet_forward.5} parent=0 // pred_fallthru
    _
  // Predicated region
  $region38: #{unet_forward.5} parent=0 // pred_check
    _
  $region39: #{unet_forward.5} parent=0 // pred_check_branch
    %770 = sbr.rel (0) target = $region41
  $region40: #{unet_forward.5} parent=0 // pred_region
    _
  $region41: #{unet_forward.5} parent=0 // pred_fallthru
    _

// kernel: unet_forward.6
$region0: #{unet_forward.6}
  #allocation0 [shape = 'u32[]', space=smem, size = 0x4, offset = 0x4, fixed_abs, tag = 'smem constant byte address 0x4 - core index']
  #allocation1 [shape = 'u32[72,128]{1,0:T(1,128)}', space=vmem, size = 0x9000, scoped, tag = 'internal scratch']
  %s0 = inlined_call_operand.vmem [shape: bf16[8,256], index: 0, kind: input, shape index: {}]
  %s1 = inlined_call_operand.vmem [shape: f32[8,72], index: 1, kind: input, shape index: {}]
  %s2 = inlined_call_operand.vmem [shape: f32[8,1], index: 2, kind: input, shape index: {}]
  %s3 = inlined_call_operand.vmem [shape: f32[8,1], index: 3, kind: input, shape index: {}]
  %s4 = inlined_call_operand.vmem [shape: f32[8,72], index: 4, kind: input, shape index: {}]
  %s5 = inlined_call_operand.vmem [shape: f32[8,1], index: 5, kind: input, shape index: {}]
  %s6 = inlined_call_operand.vmem [shape: f32[8,1], index: 6, kind: input, shape index: {}]
  %s7 = inlined_call_operand.vmem [shape: f32[1,256], index: 7, kind: input, shape index: {}]
  %s8 = inlined_call_operand.vmem [shape: bf16[8,256], index: 8, kind: output, shape index: {}]
  %s9 = sld [smem:[#allocation0]]
  $region42: #{unet_forward.6} parent=0
    _
  %s11 = ssub.s32 1, %s9
  %s12 = scalar_select 0, %s11, %s9
  // Predicated region
  $region2: #{unet_forward.6} parent=0 // pred_check
    _
  $region3: #{unet_forward.6} parent=0 // pred_check_branch
    %14 = sbr.rel (0) target = $region5
  $region4: #{unet_forward.6} parent=0 // pred_region
    _
  $region5: #{unet_forward.6} parent=0 // pred_fallthru
    _
  // Predicated region
  $region6: #{unet_forward.6} parent=0 // pred_check
    _
  $region7: #{unet_forward.6} parent=0 // pred_check_branch
    %16 = sbr.rel (0) target = $region9
  $region8: #{unet_forward.6} parent=0 // pred_region
    _
  $region9: #{unet_forward.6} parent=0 // pred_fallthru
    _
  // Predicated region
  $region10: #{unet_forward.6} parent=0 // pred_check
    _
  $region11: #{unet_forward.6} parent=0 // pred_check_branch
    %18 = sbr.rel (0) target = $region13
  $region12: #{unet_forward.6} parent=0 // pred_region
    _
  $region13: #{unet_forward.6} parent=0 // pred_fallthru
    _
  // Predicated region
  $region14: #{unet_forward.6} parent=0 // pred_check
    _
  $region15: #{unet_forward.6} parent=0 // pred_check_branch
    %20 = sbr.rel (0) target = $region17
  $region16: #{unet_forward.6} parent=0 // pred_region
    _
  $region17: #{unet_forward.6} parent=0 // pred_fallthru
    _
  // Predicated region
  $region18: #{unet_forward.6} parent=0 // pred_check
    _
  $region19: #{unet_forward.6} parent=0 // pred_check_branch
    %22 = sbr.rel (0) target = $region21
  $region20: #{unet_forward.6} parent=0 // pred_region
    _
  $region21: #{unet_forward.6} parent=0 // pred_fallthru
    _
  // Predicated region
  $region22: #{unet_forward.6} parent=0 // pred_check
    _
  $region23: #{unet_forward.6} parent=0 // pred_check_branch
    %24 = sbr.rel (0) target = $region25
  $region24: #{unet_forward.6} parent=0 // pred_region
    _
  $region25: #{unet_forward.6} parent=0 // pred_fallthru
    _
  // Predicated region
  $region26: #{unet_forward.6} parent=0 // pred_check
    _
  $region27: #{unet_forward.6} parent=0 // pred_check_branch
    %26 = sbr.rel (0) target = $region29
  $region28: #{unet_forward.6} parent=0 // pred_region
    _
  $region29: #{unet_forward.6} parent=0 // pred_fallthru
    _
  // Predicated region
  $region30: #{unet_forward.6} parent=0 // pred_check
    _
  $region31: #{unet_forward.6} parent=0 // pred_check_branch
    %28 = sbr.rel (0) target = $region33
  $region32: #{unet_forward.6} parent=0 // pred_region
    _
  $region33: #{unet_forward.6} parent=0 // pred_fallthru
    _
  %v29 = vld [vmem:[%s0] sm:$0xff]
  %v30 = vunpack.c.l.bf16 %v29
  %v31 = vunpack.c.h.bf16 %v29
  %v32 = vld [vmem:[%s1] sm:$0xff]
  %v33 = vld [vmem:[%s2] sm:$0xff]
  %v34 = vld [vmem:[%s3] sm:$0xff]
  %v35 = vld [vmem:[%s4] sm:$0xff]
  %v36 = vld [vmem:[%s5] sm:$0xff]
  %v37 = vld [vmem:[%s6] sm:$0xff]
  %v38 = vld [vmem:[%s7] sm:$0x3]
  %39 = vrot.lane.b32.xlu0 %v30, 11
  %v40 = vpop.permute.xlu0 %39
  %41 = vrot.lane.b32.xlu0 %v31, 11
  %v42 = vpop.permute.xlu0 %41
  %v43 = vlaneseq
  %v44 = vand.u32 %v43, 127
  %vm45 = vcmp.lt.s32.totalorder %v44, 11
  %v46 = vsel %vm45, %v40, %v42
  %v47 = vsel %vm45, %v42, %v40
  %48 = vrot.lane.b32.xlu0 %v30, 10
  %v49 = vpop.permute.xlu0 %48
  %50 = vrot.lane.b32.xlu0 %v31, 10
  %v51 = vpop.permute.xlu0 %50
  %vm52 = vcmp.lt.s32.totalorder %v44, 10
  %v53 = vsel %vm52, %v49, %v51
  %v54 = vsel %vm52, %v51, %v49
  %55 = vrot.lane.b32.xlu0 %v30, 9
  %v56 = vpop.permute.xlu0 %55
  %57 = vrot.lane.b32.xlu0 %v31, 9
  %v58 = vpop.permute.xlu0 %57
  %vm59 = vcmp.lt.s32.totalorder %v44, 9
  %v60 = vsel %vm59, %v56, %v58
  %v61 = vsel %vm59, %v58, %v56
  %62 = vrot.lane.b32.xlu0 %v30, 1
  %v63 = vpop.permute.xlu0 %62
  %64 = vrot.lane.b32.xlu0 %v31, 1
  %v65 = vpop.permute.xlu0 %64
  %vm66 = vcmp.lt.s32.totalorder %v44, 1
  %v67 = vsel %vm66, %v63, %v65
  %v68 = vsel %vm66, %v65, %v63
  %69 = vrot.lane.b32.xlu0 %v30, 127
  %v70 = vpop.permute.xlu0 %69
  %71 = vrot.lane.b32.xlu0 %v31, 127
  %v72 = vpop.permute.xlu0 %71
  %vm73 = vcmp.lt.s32.totalorder %v44, 127
  %v74 = vsel %vm73, %v70, %v72
  %v75 = vsel %vm73, %v72, %v70
  %76 = vrot.lane.b32.xlu0 %v30, 119
  %v77 = vpop.permute.xlu0 %76
  %78 = vrot.lane.b32.xlu0 %v31, 119
  %v79 = vpop.permute.xlu0 %78
  %vm80 = vcmp.lt.s32.totalorder %v44, 119
  %v81 = vsel %vm80, %v77, %v79
  %v82 = vsel %vm80, %v79, %v77
  %83 = vrot.lane.b32.xlu0 %v30, 118
  %v84 = vpop.permute.xlu0 %83
  %85 = vrot.lane.b32.xlu0 %v31, 118
  %v86 = vpop.permute.xlu0 %85
  %vm87 = vcmp.lt.s32.totalorder %v44, 118
  %v88 = vsel %vm87, %v84, %v86
  %v89 = vsel %vm87, %v86, %v84
  %90 = vrot.lane.b32.xlu0 %v30, 117
  %v91 = vpop.permute.xlu0 %90
  %92 = vrot.lane.b32.xlu0 %v31, 117
  %v93 = vpop.permute.xlu0 %92
  %vm94 = vcmp.lt.s32.totalorder %v44, 117
  %v95 = vsel %vm94, %v91, %v93
  %v96 = vsel %vm94, %v93, %v91
  %vm97 = vcmask 588800
  %v99 = vsel %vm97, %v32, 0
  %101 = vmatpush.msra.mxu0 0.0
  %102 = vmatpush.msra.mxu0 0.0
  %103 = vmatpush.msra.mxu0 0.0
  %104 = vmatpush.msra.mxu0 0.0
  %105 = vmatpush.msra.mxu0 0.0
  %106 = vmatpush.msra.mxu0 0.0
  %107 = vmatpush.msra.mxu0 0.0
  %108 = vmatpush.msra.mxu0 %v95
  %109 = vmatpush.msra.mxu0 %v88
  %110 = vmatpush.msra.mxu0 %v81
  %111 = vmatpush.msra.mxu0 %v74
  %112 = vmatpush.msra.mxu0 %v30
  %113 = vmatpush.msra.mxu0 %v68
  %114 = vmatpush.msra.mxu0 %v61
  %115 = vmatpush.msra.mxu0 %v54
  %116 = vmatpush.msra.mxu0 %v47
  %117 = vmatmul.f32.gmra.mxu0 %v99
  %v118 = vpop.f32.mrf.mxu0
  %v119 = vadd.f32 0.0, %v118
  %120 = vdwg.mxu0
  %121 = vmatpush.msra.mxu0 0.0
  %122 = vmatpush.msra.mxu0 0.0
  %123 = vmatpush.msra.mxu0 0.0
  %124 = vmatpush.msra.mxu0 0.0
  %125 = vmatpush.msra.mxu0 0.0
  %126 = vmatpush.msra.mxu0 0.0
  %127 = vmatpush.msra.mxu0 0.0
  %128 = vmatpush.msra.mxu0 %v96
  %129 = vmatpush.msra.mxu0 %v89
  %130 = vmatpush.msra.mxu0 %v82
  %131 = vmatpush.msra.mxu0 %v75
  %132 = vmatpush.msra.mxu0 %v31
  %133 = vmatpush.msra.mxu0 %v67
  %134 = vmatpush.msra.mxu0 %v60
  %135 = vmatpush.msra.mxu0 %v53
  %136 = vmatpush.msra.mxu0 %v46
  %137 = vmatmul.f32.gmra.mxu0 %v99
  %v138 = vpop.f32.mrf.mxu0
  %v139 = vadd.f32 0.0, %v138
  %140 = vdwg.mxu0
  %v142 = vperm.slane %v38, 0
  %v143 = vperm.slane %v38, 1
  %v146 = vmul.f32 %v119, %v142
  %v147 = vmul.f32 %v139, %v143
  %v148 = vadd.f32 %v146, %v147
  %149 = vadd.xlane.f32.xlu0 %v148
  %v150 = vpop.xlane.xlu0 %149
  %v151 = vmul.f32 %v146, %v119
  %v152 = vmul.f32 %v147, %v139
  %v153 = vadd.f32 %v151, %v152
  %154 = vadd.xlane.f32.xlu0 %v153
  %v155 = vpop.xlane.xlu0 %154
  %v156 = vmul.f32 %v150, 0.0078125
  %v157 = vmul.f32 %v155, 0.0078125
  %v158 = vmul.f32 %v156, %v156
  %v159 = vsub.f32 %v157, %v158
  %v160 = vmax.f32 %v159, 0.0
  %v161 = vadd.f32 %v160, 1e-05
  %v162 = vrsqrt.pop %v161
  %v163 = vmul.f32 %v162, %v161
  %v164 = vmul.f32 %v163, %v162
  %v165 = vmul.f32 0.5, %v164
  %v166 = vsub.f32 1.5, %v165
  %v167 = vmul.f32 %v162, %v166
  %vm168 = vweird.f32 %v161
  %vm169 = vweird.f32 %v162
  %vm170 = vmor %vm168, %vm169
  %v171 = vsel %vm170, %v162, %v167
  %v172 = vmul.f32 %v171, %v33
  %v173 = vmul.f32 %v156, %v172
  %v174 = vsub.f32 %v34, %v173
  %176 = vset.pattern.permute.xlu0 0
  %177 = vperm.xlu0 %176, %v172
  %v178 = vpop.permute.xlu0 %177
  %v180 = vmul.f32 %v119, %v178
  %v181 = vmul.f32 %v139, %v178
  %183 = vset.pattern.permute.xlu0 0
  %184 = vperm.xlu0 %183, %v174
  %v185 = vpop.permute.xlu0 %184
  %v187 = vadd.f32 %v180, %v185
  %v188 = vadd.f32 %v181, %v185
  %v189 = vmax.f32 %v187, 0.0
  %v190 = vmax.f32 %v188, 0.0
  %v191 = vmul.f32 %v189, %v142
  %v192 = vmul.f32 %v190, %v143
  %193 = vrot.lane.b32.xlu0 %v191, 11
  %v194 = vpop.permute.xlu0 %193
  %195 = vrot.lane.b32.xlu0 %v192, 11
  %v196 = vpop.permute.xlu0 %195
  %v197 = vsel %vm45, %v194, %v196
  %v198 = vsel %vm45, %v196, %v194
  %199 = vrot.lane.b32.xlu0 %v191, 10
  %v200 = vpop.permute.xlu0 %199
  %201 = vrot.lane.b32.xlu0 %v192, 10
  %v202 = vpop.permute.xlu0 %201
  %v203 = vsel %vm52, %v200, %v202
  %v204 = vsel %vm52, %v202, %v200
  %205 = vrot.lane.b32.xlu0 %v191, 9
  %v206 = vpop.permute.xlu0 %205
  %207 = vrot.lane.b32.xlu0 %v192, 9
  %v208 = vpop.permute.xlu0 %207
  %v209 = vsel %vm59, %v206, %v208
  %v210 = vsel %vm59, %v208, %v206
  %211 = vrot.lane.b32.xlu0 %v191, 1
  %v212 = vpop.permute.xlu0 %211
  %213 = vrot.lane.b32.xlu0 %v192, 1
  %v214 = vpop.permute.xlu0 %213
  %v215 = vsel %vm66, %v212, %v214
  %v216 = vsel %vm66, %v214, %v212
  %217 = vrot.lane.b32.xlu0 %v191, 127
  %v218 = vpop.permute.xlu0 %217
  %219 = vrot.lane.b32.xlu0 %v192, 127
  %v220 = vpop.permute.xlu0 %219
  %v221 = vsel %vm73, %v218, %v220
  %v222 = vsel %vm73, %v220, %v218
  %223 = vrot.lane.b32.xlu0 %v191, 119
  %v224 = vpop.permute.xlu0 %223
  %225 = vrot.lane.b32.xlu0 %v192, 119
  %v226 = vpop.permute.xlu0 %225
  %v227 = vsel %vm80, %v224, %v226
  %v228 = vsel %vm80, %v226, %v224
  %229 = vrot.lane.b32.xlu0 %v191, 118
  %v230 = vpop.permute.xlu0 %229
  %231 = vrot.lane.b32.xlu0 %v192, 118
  %v232 = vpop.permute.xlu0 %231
  %v233 = vsel %vm87, %v230, %v232
  %v234 = vsel %vm87, %v232, %v230
  %235 = vrot.lane.b32.xlu0 %v191, 117
  %v236 = vpop.permute.xlu0 %235
  %237 = vrot.lane.b32.xlu0 %v192, 117
  %v238 = vpop.permute.xlu0 %237
  %v239 = vsel %vm94, %v236, %v238
  %v240 = vsel %vm94, %v238, %v236
  %v242 = vsel %vm97, %v35, 0
  %244 = vmatpush.msra.mxu0 0.0
  %245 = vmatpush.msra.mxu0 0.0
  %246 = vmatpush.msra.mxu0 0.0
  %247 = vmatpush.msra.mxu0 0.0
  %248 = vmatpush.msra.mxu0 0.0
  %249 = vmatpush.msra.mxu0 0.0
  %250 = vmatpush.msra.mxu0 0.0
  %251 = vmatpush.msra.mxu0 %v239
  %252 = vmatpush.msra.mxu0 %v233
  %253 = vmatpush.msra.mxu0 %v227
  %254 = vmatpush.msra.mxu0 %v221
  %255 = vmatpush.msra.mxu0 %v191
  %256 = vmatpush.msra.mxu0 %v216
  %257 = vmatpush.msra.mxu0 %v210
  %258 = vmatpush.msra.mxu0 %v204
  %259 = vmatpush.msra.mxu0 %v198
  %260 = vmatmul.f32.gmra.mxu0 %v242
  %v261 = vpop.f32.mrf.mxu0
  %v262 = vadd.f32 0.0, %v261
  %263 = vdwg.mxu0
  %264 = vmatpush.msra.mxu0 0.0
  %265 = vmatpush.msra.mxu0 0.0
  %266 = vmatpush.msra.mxu0 0.0
  %267 = vmatpush.msra.mxu0 0.0
  %268 = vmatpush.msra.mxu0 0.0
  %269 = vmatpush.msra.mxu0 0.0
  %270 = vmatpush.msra.mxu0 0.0
  %271 = vmatpush.msra.mxu0 %v240
  %272 = vmatpush.msra.mxu0 %v234
  %273 = vmatpush.msra.mxu0 %v228
  %274 = vmatpush.msra.mxu0 %v222
  %275 = vmatpush.msra.mxu0 %v192
  %276 = vmatpush.msra.mxu0 %v215
  %277 = vmatpush.msra.mxu0 %v209
  %278 = vmatpush.msra.mxu0 %v203
  %279 = vmatpush.msra.mxu0 %v197
  %280 = vmatmul.f32.gmra.mxu0 %v242
  %v281 = vpop.f32.mrf.mxu0
  %v282 = vadd.f32 0.0, %v281
  %283 = vdwg.mxu0
  %v284 = vmul.f32 %v262, %v142
  %v285 = vmul.f32 %v282, %v143
  %v286 = vadd.f32 %v284, %v285
  %287 = vadd.xlane.f32.xlu0 %v286
  %v288 = vpop.xlane.xlu0 %287
  %v289 = vmul.f32 %v284, %v262
  %v290 = vmul.f32 %v285, %v282
  %v291 = vadd.f32 %v289, %v290
  %292 = vadd.xlane.f32.xlu0 %v291
  %v293 = vpop.xlane.xlu0 %292
  %v294 = vmul.f32 %v288, 0.0078125
  %v295 = vmul.f32 %v293, 0.0078125
  %v296 = vmul.f32 %v294, %v294
  %v297 = vsub.f32 %v295, %v296
  %v298 = vmax.f32 %v297, 0.0
  %v299 = vadd.f32 %v298, 1e-05
  %v300 = vrsqrt.pop %v299
  %v301 = vmul.f32 %v300, %v299
  %v302 = vmul.f32 %v301, %v300
  %v303 = vmul.f32 0.5, %v302
  %v304 = vsub.f32 1.5, %v303
  %v305 = vmul.f32 %v300, %v304
  %vm306 = vweird.f32 %v299
  %vm307 = vweird.f32 %v300
  %vm308 = vmor %vm306, %vm307
  %v309 = vsel %vm308, %v300, %v305
  %v310 = vmul.f32 %v309, %v36
  %v311 = vmul.f32 %v294, %v310
  %v312 = vsub.f32 %v37, %v311
  %314 = vset.pattern.permute.xlu0 0
  %315 = vperm.xlu0 %314, %v310
  %v316 = vpop.permute.xlu0 %315
  %v318 = vmul.f32 %v262, %v316
  %v319 = vmul.f32 %v282, %v316
  %321 = vset.pattern.permute.xlu0 0
  %322 = vperm.xlu0 %321, %v312
  %v323 = vpop.permute.xlu0 %322
  %v325 = vadd.f32 %v318, %v323
  %v326 = vadd.f32 %v319, %v323
  %v327 = vmax.f32 %v325, 0.0
  %v328 = vmax.f32 %v326, 0.0
  %v329 = vmul.f32 %v327, %v142
  %v330 = vmul.f32 %v328, %v143
  %v331 = vpack.c.bf16 %v330, %v329
  %332 = vst [vmem:[%s8] sm:$0xff] %v331
  // Predicated region
  $region34: #{unet_forward.6} parent=0 // pred_check
    _
  $region35: #{unet_forward.6} parent=0 // pred_check_branch
    %334 = sbr.rel (0) target = $region37
  $region36: #{unet_forward.6} parent=0 // pred_region
    _
  $region37: #{unet_forward.6} parent=0 // pred_fallthru
    _
  // Predicated region
  $region38: #{unet_forward.6} parent=0 // pred_check
    _
  $region39: #{unet_forward.6} parent=0 // pred_check_branch
    %336 = sbr.rel (0) target = $region41
  $region40: #{unet_forward.6} parent=0 // pred_region
    _
  $region41: #{unet_forward.6} parent=0 // pred_fallthru
    _

// kernel: unet_forward.7
$region0: #{unet_forward.7}
  #allocation0 [shape = 'u32[]', space=smem, size = 0x4, offset = 0x4, fixed_abs, tag = 'smem constant byte address 0x4 - core index']
  #allocation1 [shape = 'u32[72,128]{1,0:T(1,128)}', space=vmem, size = 0x9000, scoped, tag = 'internal scratch']
  %s0 = inlined_call_operand.vmem [shape: bf16[8,128], index: 0, kind: input, shape index: {}]
  %s1 = inlined_call_operand.vmem [shape: f32[8,72], index: 1, kind: input, shape index: {}]
  %s2 = inlined_call_operand.vmem [shape: f32[8,1], index: 2, kind: input, shape index: {}]
  %s3 = inlined_call_operand.vmem [shape: f32[8,1], index: 3, kind: input, shape index: {}]
  %s4 = inlined_call_operand.vmem [shape: f32[8,72], index: 4, kind: input, shape index: {}]
  %s5 = inlined_call_operand.vmem [shape: f32[8,1], index: 5, kind: input, shape index: {}]
  %s6 = inlined_call_operand.vmem [shape: f32[8,1], index: 6, kind: input, shape index: {}]
  %s7 = inlined_call_operand.vmem [shape: f32[1,128], index: 7, kind: input, shape index: {}]
  %s8 = inlined_call_operand.vmem [shape: f32[32,8], index: 8, kind: input, shape index: {}]
  %s9 = inlined_call_operand.vmem [shape: bf16[32,128], index: 9, kind: output, shape index: {}]
  %s10 = sld [smem:[#allocation0]]
  $region46: #{unet_forward.7} parent=0
    _
  %s12 = ssub.s32 1, %s10
  %s13 = scalar_select 0, %s12, %s10
  // Predicated region
  $region2: #{unet_forward.7} parent=0 // pred_check
    _
  $region3: #{unet_forward.7} parent=0 // pred_check_branch
    %15 = sbr.rel (0) target = $region5
  $region4: #{unet_forward.7} parent=0 // pred_region
    _
  $region5: #{unet_forward.7} parent=0 // pred_fallthru
    _
  // Predicated region
  $region6: #{unet_forward.7} parent=0 // pred_check
    _
  $region7: #{unet_forward.7} parent=0 // pred_check_branch
    %17 = sbr.rel (0) target = $region9
  $region8: #{unet_forward.7} parent=0 // pred_region
    _
  $region9: #{unet_forward.7} parent=0 // pred_fallthru
    _
  // Predicated region
  $region10: #{unet_forward.7} parent=0 // pred_check
    _
  $region11: #{unet_forward.7} parent=0 // pred_check_branch
    %19 = sbr.rel (0) target = $region13
  $region12: #{unet_forward.7} parent=0 // pred_region
    _
  $region13: #{unet_forward.7} parent=0 // pred_fallthru
    _
  // Predicated region
  $region14: #{unet_forward.7} parent=0 // pred_check
    _
  $region15: #{unet_forward.7} parent=0 // pred_check_branch
    %21 = sbr.rel (0) target = $region17
  $region16: #{unet_forward.7} parent=0 // pred_region
    _
  $region17: #{unet_forward.7} parent=0 // pred_fallthru
    _
  // Predicated region
  $region18: #{unet_forward.7} parent=0 // pred_check
    _
  $region19: #{unet_forward.7} parent=0 // pred_check_branch
    %23 = sbr.rel (0) target = $region21
  $region20: #{unet_forward.7} parent=0 // pred_region
    _
  $region21: #{unet_forward.7} parent=0 // pred_fallthru
    _
  // Predicated region
  $region22: #{unet_forward.7} parent=0 // pred_check
    _
  $region23: #{unet_forward.7} parent=0 // pred_check_branch
    %25 = sbr.rel (0) target = $region25
  $region24: #{unet_forward.7} parent=0 // pred_region
    _
  $region25: #{unet_forward.7} parent=0 // pred_fallthru
    _
  // Predicated region
  $region26: #{unet_forward.7} parent=0 // pred_check
    _
  $region27: #{unet_forward.7} parent=0 // pred_check_branch
    %27 = sbr.rel (0) target = $region29
  $region28: #{unet_forward.7} parent=0 // pred_region
    _
  $region29: #{unet_forward.7} parent=0 // pred_fallthru
    _
  // Predicated region
  $region30: #{unet_forward.7} parent=0 // pred_check
    _
  $region31: #{unet_forward.7} parent=0 // pred_check_branch
    %29 = sbr.rel (0) target = $region33
  $region32: #{unet_forward.7} parent=0 // pred_region
    _
  $region33: #{unet_forward.7} parent=0 // pred_fallthru
    _
  // Predicated region
  $region34: #{unet_forward.7} parent=0 // pred_check
    _
  $region35: #{unet_forward.7} parent=0 // pred_check_branch
    %31 = sbr.rel (0) target = $region37
  $region36: #{unet_forward.7} parent=0 // pred_region
    _
  $region37: #{unet_forward.7} parent=0 // pred_fallthru
    _
  %v32 = vld [vmem:[%s0] sm:$0xf]
  %v33 = vunpack.c.l.bf16 %v32
  %v34 = vld [vmem:[%s1] sm:$0xff]
  %v35 = vld [vmem:[%s2] sm:$0xff]
  %v36 = vld [vmem:[%s3] sm:$0xff]
  %v37 = vld [vmem:[%s4] sm:$0xff]
  %v38 = vld [vmem:[%s5] sm:$0xff]
  %v39 = vld [vmem:[%s6] sm:$0xff]
  %v40 = vld [vmem:[%s7] sm:$0x1]
  %41 = vrot.lane.b32.xlu0 %v33, 7
  %v42 = vpop.permute.xlu0 %41
  %43 = vrot.lane.b32.xlu0 %v33, 6
  %v44 = vpop.permute.xlu0 %43
  %45 = vrot.lane.b32.xlu0 %v33, 5
  %v46 = vpop.permute.xlu0 %45
  %47 = vrot.lane.b32.xlu0 %v33, 1
  %v48 = vpop.permute.xlu0 %47
  %49 = vrot.lane.b32.xlu0 %v33, 127
  %v50 = vpop.permute.xlu0 %49
  %51 = vrot.lane.b32.xlu0 %v33, 123
  %v52 = vpop.permute.xlu0 %51
  %53 = vrot.lane.b32.xlu0 %v33, 122
  %v54 = vpop.permute.xlu0 %53
  %55 = vrot.lane.b32.xlu0 %v33, 121
  %v56 = vpop.permute.xlu0 %55
  %vm57 = vcmask 588800
  %v59 = vsel %vm57, %v34, 0
  %61 = vmatpush.msra.mxu0 0.0
  %62 = vmatpush.msra.mxu0 0.0
  %63 = vmatpush.msra.mxu0 0.0
  %64 = vmatpush.msra.mxu0 0.0
  %65 = vmatpush.msra.mxu0 0.0
  %66 = vmatpush.msra.mxu0 0.0
  %67 = vmatpush.msra.mxu0 0.0
  %68 = vmatpush.msra.mxu0 %v56
  %69 = vmatpush.msra.mxu0 %v54
  %70 = vmatpush.msra.mxu0 %v52
  %71 = vmatpush.msra.mxu0 %v50
  %72 = vmatpush.msra.mxu0 %v33
  %73 = vmatpush.msra.mxu0 %v48
  %74 = vmatpush.msra.mxu0 %v46
  %75 = vmatpush.msra.mxu0 %v44
  %76 = vmatpush.msra.mxu0 %v42
  %77 = vmatmul.f32.gmra.mxu0 %v59
  %v78 = vpop.f32.mrf.mxu0
  %v79 = vadd.f32 0.0, %v78
  %80 = vdwg.mxu0
  %v82 = vperm.slane %v40, 0
  %v84 = vmul.f32 %v79, %v82
  %85 = vadd.xlane.f32.xlu0 %v84
  %v86 = vpop.xlane.xlu0 %85
  %v87 = vmul.f32 %v84, %v79
  %88 = vadd.xlane.f32.xlu0 %v87
  %v89 = vpop.xlane.xlu0 %88
  %v90 = vmul.f32 %v86, 0.03125
  %v91 = vmul.f32 %v89, 0.03125
  %v92 = vmul.f32 %v90, %v90
  %v93 = vsub.f32 %v91, %v92
  %v94 = vmax.f32 %v93, 0.0
  %v95 = vadd.f32 %v94, 1e-05
  %v96 = vrsqrt.pop %v95
  %v97 = vmul.f32 %v96, %v95
  %v98 = vmul.f32 %v97, %v96
  %v99 = vmul.f32 0.5, %v98
  %v100 = vsub.f32 1.5, %v99
  %v101 = vmul.f32 %v96, %v100
  %vm102 = vweird.f32 %v95
  %vm103 = vweird.f32 %v96
  %vm104 = vmor %vm102, %vm103
  %v105 = vsel %vm104, %v96, %v101
  %v106 = vmul.f32 %v105, %v35
  %v107 = vmul.f32 %v90, %v106
  %v108 = vsub.f32 %v36, %v107
  %110 = vset.pattern.permute.xlu0 0
  %111 = vperm.xlu0 %110, %v106
  %v112 = vpop.permute.xlu0 %111
  %v114 = vmul.f32 %v79, %v112
  %116 = vset.pattern.permute.xlu0 0
  %117 = vperm.xlu0 %116, %v108
  %v118 = vpop.permute.xlu0 %117
  %v120 = vadd.f32 %v114, %v118
  %v121 = vmax.f32 %v120, 0.0
  %v122 = vmul.f32 %v121, %v82
  %123 = vrot.lane.b32.xlu0 %v122, 7
  %v124 = vpop.permute.xlu0 %123
  %125 = vrot.lane.b32.xlu0 %v122, 6
  %v126 = vpop.permute.xlu0 %125
  %127 = vrot.lane.b32.xlu0 %v122, 5
  %v128 = vpop.permute.xlu0 %127
  %129 = vrot.lane.b32.xlu0 %v122, 1
  %v130 = vpop.permute.xlu0 %129
  %131 = vrot.lane.b32.xlu0 %v122, 127
  %v132 = vpop.permute.xlu0 %131
  %133 = vrot.lane.b32.xlu0 %v122, 123
  %v134 = vpop.permute.xlu0 %133
  %135 = vrot.lane.b32.xlu0 %v122, 122
  %v136 = vpop.permute.xlu0 %135
  %137 = vrot.lane.b32.xlu0 %v122, 121
  %v138 = vpop.permute.xlu0 %137
  %v140 = vsel %vm57, %v37, 0
  %142 = vmatpush.msra.mxu0 0.0
  %143 = vmatpush.msra.mxu0 0.0
  %144 = vmatpush.msra.mxu0 0.0
  %145 = vmatpush.msra.mxu0 0.0
  %146 = vmatpush.msra.mxu0 0.0
  %147 = vmatpush.msra.mxu0 0.0
  %148 = vmatpush.msra.mxu0 0.0
  %149 = vmatpush.msra.mxu0 %v138
  %150 = vmatpush.msra.mxu0 %v136
  %151 = vmatpush.msra.mxu0 %v134
  %152 = vmatpush.msra.mxu0 %v132
  %153 = vmatpush.msra.mxu0 %v122
  %154 = vmatpush.msra.mxu0 %v130
  %155 = vmatpush.msra.mxu0 %v128
  %156 = vmatpush.msra.mxu0 %v126
  %157 = vmatpush.msra.mxu0 %v124
  %158 = vmatmul.f32.gmra.mxu0 %v140
  %v159 = vpop.f32.mrf.mxu0
  %v160 = vadd.f32 0.0, %v159
  %161 = vdwg.mxu0
  %v162 = vmul.f32 %v160, %v82
  %163 = vadd.xlane.f32.xlu0 %v162
  %v164 = vpop.xlane.xlu0 %163
  %v165 = vmul.f32 %v162, %v160
  %166 = vadd.xlane.f32.xlu0 %v165
  %v167 = vpop.xlane.xlu0 %166
  %v168 = vmul.f32 %v164, 0.03125
  %v169 = vmul.f32 %v167, 0.03125
  %v170 = vmul.f32 %v168, %v168
  %v171 = vsub.f32 %v169, %v170
  %v172 = vmax.f32 %v171, 0.0
  %v173 = vadd.f32 %v172, 1e-05
  %v174 = vrsqrt.pop %v173
  %v175 = vmul.f32 %v174, %v173
  %v176 = vmul.f32 %v175, %v174
  %v177 = vmul.f32 0.5, %v176
  %v178 = vsub.f32 1.5, %v177
  %v179 = vmul.f32 %v174, %v178
  %vm180 = vweird.f32 %v173
  %vm181 = vweird.f32 %v174
  %vm182 = vmor %vm180, %vm181
  %v183 = vsel %vm182, %v174, %v179
  %v184 = vmul.f32 %v183, %v38
  %v185 = vmul.f32 %v168, %v184
  %v186 = vsub.f32 %v39, %v185
  %188 = vset.pattern.permute.xlu0 0
  %189 = vperm.xlu0 %188, %v184
  %v190 = vpop.permute.xlu0 %189
  %v192 = vmul.f32 %v160, %v190
  %194 = vset.pattern.permute.xlu0 0
  %195 = vperm.xlu0 %194, %v186
  %v196 = vpop.permute.xlu0 %195
  %v198 = vadd.f32 %v192, %v196
  %v199 = vmax.f32 %v198, 0.0
  %v200 = vmul.f32 %v199, %v82
  %v201 = vld [vmem:[%s8] sm:$0xff]
  %v202 = vld [vmem:[%s8 + $0x8] sm:$0xff]
  %v203 = vld [vmem:[%s8 + $0x10] sm:$0xff]
  %v204 = vld [vmem:[%s8 + $0x18] sm:$0xff]
  %vm205 = vcmask 64512
  %v207 = vsel %vm205, %v201, 0
  %v210 = vsel %vm205, %v202, 0
  %v213 = vsel %vm205, %v203, 0
  %v216 = vsel %vm205, %v204, 0
  %218 = vmatpush.msra.mxu0 0.0
  %219 = vmatpush.msra.mxu0 0.0
  %220 = vmatpush.msra.mxu0 0.0
  %221 = vmatpush.msra.mxu0 0.0
  %222 = vmatpush.msra.mxu0 0.0
  %223 = vmatpush.msra.mxu0 0.0
  %224 = vmatpush.msra.mxu0 0.0
  %225 = vmatpush.msra.mxu0 0.0
  %226 = vmatpush.msra.mxu0 0.0
  %227 = vmatpush.msra.mxu0 0.0
  %228 = vmatpush.msra.mxu0 0.0
  %229 = vmatpush.msra.mxu0 0.0
  %230 = vmatpush.msra.mxu0 0.0
  %231 = vmatpush.msra.mxu0 0.0
  %232 = vmatpush.msra.mxu0 0.0
  %233 = vmatpush.msra.mxu0 %v200
  %234 = vmatmul.f32.gmra.mxu0 %v207
  %v235 = vpop.f32.mrf.mxu0
  %v236 = vadd.f32 0.0, %v235
  %237 = vmatmul.f32.gmra.mxu0 %v210
  %v238 = vpop.f32.mrf.mxu0
  %v239 = vadd.f32 0.0, %v238
  %240 = vmatmul.f32.gmra.mxu0 %v213
  %v241 = vpop.f32.mrf.mxu0
  %v242 = vadd.f32 0.0, %v241
  %243 = vmatmul.f32.gmra.mxu0 %v216
  %v244 = vpop.f32.mrf.mxu0
  %v245 = vadd.f32 0.0, %v244
  %246 = vdwg.mxu0
  %v247 = vpack.c.bf16 %v236, %v236
  %v248 = vpack.c.bf16 %v239, %v239
  %v249 = vpack.c.bf16 %v242, %v242
  %v250 = vpack.c.bf16 %v245, %v245
  %251 = vst [vmem:[%s9] sm:$0xf] %v247
  %252 = vst [vmem:[%s9 + $0x4] sm:$0xf] %v248
  %253 = vst [vmem:[%s9 + $0x8] sm:$0xf] %v249
  %254 = vst [vmem:[%s9 + $0xc] sm:$0xf] %v250
  // Predicated region
  $region38: #{unet_forward.7} parent=0 // pred_check
    _
  $region39: #{unet_forward.7} parent=0 // pred_check_branch
    %256 = sbr.rel (0) target = $region41
  $region40: #{unet_forward.7} parent=0 // pred_region
    _
  $region41: #{unet_forward.7} parent=0 // pred_fallthru
    _
  // Predicated region
  $region42: #{unet_forward.7} parent=0 // pred_check
    _
  $region43: #{unet_forward.7} parent=0 // pred_check_branch
    %258 = sbr.rel (0) target = $region45
  $region44: #{unet_forward.7} parent=0 // pred_region
    _
  $region45: #{unet_forward.7} parent=0 // pred_fallthru
    _

// kernel: unet_forward.8
$region0: #{unet_forward.8}
  #allocation0 [shape = 'u32[]', space=smem, size = 0x4, offset = 0x4, fixed_abs, tag = 'smem constant byte address 0x4 - core index']
  #allocation1 [shape = 'u32[72,128]{1,0:T(1,128)}', space=vmem, size = 0x9000, scoped, tag = 'internal scratch']
  %s0 = inlined_call_operand.vmem [shape: bf16[8,256], index: 0, kind: input, shape index: {}]
  %s1 = inlined_call_operand.vmem [shape: bf16[8,256], index: 1, kind: input, shape index: {}]
  %s2 = inlined_call_operand.vmem [shape: f32[8,144], index: 2, kind: input, shape index: {}]
  %s3 = inlined_call_operand.vmem [shape: f32[8,1], index: 3, kind: input, shape index: {}]
  %s4 = inlined_call_operand.vmem [shape: f32[8,1], index: 4, kind: input, shape index: {}]
  %s5 = inlined_call_operand.vmem [shape: f32[8,72], index: 5, kind: input, shape index: {}]
  %s6 = inlined_call_operand.vmem [shape: f32[8,1], index: 6, kind: input, shape index: {}]
  %s7 = inlined_call_operand.vmem [shape: f32[8,1], index: 7, kind: input, shape index: {}]
  %s8 = inlined_call_operand.vmem [shape: f32[1,256], index: 8, kind: input, shape index: {}]
  %s9 = inlined_call_operand.vmem [shape: f32[32,8], index: 9, kind: input, shape index: {}]
  %s10 = inlined_call_operand.vmem [shape: bf16[32,256], index: 10, kind: output, shape index: {}]
  %s11 = sld [smem:[#allocation0]]
  $region50: #{unet_forward.8} parent=0
    _
  %s13 = ssub.s32 1, %s11
  %s14 = scalar_select 0, %s13, %s11
  // Predicated region
  $region2: #{unet_forward.8} parent=0 // pred_check
    _
  $region3: #{unet_forward.8} parent=0 // pred_check_branch
    %16 = sbr.rel (0) target = $region5
  $region4: #{unet_forward.8} parent=0 // pred_region
    _
  $region5: #{unet_forward.8} parent=0 // pred_fallthru
    _
  // Predicated region
  $region6: #{unet_forward.8} parent=0 // pred_check
    _
  $region7: #{unet_forward.8} parent=0 // pred_check_branch
    %18 = sbr.rel (0) target = $region9
  $region8: #{unet_forward.8} parent=0 // pred_region
    _
  $region9: #{unet_forward.8} parent=0 // pred_fallthru
    _
  // Predicated region
  $region10: #{unet_forward.8} parent=0 // pred_check
    _
  $region11: #{unet_forward.8} parent=0 // pred_check_branch
    %20 = sbr.rel (0) target = $region13
  $region12: #{unet_forward.8} parent=0 // pred_region
    _
  $region13: #{unet_forward.8} parent=0 // pred_fallthru
    _
  // Predicated region
  $region14: #{unet_forward.8} parent=0 // pred_check
    _
  $region15: #{unet_forward.8} parent=0 // pred_check_branch
    %22 = sbr.rel (0) target = $region17
  $region16: #{unet_forward.8} parent=0 // pred_region
    _
  $region17: #{unet_forward.8} parent=0 // pred_fallthru
    _
  // Predicated region
  $region18: #{unet_forward.8} parent=0 // pred_check
    _
  $region19: #{unet_forward.8} parent=0 // pred_check_branch
    %24 = sbr.rel (0) target = $region21
  $region20: #{unet_forward.8} parent=0 // pred_region
    _
  $region21: #{unet_forward.8} parent=0 // pred_fallthru
    _
  // Predicated region
  $region22: #{unet_forward.8} parent=0 // pred_check
    _
  $region23: #{unet_forward.8} parent=0 // pred_check_branch
    %26 = sbr.rel (0) target = $region25
  $region24: #{unet_forward.8} parent=0 // pred_region
    _
  $region25: #{unet_forward.8} parent=0 // pred_fallthru
    _
  // Predicated region
  $region26: #{unet_forward.8} parent=0 // pred_check
    _
  $region27: #{unet_forward.8} parent=0 // pred_check_branch
    %28 = sbr.rel (0) target = $region29
  $region28: #{unet_forward.8} parent=0 // pred_region
    _
  $region29: #{unet_forward.8} parent=0 // pred_fallthru
    _
  // Predicated region
  $region30: #{unet_forward.8} parent=0 // pred_check
    _
  $region31: #{unet_forward.8} parent=0 // pred_check_branch
    %30 = sbr.rel (0) target = $region33
  $region32: #{unet_forward.8} parent=0 // pred_region
    _
  $region33: #{unet_forward.8} parent=0 // pred_fallthru
    _
  // Predicated region
  $region34: #{unet_forward.8} parent=0 // pred_check
    _
  $region35: #{unet_forward.8} parent=0 // pred_check_branch
    %32 = sbr.rel (0) target = $region37
  $region36: #{unet_forward.8} parent=0 // pred_region
    _
  $region37: #{unet_forward.8} parent=0 // pred_fallthru
    _
  // Predicated region
  $region38: #{unet_forward.8} parent=0 // pred_check
    _
  $region39: #{unet_forward.8} parent=0 // pred_check_branch
    %34 = sbr.rel (0) target = $region41
  $region40: #{unet_forward.8} parent=0 // pred_region
    _
  $region41: #{unet_forward.8} parent=0 // pred_fallthru
    _
  %v35 = vld [vmem:[%s0] sm:$0xff]
  %v36 = vunpack.c.l.bf16 %v35
  %v37 = vunpack.c.h.bf16 %v35
  %v38 = vld [vmem:[%s1] sm:$0xff]
  %v39 = vunpack.c.l.bf16 %v38
  %v40 = vunpack.c.h.bf16 %v38
  %v41 = vld [vmem:[%s2] sm:$0xff]
  %v42 = vld [vmem:[%s2 + $0x8] sm:$0xff]
  %v43 = vld [vmem:[%s3] sm:$0xff]
  %v44 = vld [vmem:[%s4] sm:$0xff]
  %v45 = vld [vmem:[%s5] sm:$0xff]
  %v46 = vld [vmem:[%s6] sm:$0xff]
  %v47 = vld [vmem:[%s7] sm:$0xff]
  %v48 = vld [vmem:[%s8] sm:$0x3]
  %49 = vrot.lane.b32.xlu0 %v36, 11
  %v50 = vpop.permute.xlu0 %49
  %51 = vrot.lane.b32.xlu0 %v37, 11
  %v52 = vpop.permute.xlu0 %51
  %v53 = vlaneseq
  %v54 = vand.u32 %v53, 127
  %vm55 = vcmp.lt.s32.totalorder %v54, 11
  %v56 = vsel %vm55, %v50, %v52
  %v57 = vsel %vm55, %v52, %v50
  %58 = vrot.lane.b32.xlu0 %v39, 11
  %v59 = vpop.permute.xlu0 %58
  %60 = vrot.lane.b32.xlu0 %v40, 11
  %v61 = vpop.permute.xlu0 %60
  %v62 = vsel %vm55, %v59, %v61
  %v63 = vsel %vm55, %v61, %v59
  %64 = vrot.lane.b32.xlu0 %v36, 10
  %v65 = vpop.permute.xlu0 %64
  %66 = vrot.lane.b32.xlu0 %v37, 10
  %v67 = vpop.permute.xlu0 %66
  %vm68 = vcmp.lt.s32.totalorder %v54, 10
  %v69 = vsel %vm68, %v65, %v67
  %v70 = vsel %vm68, %v67, %v65
  %71 = vrot.lane.b32.xlu0 %v39, 10
  %v72 = vpop.permute.xlu0 %71
  %73 = vrot.lane.b32.xlu0 %v40, 10
  %v74 = vpop.permute.xlu0 %73
  %v75 = vsel %vm68, %v72, %v74
  %v76 = vsel %vm68, %v74, %v72
  %77 = vrot.lane.b32.xlu0 %v36, 9
  %v78 = vpop.permute.xlu0 %77
  %79 = vrot.lane.b32.xlu0 %v37, 9
  %v80 = vpop.permute.xlu0 %79
  %vm81 = vcmp.lt.s32.totalorder %v54, 9
  %v82 = vsel %vm81, %v78, %v80
  %v83 = vsel %vm81, %v80, %v78
  %84 = vrot.lane.b32.xlu0 %v39, 9
  %v85 = vpop.permute.xlu0 %84
  %86 = vrot.lane.b32.xlu0 %v40, 9
  %v87 = vpop.permute.xlu0 %86
  %v88 = vsel %vm81, %v85, %v87
  %v89 = vsel %vm81, %v87, %v85
  %90 = vrot.lane.b32.xlu0 %v36, 1
  %v91 = vpop.permute.xlu0 %90
  %92 = vrot.lane.b32.xlu0 %v37, 1
  %v93 = vpop.permute.xlu0 %92
  %vm94 = vcmp.lt.s32.totalorder %v54, 1
  %v95 = vsel %vm94, %v91, %v93
  %v96 = vsel %vm94, %v93, %v91
  %97 = vrot.lane.b32.xlu0 %v39, 1
  %v98 = vpop.permute.xlu0 %97
  %99 = vrot.lane.b32.xlu0 %v40, 1
  %v100 = vpop.permute.xlu0 %99
  %v101 = vsel %vm94, %v98, %v100
  %v102 = vsel %vm94, %v100, %v98
  %103 = vrot.lane.b32.xlu0 %v36, 127
  %v104 = vpop.permute.xlu0 %103
  %105 = vrot.lane.b32.xlu0 %v37, 127
  %v106 = vpop.permute.xlu0 %105
  %vm107 = vcmp.lt.s32.totalorder %v54, 127
  %v108 = vsel %vm107, %v104, %v106
  %v109 = vsel %vm107, %v106, %v104
  %110 = vrot.lane.b32.xlu0 %v39, 127
  %v111 = vpop.permute.xlu0 %110
  %112 = vrot.lane.b32.xlu0 %v40, 127
  %v113 = vpop.permute.xlu0 %112
  %v114 = vsel %vm107, %v111, %v113
  %v115 = vsel %vm107, %v113, %v111
  %116 = vrot.lane.b32.xlu0 %v36, 119
  %v117 = vpop.permute.xlu0 %116
  %118 = vrot.lane.b32.xlu0 %v37, 119
  %v119 = vpop.permute.xlu0 %118
  %vm120 = vcmp.lt.s32.totalorder %v54, 119
  %v121 = vsel %vm120, %v117, %v119
  %v122 = vsel %vm120, %v119, %v117
  %123 = vrot.lane.b32.xlu0 %v39, 119
  %v124 = vpop.permute.xlu0 %123
  %125 = vrot.lane.b32.xlu0 %v40, 119
  %v126 = vpop.permute.xlu0 %125
  %v127 = vsel %vm120, %v124, %v126
  %v128 = vsel %vm120, %v126, %v124
  %129 = vrot.lane.b32.xlu0 %v36, 118
  %v130 = vpop.permute.xlu0 %129
  %131 = vrot.lane.b32.xlu0 %v37, 118
  %v132 = vpop.permute.xlu0 %131
  %vm133 = vcmp.lt.s32.totalorder %v54, 118
  %v134 = vsel %vm133, %v130, %v132
  %v135 = vsel %vm133, %v132, %v130
  %136 = vrot.lane.b32.xlu0 %v39, 118
  %v137 = vpop.permute.xlu0 %136
  %138 = vrot.lane.b32.xlu0 %v40, 118
  %v139 = vpop.permute.xlu0 %138
  %v140 = vsel %vm133, %v137, %v139
  %v141 = vsel %vm133, %v139, %v137
  %142 = vrot.lane.b32.xlu0 %v36, 117
  %v143 = vpop.permute.xlu0 %142
  %144 = vrot.lane.b32.xlu0 %v37, 117
  %v145 = vpop.permute.xlu0 %144
  %vm146 = vcmp.lt.s32.totalorder %v54, 117
  %v147 = vsel %vm146, %v143, %v145
  %v148 = vsel %vm146, %v145, %v143
  %149 = vrot.lane.b32.xlu0 %v39, 117
  %v150 = vpop.permute.xlu0 %149
  %151 = vrot.lane.b32.xlu0 %v40, 117
  %v152 = vpop.permute.xlu0 %151
  %v153 = vsel %vm146, %v150, %v152
  %v154 = vsel %vm146, %v152, %v150
  %vm155 = vcmask 130048
  %v157 = vsel %vm155, %v42, 0
  %159 = vmatpush.msra.mxu0 %v140
  %160 = vmatpush.msra.mxu0 %v134
  %161 = vmatpush.msra.mxu0 %v127
  %162 = vmatpush.msra.mxu0 %v121
  %163 = vmatpush.msra.mxu0 %v114
  %164 = vmatpush.msra.mxu0 %v108
  %165 = vmatpush.msra.mxu0 %v39
  %166 = vmatpush.msra.mxu0 %v36
  %167 = vmatpush.msra.mxu0 %v102
  %168 = vmatpush.msra.mxu0 %v96
  %169 = vmatpush.msra.mxu0 %v89
  %170 = vmatpush.msra.mxu0 %v83
  %171 = vmatpush.msra.mxu0 %v76
  %172 = vmatpush.msra.mxu0 %v70
  %173 = vmatpush.msra.mxu0 %v63
  %174 = vmatpush.msra.mxu0 %v57
  %175 = vmatmul.f32.gmra.mxu0 %v41
  %v176 = vpop.f32.mrf.mxu0
  %v177 = vadd.f32 0.0, %v176
  %178 = vdwg.mxu0
  %179 = vmatpush.msra.mxu0 0.0
  %180 = vmatpush.msra.mxu0 0.0
  %181 = vmatpush.msra.mxu0 0.0
  %182 = vmatpush.msra.mxu0 0.0
  %183 = vmatpush.msra.mxu0 0.0
  %184 = vmatpush.msra.mxu0 0.0
  %185 = vmatpush.msra.mxu0 0.0
  %186 = vmatpush.msra.mxu0 0.0
  %187 = vmatpush.msra.mxu0 0.0
  %188 = vmatpush.msra.mxu0 0.0
  %189 = vmatpush.msra.mxu0 0.0
  %190 = vmatpush.msra.mxu0 0.0
  %191 = vmatpush.msra.mxu0 0.0
  %192 = vmatpush.msra.mxu0 0.0
  %193 = vmatpush.msra.mxu0 %v153
  %194 = vmatpush.msra.mxu0 %v147
  %195 = vmatmul.f32.gmra.mxu0 %v157
  %v196 = vpop.f32.mrf.mxu0
  %v197 = vadd.f32 %v177, %v196
  %198 = vdwg.mxu0
  %199 = vmatpush.msra.mxu0 %v141
  %200 = vmatpush.msra.mxu0 %v135
  %201 = vmatpush.msra.mxu0 %v128
  %202 = vmatpush.msra.mxu0 %v122
  %203 = vmatpush.msra.mxu0 %v115
  %204 = vmatpush.msra.mxu0 %v109
  %205 = vmatpush.msra.mxu0 %v40
  %206 = vmatpush.msra.mxu0 %v37
  %207 = vmatpush.msra.mxu0 %v101
  %208 = vmatpush.msra.mxu0 %v95
  %209 = vmatpush.msra.mxu0 %v88
  %210 = vmatpush.msra.mxu0 %v82
  %211 = vmatpush.msra.mxu0 %v75
  %212 = vmatpush.msra.mxu0 %v69
  %213 = vmatpush.msra.mxu0 %v62
  %214 = vmatpush.msra.mxu0 %v56
  %215 = vmatmul.f32.gmra.mxu0 %v41
  %v216 = vpop.f32.mrf.mxu0
  %v217 = vadd.f32 0.0, %v216
  %218 = vdwg.mxu0
  %219 = vmatpush.msra.mxu0 0.0
  %220 = vmatpush.msra.mxu0 0.0
  %221 = vmatpush.msra.mxu0 0.0
  %222 = vmatpush.msra.mxu0 0.0
  %223 = vmatpush.msra.mxu0 0.0
  %224 = vmatpush.msra.mxu0 0.0
  %225 = vmatpush.msra.mxu0 0.0
  %226 = vmatpush.msra.mxu0 0.0
  %227 = vmatpush.msra.mxu0 0.0
  %228 = vmatpush.msra.mxu0 0.0
  %229 = vmatpush.msra.mxu0 0.0
  %230 = vmatpush.msra.mxu0 0.0
  %231 = vmatpush.msra.mxu0 0.0
  %232 = vmatpush.msra.mxu0 0.0
  %233 = vmatpush.msra.mxu0 %v154
  %234 = vmatpush.msra.mxu0 %v148
  %235 = vmatmul.f32.gmra.mxu0 %v157
  %v236 = vpop.f32.mrf.mxu0
  %v237 = vadd.f32 %v217, %v236
  %238 = vdwg.mxu0
  %v240 = vperm.slane %v48, 0
  %v241 = vperm.slane %v48, 1
  %v244 = vmul.f32 %v197, %v240
  %v245 = vmul.f32 %v237, %v241
  %v246 = vadd.f32 %v244, %v245
  %247 = vadd.xlane.f32.xlu0 %v246
  %v248 = vpop.xlane.xlu0 %247
  %v249 = vmul.f32 %v244, %v197
  %v250 = vmul.f32 %v245, %v237
  %v251 = vadd.f32 %v249, %v250
  %252 = vadd.xlane.f32.xlu0 %v251
  %v253 = vpop.xlane.xlu0 %252
  %v254 = vmul.f32 %v248, 0.0078125
  %v255 = vmul.f32 %v253, 0.0078125
  %v256 = vmul.f32 %v254, %v254
  %v257 = vsub.f32 %v255, %v256
  %v258 = vmax.f32 %v257, 0.0
  %v259 = vadd.f32 %v258, 1e-05
  %v260 = vrsqrt.pop %v259
  %v261 = vmul.f32 %v260, %v259
  %v262 = vmul.f32 %v261, %v260
  %v263 = vmul.f32 0.5, %v262
  %v264 = vsub.f32 1.5, %v263
  %v265 = vmul.f32 %v260, %v264
  %vm266 = vweird.f32 %v259
  %vm267 = vweird.f32 %v260
  %vm268 = vmor %vm266, %vm267
  %v269 = vsel %vm268, %v260, %v265
  %v270 = vmul.f32 %v269, %v43
  %v271 = vmul.f32 %v254, %v270
  %v272 = vsub.f32 %v44, %v271
  %274 = vset.pattern.permute.xlu0 0
  %275 = vperm.xlu0 %274, %v270
  %v276 = vpop.permute.xlu0 %275
  %v278 = vmul.f32 %v197, %v276
  %v279 = vmul.f32 %v237, %v276
  %281 = vset.pattern.permute.xlu0 0
  %282 = vperm.xlu0 %281, %v272
  %v283 = vpop.permute.xlu0 %282
  %v285 = vadd.f32 %v278, %v283
  %v286 = vadd.f32 %v279, %v283
  %v287 = vmax.f32 %v285, 0.0
  %v288 = vmax.f32 %v286, 0.0
  %v289 = vmul.f32 %v287, %v240
  %v290 = vmul.f32 %v288, %v241
  %291 = vrot.lane.b32.xlu0 %v289, 11
  %v292 = vpop.permute.xlu0 %291
  %293 = vrot.lane.b32.xlu0 %v290, 11
  %v294 = vpop.permute.xlu0 %293
  %v295 = vsel %vm55, %v292, %v294
  %v296 = vsel %vm55, %v294, %v292
  %297 = vrot.lane.b32.xlu0 %v289, 10
  %v298 = vpop.permute.xlu0 %297
  %299 = vrot.lane.b32.xlu0 %v290, 10
  %v300 = vpop.permute.xlu0 %299
  %v301 = vsel %vm68, %v298, %v300
  %v302 = vsel %vm68, %v300, %v298
  %303 = vrot.lane.b32.xlu0 %v289, 9
  %v304 = vpop.permute.xlu0 %303
  %305 = vrot.lane.b32.xlu0 %v290, 9
  %v306 = vpop.permute.xlu0 %305
  %v307 = vsel %vm81, %v304, %v306
  %v308 = vsel %vm81, %v306, %v304
  %309 = vrot.lane.b32.xlu0 %v289, 1
  %v310 = vpop.permute.xlu0 %309
  %311 = vrot.lane.b32.xlu0 %v290, 1
  %v312 = vpop.permute.xlu0 %311
  %v313 = vsel %vm94, %v310, %v312
  %v314 = vsel %vm94, %v312, %v310
  %315 = vrot.lane.b32.xlu0 %v289, 127
  %v316 = vpop.permute.xlu0 %315
  %317 = vrot.lane.b32.xlu0 %v290, 127
  %v318 = vpop.permute.xlu0 %317
  %v319 = vsel %vm107, %v316, %v318
  %v320 = vsel %vm107, %v318, %v316
  %321 = vrot.lane.b32.xlu0 %v289, 119
  %v322 = vpop.permute.xlu0 %321
  %323 = vrot.lane.b32.xlu0 %v290, 119
  %v324 = vpop.permute.xlu0 %323
  %v325 = vsel %vm120, %v322, %v324
  %v326 = vsel %vm120, %v324, %v322
  %327 = vrot.lane.b32.xlu0 %v289, 118
  %v328 = vpop.permute.xlu0 %327
  %329 = vrot.lane.b32.xlu0 %v290, 118
  %v330 = vpop.permute.xlu0 %329
  %v331 = vsel %vm133, %v328, %v330
  %v332 = vsel %vm133, %v330, %v328
  %333 = vrot.lane.b32.xlu0 %v289, 117
  %v334 = vpop.permute.xlu0 %333
  %335 = vrot.lane.b32.xlu0 %v290, 117
  %v336 = vpop.permute.xlu0 %335
  %v337 = vsel %vm146, %v334, %v336
  %v338 = vsel %vm146, %v336, %v334
  %vm339 = vcmask 588800
  %v341 = vsel %vm339, %v45, 0
  %343 = vmatpush.msra.mxu0 0.0
  %344 = vmatpush.msra.mxu0 0.0
  %345 = vmatpush.msra.mxu0 0.0
  %346 = vmatpush.msra.mxu0 0.0
  %347 = vmatpush.msra.mxu0 0.0
  %348 = vmatpush.msra.mxu0 0.0
  %349 = vmatpush.msra.mxu0 0.0
  %350 = vmatpush.msra.mxu0 %v337
  %351 = vmatpush.msra.mxu0 %v331
  %352 = vmatpush.msra.mxu0 %v325
  %353 = vmatpush.msra.mxu0 %v319
  %354 = vmatpush.msra.mxu0 %v289
  %355 = vmatpush.msra.mxu0 %v314
  %356 = vmatpush.msra.mxu0 %v308
  %357 = vmatpush.msra.mxu0 %v302
  %358 = vmatpush.msra.mxu0 %v296
  %359 = vmatmul.f32.gmra.mxu0 %v341
  %v360 = vpop.f32.mrf.mxu0
  %v361 = vadd.f32 0.0, %v360
  %362 = vdwg.mxu0
  %363 = vmatpush.msra.mxu0 0.0
  %364 = vmatpush.msra.mxu0 0.0
  %365 = vmatpush.msra.mxu0 0.0
  %366 = vmatpush.msra.mxu0 0.0
  %367 = vmatpush.msra.mxu0 0.0
  %368 = vmatpush.msra.mxu0 0.0
  %369 = vmatpush.msra.mxu0 0.0
  %370 = vmatpush.msra.mxu0 %v338
  %371 = vmatpush.msra.mxu0 %v332
  %372 = vmatpush.msra.mxu0 %v326
  %373 = vmatpush.msra.mxu0 %v320
  %374 = vmatpush.msra.mxu0 %v290
  %375 = vmatpush.msra.mxu0 %v313
  %376 = vmatpush.msra.mxu0 %v307
  %377 = vmatpush.msra.mxu0 %v301
  %378 = vmatpush.msra.mxu0 %v295
  %379 = vmatmul.f32.gmra.mxu0 %v341
  %v380 = vpop.f32.mrf.mxu0
  %v381 = vadd.f32 0.0, %v380
  %382 = vdwg.mxu0
  %v383 = vmul.f32 %v361, %v240
  %v384 = vmul.f32 %v381, %v241
  %v385 = vadd.f32 %v383, %v384
  %386 = vadd.xlane.f32.xlu0 %v385
  %v387 = vpop.xlane.xlu0 %386
  %v388 = vmul.f32 %v383, %v361
  %v389 = vmul.f32 %v384, %v381
  %v390 = vadd.f32 %v388, %v389
  %391 = vadd.xlane.f32.xlu0 %v390
  %v392 = vpop.xlane.xlu0 %391
  %v393 = vmul.f32 %v387, 0.0078125
  %v394 = vmul.f32 %v392, 0.0078125
  %v395 = vmul.f32 %v393, %v393
  %v396 = vsub.f32 %v394, %v395
  %v397 = vmax.f32 %v396, 0.0
  %v398 = vadd.f32 %v397, 1e-05
  %v399 = vrsqrt.pop %v398
  %v400 = vmul.f32 %v399, %v398
  %v401 = vmul.f32 %v400, %v399
  %v402 = vmul.f32 0.5, %v401
  %v403 = vsub.f32 1.5, %v402
  %v404 = vmul.f32 %v399, %v403
  %vm405 = vweird.f32 %v398
  %vm406 = vweird.f32 %v399
  %vm407 = vmor %vm405, %vm406
  %v408 = vsel %vm407, %v399, %v404
  %v409 = vmul.f32 %v408, %v46
  %v410 = vmul.f32 %v393, %v409
  %v411 = vsub.f32 %v47, %v410
  %413 = vset.pattern.permute.xlu0 0
  %414 = vperm.xlu0 %413, %v409
  %v415 = vpop.permute.xlu0 %414
  %v417 = vmul.f32 %v361, %v415
  %v418 = vmul.f32 %v381, %v415
  %420 = vset.pattern.permute.xlu0 0
  %421 = vperm.xlu0 %420, %v411
  %v422 = vpop.permute.xlu0 %421
  %v424 = vadd.f32 %v417, %v422
  %v425 = vadd.f32 %v418, %v422
  %v426 = vmax.f32 %v424, 0.0
  %v427 = vmax.f32 %v425, 0.0
  %v428 = vmul.f32 %v426, %v240
  %v429 = vmul.f32 %v427, %v241
  %v430 = vld [vmem:[%s9] sm:$0xff]
  %v431 = vld [vmem:[%s9 + $0x8] sm:$0xff]
  %v432 = vld [vmem:[%s9 + $0x10] sm:$0xff]
  %v433 = vld [vmem:[%s9 + $0x18] sm:$0xff]
  %vm434 = vcmask 64512
  %v436 = vsel %vm434, %v430, 0
  %v439 = vsel %vm434, %v431, 0
  %v442 = vsel %vm434, %v432, 0
  %v445 = vsel %vm434, %v433, 0
  %447 = vmatpush.msra.mxu0 0.0
  %448 = vmatpush.msra.mxu0 0.0
  %449 = vmatpush.msra.mxu0 0.0
  %450 = vmatpush.msra.mxu0 0.0
  %451 = vmatpush.msra.mxu0 0.0
  %452 = vmatpush.msra.mxu0 0.0
  %453 = vmatpush.msra.mxu0 0.0
  %454 = vmatpush.msra.mxu0 0.0
  %455 = vmatpush.msra.mxu0 0.0
  %456 = vmatpush.msra.mxu0 0.0
  %457 = vmatpush.msra.mxu0 0.0
  %458 = vmatpush.msra.mxu0 0.0
  %459 = vmatpush.msra.mxu0 0.0
  %460 = vmatpush.msra.mxu0 0.0
  %461 = vmatpush.msra.mxu0 0.0
  %462 = vmatpush.msra.mxu0 %v428
  %463 = vmatmul.f32.gmra.mxu0 %v436
  %v464 = vpop.f32.mrf.mxu0
  %v465 = vadd.f32 0.0, %v464
  %466 = vmatmul.f32.gmra.mxu0 %v439
  %v467 = vpop.f32.mrf.mxu0
  %v468 = vadd.f32 0.0, %v467
  %469 = vmatmul.f32.gmra.mxu0 %v442
  %v470 = vpop.f32.mrf.mxu0
  %v471 = vadd.f32 0.0, %v470
  %472 = vmatmul.f32.gmra.mxu0 %v445
  %v473 = vpop.f32.mrf.mxu0
  %v474 = vadd.f32 0.0, %v473
  %475 = vdwg.mxu0
  %476 = vmatpush.msra.mxu0 0.0
  %477 = vmatpush.msra.mxu0 0.0
  %478 = vmatpush.msra.mxu0 0.0
  %479 = vmatpush.msra.mxu0 0.0
  %480 = vmatpush.msra.mxu0 0.0
  %481 = vmatpush.msra.mxu0 0.0
  %482 = vmatpush.msra.mxu0 0.0
  %483 = vmatpush.msra.mxu0 0.0
  %484 = vmatpush.msra.mxu0 0.0
  %485 = vmatpush.msra.mxu0 0.0
  %486 = vmatpush.msra.mxu0 0.0
  %487 = vmatpush.msra.mxu0 0.0
  %488 = vmatpush.msra.mxu0 0.0
  %489 = vmatpush.msra.mxu0 0.0
  %490 = vmatpush.msra.mxu0 0.0
  %491 = vmatpush.msra.mxu0 %v429
  %492 = vmatmul.f32.gmra.mxu0 %v436
  %v493 = vpop.f32.mrf.mxu0
  %v494 = vadd.f32 0.0, %v493
  %495 = vmatmul.f32.gmra.mxu0 %v439
  %v496 = vpop.f32.mrf.mxu0
  %v497 = vadd.f32 0.0, %v496
  %498 = vmatmul.f32.gmra.mxu0 %v442
  %v499 = vpop.f32.mrf.mxu0
  %v500 = vadd.f32 0.0, %v499
  %501 = vmatmul.f32.gmra.mxu0 %v445
  %v502 = vpop.f32.mrf.mxu0
  %v503 = vadd.f32 0.0, %v502
  %504 = vdwg.mxu0
  %v505 = vpack.c.bf16 %v494, %v465
  %v506 = vpack.c.bf16 %v497, %v468
  %v507 = vpack.c.bf16 %v500, %v471
  %v508 = vpack.c.bf16 %v503, %v474
  %509 = vst [vmem:[%s10] sm:$0xff] %v505
  %510 = vst [vmem:[%s10 + $0x8] sm:$0xff] %v506
  %511 = vst [vmem:[%s10 + $0x10] sm:$0xff] %v507
  %512 = vst [vmem:[%s10 + $0x18] sm:$0xff] %v508
  // Predicated region
  $region42: #{unet_forward.8} parent=0 // pred_check
    _
  $region43: #{unet_forward.8} parent=0 // pred_check_branch
    %514 = sbr.rel (0) target = $region45
  $region44: #{unet_forward.8} parent=0 // pred_region
    _
  $region45: #{unet_forward.8} parent=0 // pred_fallthru
    _
  // Predicated region
  $region46: #{unet_forward.8} parent=0 // pred_check
    _
  $region47: #{unet_forward.8} parent=0 // pred_check_branch
    %516 = sbr.rel (0) target = $region49
  $region48: #{unet_forward.8} parent=0 // pred_region
    _
  $region49: #{unet_forward.8} parent=0 // pred_fallthru
    _

// kernel: unet_forward.9
$region0: #{unet_forward.9}
  #allocation0 [shape = 'u32[]', space=smem, size = 0x4, offset = 0x4, fixed_abs, tag = 'smem constant byte address 0x4 - core index']
  #allocation1 [shape = 'u32[72,128]{1,0:T(1,128)}', space=vmem, size = 0x9000, scoped, tag = 'internal scratch']
  #allocation2 [shape = 'f32[1,1]{1,0:T(1,128)S(1)}', space=vmem, size = 0x200, scoped, tag = 'scoped memory for unet_forward.9']
  %s0 = inlined_call_operand.vmem [shape: bf16[8,768], index: 0, kind: input, shape index: {}]
  %s1 = inlined_call_operand.vmem [shape: bf16[8,768], index: 1, kind: input, shape index: {}]
  %s2 = inlined_call_operand.vmem [shape: f32[8,144], index: 2, kind: input, shape index: {}]
  %s3 = inlined_call_operand.vmem [shape: f32[8,1], index: 3, kind: input, shape index: {}]
  %s4 = inlined_call_operand.vmem [shape: f32[8,1], index: 4, kind: input, shape index: {}]
  %s5 = inlined_call_operand.vmem [shape: f32[8,72], index: 5, kind: input, shape index: {}]
  %s6 = inlined_call_operand.vmem [shape: f32[8,1], index: 6, kind: input, shape index: {}]
  %s7 = inlined_call_operand.vmem [shape: f32[8,1], index: 7, kind: input, shape index: {}]
  %s8 = inlined_call_operand.vmem [shape: f32[1,768], index: 8, kind: input, shape index: {}]
  %s9 = inlined_call_operand.vmem [shape: f32[1,8], index: 9, kind: input, shape index: {}]
  %s10 = inlined_call_operand.<no memory space> [shape: f32[1,1], index: 10, kind: input, shape index: {}]
  %s11 = inlined_call_operand.vmem [shape: f32[1,768], index: 11, kind: output, shape index: {}]
  %s12 = sld [smem:[#allocation0]]
  $region54: #{unet_forward.9} parent=0
    _
  %s14 = ssub.s32 1, %s12
  %s15 = scalar_select 0, %s14, %s12
  %v16 = vstv %s10
  %17 = vst [vmem:[#allocation2] sm:$0x1] %v16
  // Predicated region
  $region2: #{unet_forward.9} parent=0 // pred_check
    _
  $region3: #{unet_forward.9} parent=0 // pred_check_branch
    %19 = sbr.rel (0) target = $region5
  $region4: #{unet_forward.9} parent=0 // pred_region
    _
  $region5: #{unet_forward.9} parent=0 // pred_fallthru
    _
  // Predicated region
  $region6: #{unet_forward.9} parent=0 // pred_check
    _
  $region7: #{unet_forward.9} parent=0 // pred_check_branch
    %21 = sbr.rel (0) target = $region9
  $region8: #{unet_forward.9} parent=0 // pred_region
    _
  $region9: #{unet_forward.9} parent=0 // pred_fallthru
    _
  // Predicated region
  $region10: #{unet_forward.9} parent=0 // pred_check
    _
  $region11: #{unet_forward.9} parent=0 // pred_check_branch
    %23 = sbr.rel (0) target = $region13
  $region12: #{unet_forward.9} parent=0 // pred_region
    _
  $region13: #{unet_forward.9} parent=0 // pred_fallthru
    _
  // Predicated region
  $region14: #{unet_forward.9} parent=0 // pred_check
    _
  $region15: #{unet_forward.9} parent=0 // pred_check_branch
    %25 = sbr.rel (0) target = $region17
  $region16: #{unet_forward.9} parent=0 // pred_region
    _
  $region17: #{unet_forward.9} parent=0 // pred_fallthru
    _
  // Predicated region
  $region18: #{unet_forward.9} parent=0 // pred_check
    _
  $region19: #{unet_forward.9} parent=0 // pred_check_branch
    %27 = sbr.rel (0) target = $region21
  $region20: #{unet_forward.9} parent=0 // pred_region
    _
  $region21: #{unet_forward.9} parent=0 // pred_fallthru
    _
  // Predicated region
  $region22: #{unet_forward.9} parent=0 // pred_check
    _
  $region23: #{unet_forward.9} parent=0 // pred_check_branch
    %29 = sbr.rel (0) target = $region25
  $region24: #{unet_forward.9} parent=0 // pred_region
    _
  $region25: #{unet_forward.9} parent=0 // pred_fallthru
    _
  // Predicated region
  $region26: #{unet_forward.9} parent=0 // pred_check
    _
  $region27: #{unet_forward.9} parent=0 // pred_check_branch
    %31 = sbr.rel (0) target = $region29
  $region28: #{unet_forward.9} parent=0 // pred_region
    _
  $region29: #{unet_forward.9} parent=0 // pred_fallthru
    _
  // Predicated region
  $region30: #{unet_forward.9} parent=0 // pred_check
    _
  $region31: #{unet_forward.9} parent=0 // pred_check_branch
    %33 = sbr.rel (0) target = $region33
  $region32: #{unet_forward.9} parent=0 // pred_region
    _
  $region33: #{unet_forward.9} parent=0 // pred_fallthru
    _
  // Predicated region
  $region34: #{unet_forward.9} parent=0 // pred_check
    _
  $region35: #{unet_forward.9} parent=0 // pred_check_branch
    %35 = sbr.rel (0) target = $region37
  $region36: #{unet_forward.9} parent=0 // pred_region
    _
  $region37: #{unet_forward.9} parent=0 // pred_fallthru
    _
  // Predicated region
  $region38: #{unet_forward.9} parent=0 // pred_check
    _
  $region39: #{unet_forward.9} parent=0 // pred_check_branch
    %37 = sbr.rel (0) target = $region41
  $region40: #{unet_forward.9} parent=0 // pred_region
    _
  $region41: #{unet_forward.9} parent=0 // pred_fallthru
    _
  // Predicated region
  $region42: #{unet_forward.9} parent=0 // pred_check
    _
  $region43: #{unet_forward.9} parent=0 // pred_check_branch
    %39 = sbr.rel (0) target = $region45
  $region44: #{unet_forward.9} parent=0 // pred_region
    _
  $region45: #{unet_forward.9} parent=0 // pred_fallthru
    _
  %v40 = vld [vmem:[%s0] sm:$0xff]
  %v41 = vld [vmem:[%s0 + $0x8] sm:$0xff]
  %v42 = vld [vmem:[%s0 + $0x10] sm:$0xff]
  %v43 = vunpack.c.l.bf16 %v40
  %v44 = vunpack.c.h.bf16 %v40
  %v45 = vunpack.c.l.bf16 %v41
  %v46 = vunpack.c.h.bf16 %v41
  %v47 = vunpack.c.l.bf16 %v42
  %v48 = vunpack.c.h.bf16 %v42
  %v49 = vld [vmem:[%s1] sm:$0xff]
  %v50 = vld [vmem:[%s1 + $0x8] sm:$0xff]
  %v51 = vld [vmem:[%s1 + $0x10] sm:$0xff]
  %v52 = vunpack.c.l.bf16 %v49
  %v53 = vunpack.c.h.bf16 %v49
  %v54 = vunpack.c.l.bf16 %v50
  %v55 = vunpack.c.h.bf16 %v50
  %v56 = vunpack.c.l.bf16 %v51
  %v57 = vunpack.c.h.bf16 %v51
  %v58 = vld [vmem:[%s2] sm:$0xff]
  %v59 = vld [vmem:[%s2 + $0x8] sm:$0xff]
  %v60 = vld [vmem:[%s3] sm:$0xff]
  %v61 = vld [vmem:[%s4] sm:$0xff]
  %v62 = vld [vmem:[%s5] sm:$0xff]
  %v63 = vld [vmem:[%s6] sm:$0xff]
  %v64 = vld [vmem:[%s7] sm:$0xff]
  %v65 = vld [vmem:[%s8] sm:$0x3f]
  %66 = vrot.lane.b32.xlu0 %v43, 19
  %v67 = vpop.permute.xlu0 %66
  %68 = vrot.lane.b32.xlu0 %v44, 19
  %v69 = vpop.permute.xlu0 %68
  %70 = vrot.lane.b32.xlu0 %v45, 19
  %v71 = vpop.permute.xlu0 %70
  %72 = vrot.lane.b32.xlu0 %v46, 19
  %v73 = vpop.permute.xlu0 %72
  %74 = vrot.lane.b32.xlu0 %v47, 19
  %v75 = vpop.permute.xlu0 %74
  %76 = vrot.lane.b32.xlu0 %v48, 19
  %v77 = vpop.permute.xlu0 %76
  %v78 = vlaneseq
  %v79 = vand.u32 %v78, 127
  %vm80 = vcmp.lt.s32.totalorder %v79, 19
  %v81 = vsel %vm80, %v75, %v77
  %v82 = vsel %vm80, %v73, %v75
  %v83 = vsel %vm80, %v71, %v73
  %v84 = vsel %vm80, %v69, %v71
  %v85 = vsel %vm80, %v67, %v69
  %v86 = vsel %vm80, %v77, %v67
  %87 = vrot.lane.b32.xlu0 %v52, 19
  %v88 = vpop.permute.xlu0 %87
  %89 = vrot.lane.b32.xlu0 %v53, 19
  %v90 = vpop.permute.xlu0 %89
  %91 = vrot.lane.b32.xlu0 %v54, 19
  %v92 = vpop.permute.xlu0 %91
  %93 = vrot.lane.b32.xlu0 %v55, 19
  %v94 = vpop.permute.xlu0 %93
  %95 = vrot.lane.b32.xlu0 %v56, 19
  %v96 = vpop.permute.xlu0 %95
  %97 = vrot.lane.b32.xlu0 %v57, 19
  %v98 = vpop.permute.xlu0 %97
  %v99 = vsel %vm80, %v96, %v98
  %v100 = vsel %vm80, %v94, %v96
  %v101 = vsel %vm80, %v92, %v94
  %v102 = vsel %vm80, %v90, %v92
  %v103 = vsel %vm80, %v88, %v90
  %v104 = vsel %vm80, %v98, %v88
  %105 = vrot.lane.b32.xlu0 %v43, 18
  %v106 = vpop.permute.xlu0 %105
  %107 = vrot.lane.b32.xlu0 %v44, 18
  %v108 = vpop.permute.xlu0 %107
  %109 = vrot.lane.b32.xlu0 %v45, 18
  %v110 = vpop.permute.xlu0 %109
  %111 = vrot.lane.b32.xlu0 %v46, 18
  %v112 = vpop.permute.xlu0 %111
  %113 = vrot.lane.b32.xlu0 %v47, 18
  %v114 = vpop.permute.xlu0 %113
  %115 = vrot.lane.b32.xlu0 %v48, 18
  %v116 = vpop.permute.xlu0 %115
  %vm117 = vcmp.lt.s32.totalorder %v79, 18
  %v118 = vsel %vm117, %v114, %v116
  %v119 = vsel %vm117, %v112, %v114
  %v120 = vsel %vm117, %v110, %v112
  %v121 = vsel %vm117, %v108, %v110
  %v122 = vsel %vm117, %v106, %v108
  %v123 = vsel %vm117, %v116, %v106
  %124 = vrot.lane.b32.xlu0 %v52, 18
  %v125 = vpop.permute.xlu0 %124
  %126 = vrot.lane.b32.xlu0 %v53, 18
  %v127 = vpop.permute.xlu0 %126
  %128 = vrot.lane.b32.xlu0 %v54, 18
  %v129 = vpop.permute.xlu0 %128
  %130 = vrot.lane.b32.xlu0 %v55, 18
  %v131 = vpop.permute.xlu0 %130
  %132 = vrot.lane.b32.xlu0 %v56, 18
  %v133 = vpop.permute.xlu0 %132
  %134 = vrot.lane.b32.xlu0 %v57, 18
  %v135 = vpop.permute.xlu0 %134
  %v136 = vsel %vm117, %v133, %v135
  %v137 = vsel %vm117, %v131, %v133
  %v138 = vsel %vm117, %v129, %v131
  %v139 = vsel %vm117, %v127, %v129
  %v140 = vsel %vm117, %v125, %v127
  %v141 = vsel %vm117, %v135, %v125
  %142 = vrot.lane.b32.xlu0 %v43, 17
  %v143 = vpop.permute.xlu0 %142
  %144 = vrot.lane.b32.xlu0 %v44, 17
  %v145 = vpop.permute.xlu0 %144
  %146 = vrot.lane.b32.xlu0 %v45, 17
  %v147 = vpop.permute.xlu0 %146
  %148 = vrot.lane.b32.xlu0 %v46, 17
  %v149 = vpop.permute.xlu0 %148
  %150 = vrot.lane.b32.xlu0 %v47, 17
  %v151 = vpop.permute.xlu0 %150
  %152 = vrot.lane.b32.xlu0 %v48, 17
  %v153 = vpop.permute.xlu0 %152
  %vm154 = vcmp.lt.s32.totalorder %v79, 17
  %v155 = vsel %vm154, %v151, %v153
  %v156 = vsel %vm154, %v149, %v151
  %v157 = vsel %vm154, %v147, %v149
  %v158 = vsel %vm154, %v145, %v147
  %v159 = vsel %vm154, %v143, %v145
  %v160 = vsel %vm154, %v153, %v143
  %161 = vrot.lane.b32.xlu0 %v52, 17
  %v162 = vpop.permute.xlu0 %161
  %163 = vrot.lane.b32.xlu0 %v53, 17
  %v164 = vpop.permute.xlu0 %163
  %165 = vrot.lane.b32.xlu0 %v54, 17
  %v166 = vpop.permute.xlu0 %165
  %167 = vrot.lane.b32.xlu0 %v55, 17
  %v168 = vpop.permute.xlu0 %167
  %169 = vrot.lane.b32.xlu0 %v56, 17
  %v170 = vpop.permute.xlu0 %169
  %171 = vrot.lane.b32.xlu0 %v57, 17
  %v172 = vpop.permute.xlu0 %171
  %v173 = vsel %vm154, %v170, %v172
  %v174 = vsel %vm154, %v168, %v170
  %v175 = vsel %vm154, %v166, %v168
  %v176 = vsel %vm154, %v164, %v166
  %v177 = vsel %vm154, %v162, %v164
  %v178 = vsel %vm154, %v172, %v162
  %179 = vrot.lane.b32.xlu0 %v43, 1
  %v180 = vpop.permute.xlu0 %179
  %181 = vrot.lane.b32.xlu0 %v44, 1
  %v182 = vpop.permute.xlu0 %181
  %183 = vrot.lane.b32.xlu0 %v45, 1
  %v184 = vpop.permute.xlu0 %183
  %185 = vrot.lane.b32.xlu0 %v46, 1
  %v186 = vpop.permute.xlu0 %185
  %187 = vrot.lane.b32.xlu0 %v47, 1
  %v188 = vpop.permute.xlu0 %187
  %189 = vrot.lane.b32.xlu0 %v48, 1
  %v190 = vpop.permute.xlu0 %189
  %vm191 = vcmp.lt.s32.totalorder %v79, 1
  %v192 = vsel %vm191, %v188, %v190
  %v193 = vsel %vm191, %v186, %v188
  %v194 = vsel %vm191, %v184, %v186
  %v195 = vsel %vm191, %v182, %v184
  %v196 = vsel %vm191, %v180, %v182
  %v197 = vsel %vm191, %v190, %v180
  %198 = vrot.lane.b32.xlu0 %v52, 1
  %v199 = vpop.permute.xlu0 %198
  %200 = vrot.lane.b32.xlu0 %v53, 1
  %v201 = vpop.permute.xlu0 %200
  %202 = vrot.lane.b32.xlu0 %v54, 1
  %v203 = vpop.permute.xlu0 %202
  %204 = vrot.lane.b32.xlu0 %v55, 1
  %v205 = vpop.permute.xlu0 %204
  %206 = vrot.lane.b32.xlu0 %v56, 1
  %v207 = vpop.permute.xlu0 %206
  %208 = vrot.lane.b32.xlu0 %v57, 1
  %v209 = vpop.permute.xlu0 %208
  %v210 = vsel %vm191, %v207, %v209
  %v211 = vsel %vm191, %v205, %v207
  %v212 = vsel %vm191, %v203, %v205
  %v213 = vsel %vm191, %v201, %v203
  %v214 = vsel %vm191, %v199, %v201
  %v215 = vsel %vm191, %v209, %v199
  %216 = vrot.lane.b32.xlu0 %v43, 127
  %v217 = vpop.permute.xlu0 %216
  %218 = vrot.lane.b32.xlu0 %v44, 127
  %v219 = vpop.permute.xlu0 %218
  %220 = vrot.lane.b32.xlu0 %v45, 127
  %v221 = vpop.permute.xlu0 %220
  %222 = vrot.lane.b32.xlu0 %v46, 127
  %v223 = vpop.permute.xlu0 %222
  %224 = vrot.lane.b32.xlu0 %v47, 127
  %v225 = vpop.permute.xlu0 %224
  %226 = vrot.lane.b32.xlu0 %v48, 127
  %v227 = vpop.permute.xlu0 %226
  %vm228 = vcmp.lt.s32.totalorder %v79, 127
  %v229 = vsel %vm228, %v225, %v227
  %v230 = vsel %vm228, %v223, %v225
  %v231 = vsel %vm228, %v221, %v223
  %v232 = vsel %vm228, %v219, %v221
  %v233 = vsel %vm228, %v217, %v219
  %v234 = vsel %vm228, %v227, %v217
  %235 = vrot.lane.b32.xlu0 %v52, 127
  %v236 = vpop.permute.xlu0 %235
  %237 = vrot.lane.b32.xlu0 %v53, 127
  %v238 = vpop.permute.xlu0 %237
  %239 = vrot.lane.b32.xlu0 %v54, 127
  %v240 = vpop.permute.xlu0 %239
  %241 = vrot.lane.b32.xlu0 %v55, 127
  %v242 = vpop.permute.xlu0 %241
  %243 = vrot.lane.b32.xlu0 %v56, 127
  %v244 = vpop.permute.xlu0 %243
  %245 = vrot.lane.b32.xlu0 %v57, 127
  %v246 = vpop.permute.xlu0 %245
  %v247 = vsel %vm228, %v244, %v246
  %v248 = vsel %vm228, %v242, %v244
  %v249 = vsel %vm228, %v240, %v242
  %v250 = vsel %vm228, %v238, %v240
  %v251 = vsel %vm228, %v236, %v238
  %v252 = vsel %vm228, %v246, %v236
  %253 = vrot.lane.b32.xlu0 %v43, 111
  %v254 = vpop.permute.xlu0 %253
  %255 = vrot.lane.b32.xlu0 %v44, 111
  %v256 = vpop.permute.xlu0 %255
  %257 = vrot.lane.b32.xlu0 %v45, 111
  %v258 = vpop.permute.xlu0 %257
  %259 = vrot.lane.b32.xlu0 %v46, 111
  %v260 = vpop.permute.xlu0 %259
  %261 = vrot.lane.b32.xlu0 %v47, 111
  %v262 = vpop.permute.xlu0 %261
  %263 = vrot.lane.b32.xlu0 %v48, 111
  %v264 = vpop.permute.xlu0 %263
  %vm265 = vcmp.lt.s32.totalorder %v79, 111
  %v266 = vsel %vm265, %v262, %v264
  %v267 = vsel %vm265, %v260, %v262
  %v268 = vsel %vm265, %v258, %v260
  %v269 = vsel %vm265, %v256, %v258
  %v270 = vsel %vm265, %v254, %v256
  %v271 = vsel %vm265, %v264, %v254
  %272 = vrot.lane.b32.xlu0 %v52, 111
  %v273 = vpop.permute.xlu0 %272
  %274 = vrot.lane.b32.xlu0 %v53, 111
  %v275 = vpop.permute.xlu0 %274
  %276 = vrot.lane.b32.xlu0 %v54, 111
  %v277 = vpop.permute.xlu0 %276
  %278 = vrot.lane.b32.xlu0 %v55, 111
  %v279 = vpop.permute.xlu0 %278
  %280 = vrot.lane.b32.xlu0 %v56, 111
  %v281 = vpop.permute.xlu0 %280
  %282 = vrot.lane.b32.xlu0 %v57, 111
  %v283 = vpop.permute.xlu0 %282
  %v284 = vsel %vm265, %v281, %v283
  %v285 = vsel %vm265, %v279, %v281
  %v286 = vsel %vm265, %v277, %v279
  %v287 = vsel %vm265, %v275, %v277
  %v288 = vsel %vm265, %v273, %v275
  %v289 = vsel %vm265, %v283, %v273
  %290 = vrot.lane.b32.xlu0 %v43, 110
  %v291 = vpop.permute.xlu0 %290
  %292 = vrot.lane.b32.xlu0 %v44, 110
  %v293 = vpop.permute.xlu0 %292
  %294 = vrot.lane.b32.xlu0 %v45, 110
  %v295 = vpop.permute.xlu0 %294
  %296 = vrot.lane.b32.xlu0 %v46, 110
  %v297 = vpop.permute.xlu0 %296
  %298 = vrot.lane.b32.xlu0 %v47, 110
  %v299 = vpop.permute.xlu0 %298
  %300 = vrot.lane.b32.xlu0 %v48, 110
  %v301 = vpop.permute.xlu0 %300
  %vm302 = vcmp.lt.s32.totalorder %v79, 110
  %v303 = vsel %vm302, %v299, %v301
  %v304 = vsel %vm302, %v297, %v299
  %v305 = vsel %vm302, %v295, %v297
  %v306 = vsel %vm302, %v293, %v295
  %v307 = vsel %vm302, %v291, %v293
  %v308 = vsel %vm302, %v301, %v291
  %309 = vrot.lane.b32.xlu0 %v52, 110
  %v310 = vpop.permute.xlu0 %309
  %311 = vrot.lane.b32.xlu0 %v53, 110
  %v312 = vpop.permute.xlu0 %311
  %313 = vrot.lane.b32.xlu0 %v54, 110
  %v314 = vpop.permute.xlu0 %313
  %315 = vrot.lane.b32.xlu0 %v55, 110
  %v316 = vpop.permute.xlu0 %315
  %317 = vrot.lane.b32.xlu0 %v56, 110
  %v318 = vpop.permute.xlu0 %317
  %319 = vrot.lane.b32.xlu0 %v57, 110
  %v320 = vpop.permute.xlu0 %319
  %v321 = vsel %vm302, %v318, %v320
  %v322 = vsel %vm302, %v316, %v318
  %v323 = vsel %vm302, %v314, %v316
  %v324 = vsel %vm302, %v312, %v314
  %v325 = vsel %vm302, %v310, %v312
  %v326 = vsel %vm302, %v320, %v310
  %327 = vrot.lane.b32.xlu0 %v43, 109
  %v328 = vpop.permute.xlu0 %327
  %329 = vrot.lane.b32.xlu0 %v44, 109
  %v330 = vpop.permute.xlu0 %329
  %331 = vrot.lane.b32.xlu0 %v45, 109
  %v332 = vpop.permute.xlu0 %331
  %333 = vrot.lane.b32.xlu0 %v46, 109
  %v334 = vpop.permute.xlu0 %333
  %335 = vrot.lane.b32.xlu0 %v47, 109
  %v336 = vpop.permute.xlu0 %335
  %337 = vrot.lane.b32.xlu0 %v48, 109
  %v338 = vpop.permute.xlu0 %337
  %vm339 = vcmp.lt.s32.totalorder %v79, 109
  %v340 = vsel %vm339, %v336, %v338
  %v341 = vsel %vm339, %v334, %v336
  %v342 = vsel %vm339, %v332, %v334
  %v343 = vsel %vm339, %v330, %v332
  %v344 = vsel %vm339, %v328, %v330
  %v345 = vsel %vm339, %v338, %v328
  %346 = vrot.lane.b32.xlu0 %v52, 109
  %v347 = vpop.permute.xlu0 %346
  %348 = vrot.lane.b32.xlu0 %v53, 109
  %v349 = vpop.permute.xlu0 %348
  %350 = vrot.lane.b32.xlu0 %v54, 109
  %v351 = vpop.permute.xlu0 %350
  %352 = vrot.lane.b32.xlu0 %v55, 109
  %v353 = vpop.permute.xlu0 %352
  %354 = vrot.lane.b32.xlu0 %v56, 109
  %v355 = vpop.permute.xlu0 %354
  %356 = vrot.lane.b32.xlu0 %v57, 109
  %v357 = vpop.permute.xlu0 %356
  %v358 = vsel %vm339, %v355, %v357
  %v359 = vsel %vm339, %v353, %v355
  %v360 = vsel %vm339, %v351, %v353
  %v361 = vsel %vm339, %v349, %v351
  %v362 = vsel %vm339, %v347, %v349
  %v363 = vsel %vm339, %v357, %v347
  %vm364 = vcmask 130048
  %v366 = vsel %vm364, %v59, 0
  %368 = vmatpush.msra.mxu0 %v325
  %369 = vmatpush.msra.mxu0 %v307
  %370 = vmatpush.msra.mxu0 %v288
  %371 = vmatpush.msra.mxu0 %v270
  %372 = vmatpush.msra.mxu0 %v251
  %373 = vmatpush.msra.mxu0 %v233
  %374 = vmatpush.msra.mxu0 %v52
  %375 = vmatpush.msra.mxu0 %v43
  %376 = vmatpush.msra.mxu0 %v215
  %377 = vmatpush.msra.mxu0 %v197
  %378 = vmatpush.msra.mxu0 %v178
  %379 = vmatpush.msra.mxu0 %v160
  %380 = vmatpush.msra.mxu0 %v141
  %381 = vmatpush.msra.mxu0 %v123
  %382 = vmatpush.msra.mxu0 %v104
  %383 = vmatpush.msra.mxu0 %v86
  %384 = vmatmul.f32.gmra.mxu0 %v58
  %v385 = vpop.f32.mrf.mxu0
  %v386 = vadd.f32 0.0, %v385
  %387 = vdwg.mxu0
  %388 = vmatpush.msra.mxu0 0.0
  %389 = vmatpush.msra.mxu0 0.0
  %390 = vmatpush.msra.mxu0 0.0
  %391 = vmatpush.msra.mxu0 0.0
  %392 = vmatpush.msra.mxu0 0.0
  %393 = vmatpush.msra.mxu0 0.0
  %394 = vmatpush.msra.mxu0 0.0
  %395 = vmatpush.msra.mxu0 0.0
  %396 = vmatpush.msra.mxu0 0.0
  %397 = vmatpush.msra.mxu0 0.0
  %398 = vmatpush.msra.mxu0 0.0
  %399 = vmatpush.msra.mxu0 0.0
  %400 = vmatpush.msra.mxu0 0.0
  %401 = vmatpush.msra.mxu0 0.0
  %402 = vmatpush.msra.mxu0 %v362
  %403 = vmatpush.msra.mxu0 %v344
  %404 = vmatmul.f32.gmra.mxu0 %v366
  %v405 = vpop.f32.mrf.mxu0
  %v406 = vadd.f32 %v386, %v405
  %407 = vdwg.mxu0
  %408 = vmatpush.msra.mxu0 %v324
  %409 = vmatpush.msra.mxu0 %v306
  %410 = vmatpush.msra.mxu0 %v287
  %411 = vmatpush.msra.mxu0 %v269
  %412 = vmatpush.msra.mxu0 %v250
  %413 = vmatpush.msra.mxu0 %v232
  %414 = vmatpush.msra.mxu0 %v53
  %415 = vmatpush.msra.mxu0 %v44
  %416 = vmatpush.msra.mxu0 %v214
  %417 = vmatpush.msra.mxu0 %v196
  %418 = vmatpush.msra.mxu0 %v177
  %419 = vmatpush.msra.mxu0 %v159
  %420 = vmatpush.msra.mxu0 %v140
  %421 = vmatpush.msra.mxu0 %v122
  %422 = vmatpush.msra.mxu0 %v103
  %423 = vmatpush.msra.mxu0 %v85
  %424 = vmatmul.f32.gmra.mxu0 %v58
  %v425 = vpop.f32.mrf.mxu0
  %v426 = vadd.f32 0.0, %v425
  %427 = vdwg.mxu0
  %428 = vmatpush.msra.mxu0 0.0
  %429 = vmatpush.msra.mxu0 0.0
  %430 = vmatpush.msra.mxu0 0.0
  %431 = vmatpush.msra.mxu0 0.0
  %432 = vmatpush.msra.mxu0 0.0
  %433 = vmatpush.msra.mxu0 0.0
  %434 = vmatpush.msra.mxu0 0.0
  %435 = vmatpush.msra.mxu0 0.0
  %436 = vmatpush.msra.mxu0 0.0
  %437 = vmatpush.msra.mxu0 0.0
  %438 = vmatpush.msra.mxu0 0.0
  %439 = vmatpush.msra.mxu0 0.0
  %440 = vmatpush.msra.mxu0 0.0
  %441 = vmatpush.msra.mxu0 0.0
  %442 = vmatpush.msra.mxu0 %v361
  %443 = vmatpush.msra.mxu0 %v343
  %444 = vmatmul.f32.gmra.mxu0 %v366
  %v445 = vpop.f32.mrf.mxu0
  %v446 = vadd.f32 %v426, %v445
  %447 = vdwg.mxu0
  %448 = vmatpush.msra.mxu0 %v323
  %449 = vmatpush.msra.mxu0 %v305
  %450 = vmatpush.msra.mxu0 %v286
  %451 = vmatpush.msra.mxu0 %v268
  %452 = vmatpush.msra.mxu0 %v249
  %453 = vmatpush.msra.mxu0 %v231
  %454 = vmatpush.msra.mxu0 %v54
  %455 = vmatpush.msra.mxu0 %v45
  %456 = vmatpush.msra.mxu0 %v213
  %457 = vmatpush.msra.mxu0 %v195
  %458 = vmatpush.msra.mxu0 %v176
  %459 = vmatpush.msra.mxu0 %v158
  %460 = vmatpush.msra.mxu0 %v139
  %461 = vmatpush.msra.mxu0 %v121
  %462 = vmatpush.msra.mxu0 %v102
  %463 = vmatpush.msra.mxu0 %v84
  %464 = vmatmul.f32.gmra.mxu0 %v58
  %v465 = vpop.f32.mrf.mxu0
  %v466 = vadd.f32 0.0, %v465
  %467 = vdwg.mxu0
  %468 = vmatpush.msra.mxu0 0.0
  %469 = vmatpush.msra.mxu0 0.0
  %470 = vmatpush.msra.mxu0 0.0
  %471 = vmatpush.msra.mxu0 0.0
  %472 = vmatpush.msra.mxu0 0.0
  %473 = vmatpush.msra.mxu0 0.0
  %474 = vmatpush.msra.mxu0 0.0
  %475 = vmatpush.msra.mxu0 0.0
  %476 = vmatpush.msra.mxu0 0.0
  %477 = vmatpush.msra.mxu0 0.0
  %478 = vmatpush.msra.mxu0 0.0
  %479 = vmatpush.msra.mxu0 0.0
  %480 = vmatpush.msra.mxu0 0.0
  %481 = vmatpush.msra.mxu0 0.0
  %482 = vmatpush.msra.mxu0 %v360
  %483 = vmatpush.msra.mxu0 %v342
  %484 = vmatmul.f32.gmra.mxu0 %v366
  %v485 = vpop.f32.mrf.mxu0
  %v486 = vadd.f32 %v466, %v485
  %487 = vdwg.mxu0
  %488 = vmatpush.msra.mxu0 %v322
  %489 = vmatpush.msra.mxu0 %v304
  %490 = vmatpush.msra.mxu0 %v285
  %491 = vmatpush.msra.mxu0 %v267
  %492 = vmatpush.msra.mxu0 %v248
  %493 = vmatpush.msra.mxu0 %v230
  %494 = vmatpush.msra.mxu0 %v55
  %495 = vmatpush.msra.mxu0 %v46
  %496 = vmatpush.msra.mxu0 %v212
  %497 = vmatpush.msra.mxu0 %v194
  %498 = vmatpush.msra.mxu0 %v175
  %499 = vmatpush.msra.mxu0 %v157
  %500 = vmatpush.msra.mxu0 %v138
  %501 = vmatpush.msra.mxu0 %v120
  %502 = vmatpush.msra.mxu0 %v101
  %503 = vmatpush.msra.mxu0 %v83
  %504 = vmatmul.f32.gmra.mxu0 %v58
  %v505 = vpop.f32.mrf.mxu0
  %v506 = vadd.f32 0.0, %v505
  %507 = vdwg.mxu0
  %508 = vmatpush.msra.mxu0 0.0
  %509 = vmatpush.msra.mxu0 0.0
  %510 = vmatpush.msra.mxu0 0.0
  %511 = vmatpush.msra.mxu0 0.0
  %512 = vmatpush.msra.mxu0 0.0
  %513 = vmatpush.msra.mxu0 0.0
  %514 = vmatpush.msra.mxu0 0.0
  %515 = vmatpush.msra.mxu0 0.0
  %516 = vmatpush.msra.mxu0 0.0
  %517 = vmatpush.msra.mxu0 0.0
  %518 = vmatpush.msra.mxu0 0.0
  %519 = vmatpush.msra.mxu0 0.0
  %520 = vmatpush.msra.mxu0 0.0
  %521 = vmatpush.msra.mxu0 0.0
  %522 = vmatpush.msra.mxu0 %v359
  %523 = vmatpush.msra.mxu0 %v341
  %524 = vmatmul.f32.gmra.mxu0 %v366
  %v525 = vpop.f32.mrf.mxu0
  %v526 = vadd.f32 %v506, %v525
  %527 = vdwg.mxu0
  %528 = vmatpush.msra.mxu0 %v321
  %529 = vmatpush.msra.mxu0 %v303
  %530 = vmatpush.msra.mxu0 %v284
  %531 = vmatpush.msra.mxu0 %v266
  %532 = vmatpush.msra.mxu0 %v247
  %533 = vmatpush.msra.mxu0 %v229
  %534 = vmatpush.msra.mxu0 %v56
  %535 = vmatpush.msra.mxu0 %v47
  %536 = vmatpush.msra.mxu0 %v211
  %537 = vmatpush.msra.mxu0 %v193
  %538 = vmatpush.msra.mxu0 %v174
  %539 = vmatpush.msra.mxu0 %v156
  %540 = vmatpush.msra.mxu0 %v137
  %541 = vmatpush.msra.mxu0 %v119
  %542 = vmatpush.msra.mxu0 %v100
  %543 = vmatpush.msra.mxu0 %v82
  %544 = vmatmul.f32.gmra.mxu0 %v58
  %v545 = vpop.f32.mrf.mxu0
  %v546 = vadd.f32 0.0, %v545
  %547 = vdwg.mxu0
  %548 = vmatpush.msra.mxu0 0.0
  %549 = vmatpush.msra.mxu0 0.0
  %550 = vmatpush.msra.mxu0 0.0
  %551 = vmatpush.msra.mxu0 0.0
  %552 = vmatpush.msra.mxu0 0.0
  %553 = vmatpush.msra.mxu0 0.0
  %554 = vmatpush.msra.mxu0 0.0
  %555 = vmatpush.msra.mxu0 0.0
  %556 = vmatpush.msra.mxu0 0.0
  %557 = vmatpush.msra.mxu0 0.0
  %558 = vmatpush.msra.mxu0 0.0
  %559 = vmatpush.msra.mxu0 0.0
  %560 = vmatpush.msra.mxu0 0.0
  %561 = vmatpush.msra.mxu0 0.0
  %562 = vmatpush.msra.mxu0 %v358
  %563 = vmatpush.msra.mxu0 %v340
  %564 = vmatmul.f32.gmra.mxu0 %v366
  %v565 = vpop.f32.mrf.mxu0
  %v566 = vadd.f32 %v546, %v565
  %567 = vdwg.mxu0
  %568 = vmatpush.msra.mxu0 %v326
  %569 = vmatpush.msra.mxu0 %v308
  %570 = vmatpush.msra.mxu0 %v289
  %571 = vmatpush.msra.mxu0 %v271
  %572 = vmatpush.msra.mxu0 %v252
  %573 = vmatpush.msra.mxu0 %v234
  %574 = vmatpush.msra.mxu0 %v57
  %575 = vmatpush.msra.mxu0 %v48
  %576 = vmatpush.msra.mxu0 %v210
  %577 = vmatpush.msra.mxu0 %v192
  %578 = vmatpush.msra.mxu0 %v173
  %579 = vmatpush.msra.mxu0 %v155
  %580 = vmatpush.msra.mxu0 %v136
  %581 = vmatpush.msra.mxu0 %v118
  %582 = vmatpush.msra.mxu0 %v99
  %583 = vmatpush.msra.mxu0 %v81
  %584 = vmatmul.f32.gmra.mxu0 %v58
  %v585 = vpop.f32.mrf.mxu0
  %v586 = vadd.f32 0.0, %v585
  %587 = vdwg.mxu0
  %588 = vmatpush.msra.mxu0 0.0
  %589 = vmatpush.msra.mxu0 0.0
  %590 = vmatpush.msra.mxu0 0.0
  %591 = vmatpush.msra.mxu0 0.0
  %592 = vmatpush.msra.mxu0 0.0
  %593 = vmatpush.msra.mxu0 0.0
  %594 = vmatpush.msra.mxu0 0.0
  %595 = vmatpush.msra.mxu0 0.0
  %596 = vmatpush.msra.mxu0 0.0
  %597 = vmatpush.msra.mxu0 0.0
  %598 = vmatpush.msra.mxu0 0.0
  %599 = vmatpush.msra.mxu0 0.0
  %600 = vmatpush.msra.mxu0 0.0
  %601 = vmatpush.msra.mxu0 0.0
  %602 = vmatpush.msra.mxu0 %v363
  %603 = vmatpush.msra.mxu0 %v345
  %604 = vmatmul.f32.gmra.mxu0 %v366
  %v605 = vpop.f32.mrf.mxu0
  %v606 = vadd.f32 %v586, %v605
  %607 = vdwg.mxu0
  %v609 = vperm.slane %v65, 0
  %v610 = vperm.slane %v65, 1
  %v611 = vperm.slane %v65, 2
  %v612 = vperm.slane %v65, 3
  %v613 = vperm.slane %v65, 4
  %v614 = vperm.slane %v65, 5
  %v621 = vmul.f32 %v406, %v609
  %v622 = vmul.f32 %v446, %v610
  %v623 = vmul.f32 %v486, %v611
  %v624 = vmul.f32 %v526, %v612
  %v625 = vmul.f32 %v566, %v613
  %v626 = vmul.f32 %v606, %v614
  %v627 = vadd.f32 %v621, %v622
  %v628 = vadd.f32 %v627, %v623
  %v629 = vadd.f32 %v628, %v624
  %v630 = vadd.f32 %v629, %v625
  %v631 = vadd.f32 %v630, %v626
  %632 = vadd.xlane.f32.xlu0 %v631
  %v633 = vpop.xlane.xlu0 %632
  %v634 = vmul.f32 %v621, %v406
  %v635 = vmul.f32 %v622, %v446
  %v636 = vmul.f32 %v623, %v486
  %v637 = vmul.f32 %v624, %v526
  %v638 = vmul.f32 %v625, %v566
  %v639 = vmul.f32 %v626, %v606
  %v640 = vadd.f32 %v634, %v635
  %v641 = vadd.f32 %v640, %v636
  %v642 = vadd.f32 %v641, %v637
  %v643 = vadd.f32 %v642, %v638
  %v644 = vadd.f32 %v643, %v639
  %645 = vadd.xlane.f32.xlu0 %v644
  %v646 = vpop.xlane.xlu0 %645
  %v647 = vmul.f32 %v633, 0.001953125
  %v648 = vmul.f32 %v646, 0.001953125
  %v649 = vmul.f32 %v647, %v647
  %v650 = vsub.f32 %v648, %v649
  %v651 = vmax.f32 %v650, 0.0
  %v652 = vadd.f32 %v651, 1e-05
  %v653 = vrsqrt.pop %v652
  %v654 = vmul.f32 %v653, %v652
  %v655 = vmul.f32 %v654, %v653
  %v656 = vmul.f32 0.5, %v655
  %v657 = vsub.f32 1.5, %v656
  %v658 = vmul.f32 %v653, %v657
  %vm659 = vweird.f32 %v652
  %vm660 = vweird.f32 %v653
  %vm661 = vmor %vm659, %vm660
  %v662 = vsel %vm661, %v653, %v658
  %v663 = vmul.f32 %v662, %v60
  %v664 = vmul.f32 %v647, %v663
  %v665 = vsub.f32 %v61, %v664
  %667 = vset.pattern.permute.xlu0 0
  %668 = vperm.xlu0 %667, %v663
  %v669 = vpop.permute.xlu0 %668
  %v671 = vmul.f32 %v406, %v669
  %v672 = vmul.f32 %v446, %v669
  %v673 = vmul.f32 %v486, %v669
  %v674 = vmul.f32 %v526, %v669
  %v675 = vmul.f32 %v566, %v669
  %v676 = vmul.f32 %v606, %v669
  %678 = vset.pattern.permute.xlu0 0
  %679 = vperm.xlu0 %678, %v665
  %v680 = vpop.permute.xlu0 %679
  %v682 = vadd.f32 %v671, %v680
  %v683 = vadd.f32 %v672, %v680
  %v684 = vadd.f32 %v673, %v680
  %v685 = vadd.f32 %v674, %v680
  %v686 = vadd.f32 %v675, %v680
  %v687 = vadd.f32 %v676, %v680
  %v688 = vmax.f32 %v682, 0.0
  %v689 = vmax.f32 %v683, 0.0
  %v690 = vmax.f32 %v684, 0.0
  %v691 = vmax.f32 %v685, 0.0
  %v692 = vmax.f32 %v686, 0.0
  %v693 = vmax.f32 %v687, 0.0
  %v694 = vmul.f32 %v688, %v609
  %v695 = vmul.f32 %v689, %v610
  %v696 = vmul.f32 %v690, %v611
  %v697 = vmul.f32 %v691, %v612
  %v698 = vmul.f32 %v692, %v613
  %v699 = vmul.f32 %v693, %v614
  %700 = vrot.lane.b32.xlu0 %v694, 19
  %v701 = vpop.permute.xlu0 %700
  %702 = vrot.lane.b32.xlu0 %v695, 19
  %v703 = vpop.permute.xlu0 %702
  %704 = vrot.lane.b32.xlu0 %v696, 19
  %v705 = vpop.permute.xlu0 %704
  %706 = vrot.lane.b32.xlu0 %v697, 19
  %v707 = vpop.permute.xlu0 %706
  %708 = vrot.lane.b32.xlu0 %v698, 19
  %v709 = vpop.permute.xlu0 %708
  %710 = vrot.lane.b32.xlu0 %v699, 19
  %v711 = vpop.permute.xlu0 %710
  %v712 = vsel %vm80, %v709, %v711
  %v713 = vsel %vm80, %v707, %v709
  %v714 = vsel %vm80, %v705, %v707
  %v715 = vsel %vm80, %v703, %v705
  %v716 = vsel %vm80, %v701, %v703
  %v717 = vsel %vm80, %v711, %v701
  %718 = vrot.lane.b32.xlu0 %v694, 18
  %v719 = vpop.permute.xlu0 %718
  %720 = vrot.lane.b32.xlu0 %v695, 18
  %v721 = vpop.permute.xlu0 %720
  %722 = vrot.lane.b32.xlu0 %v696, 18
  %v723 = vpop.permute.xlu0 %722
  %724 = vrot.lane.b32.xlu0 %v697, 18
  %v725 = vpop.permute.xlu0 %724
  %726 = vrot.lane.b32.xlu0 %v698, 18
  %v727 = vpop.permute.xlu0 %726
  %728 = vrot.lane.b32.xlu0 %v699, 18
  %v729 = vpop.permute.xlu0 %728
  %v730 = vsel %vm117, %v727, %v729
  %v731 = vsel %vm117, %v725, %v727
  %v732 = vsel %vm117, %v723, %v725
  %v733 = vsel %vm117, %v721, %v723
  %v734 = vsel %vm117, %v719, %v721
  %v735 = vsel %vm117, %v729, %v719
  %736 = vrot.lane.b32.xlu0 %v694, 17
  %v737 = vpop.permute.xlu0 %736
  %738 = vrot.lane.b32.xlu0 %v695, 17
  %v739 = vpop.permute.xlu0 %738
  %740 = vrot.lane.b32.xlu0 %v696, 17
  %v741 = vpop.permute.xlu0 %740
  %742 = vrot.lane.b32.xlu0 %v697, 17
  %v743 = vpop.permute.xlu0 %742
  %744 = vrot.lane.b32.xlu0 %v698, 17
  %v745 = vpop.permute.xlu0 %744
  %746 = vrot.lane.b32.xlu0 %v699, 17
  %v747 = vpop.permute.xlu0 %746
  %v748 = vsel %vm154, %v745, %v747
  %v749 = vsel %vm154, %v743, %v745
  %v750 = vsel %vm154, %v741, %v743
  %v751 = vsel %vm154, %v739, %v741
  %v752 = vsel %vm154, %v737, %v739
  %v753 = vsel %vm154, %v747, %v737
  %754 = vrot.lane.b32.xlu0 %v694, 1
  %v755 = vpop.permute.xlu0 %754
  %756 = vrot.lane.b32.xlu0 %v695, 1
  %v757 = vpop.permute.xlu0 %756
  %758 = vrot.lane.b32.xlu0 %v696, 1
  %v759 = vpop.permute.xlu0 %758
  %760 = vrot.lane.b32.xlu0 %v697, 1
  %v761 = vpop.permute.xlu0 %760
  %762 = vrot.lane.b32.xlu0 %v698, 1
  %v763 = vpop.permute.xlu0 %762
  %764 = vrot.lane.b32.xlu0 %v699, 1
  %v765 = vpop.permute.xlu0 %764
  %v766 = vsel %vm191, %v763, %v765
  %v767 = vsel %vm191, %v761, %v763
  %v768 = vsel %vm191, %v759, %v761
  %v769 = vsel %vm191, %v757, %v759
  %v770 = vsel %vm191, %v755, %v757
  %v771 = vsel %vm191, %v765, %v755
  %772 = vrot.lane.b32.xlu0 %v694, 127
  %v773 = vpop.permute.xlu0 %772
  %774 = vrot.lane.b32.xlu0 %v695, 127
  %v775 = vpop.permute.xlu0 %774
  %776 = vrot.lane.b32.xlu0 %v696, 127
  %v777 = vpop.permute.xlu0 %776
  %778 = vrot.lane.b32.xlu0 %v697, 127
  %v779 = vpop.permute.xlu0 %778
  %780 = vrot.lane.b32.xlu0 %v698, 127
  %v781 = vpop.permute.xlu0 %780
  %782 = vrot.lane.b32.xlu0 %v699, 127
  %v783 = vpop.permute.xlu0 %782
  %v784 = vsel %vm228, %v781, %v783
  %v785 = vsel %vm228, %v779, %v781
  %v786 = vsel %vm228, %v777, %v779
  %v787 = vsel %vm228, %v775, %v777
  %v788 = vsel %vm228, %v773, %v775
  %v789 = vsel %vm228, %v783, %v773
  %790 = vrot.lane.b32.xlu0 %v694, 111
  %v791 = vpop.permute.xlu0 %790
  %792 = vrot.lane.b32.xlu0 %v695, 111
  %v793 = vpop.permute.xlu0 %792
  %794 = vrot.lane.b32.xlu0 %v696, 111
  %v795 = vpop.permute.xlu0 %794
  %796 = vrot.lane.b32.xlu0 %v697, 111
  %v797 = vpop.permute.xlu0 %796
  %798 = vrot.lane.b32.xlu0 %v698, 111
  %v799 = vpop.permute.xlu0 %798
  %800 = vrot.lane.b32.xlu0 %v699, 111
  %v801 = vpop.permute.xlu0 %800
  %v802 = vsel %vm265, %v799, %v801
  %v803 = vsel %vm265, %v797, %v799
  %v804 = vsel %vm265, %v795, %v797
  %v805 = vsel %vm265, %v793, %v795
  %v806 = vsel %vm265, %v791, %v793
  %v807 = vsel %vm265, %v801, %v791
  %808 = vrot.lane.b32.xlu0 %v694, 110
  %v809 = vpop.permute.xlu0 %808
  %810 = vrot.lane.b32.xlu0 %v695, 110
  %v811 = vpop.permute.xlu0 %810
  %812 = vrot.lane.b32.xlu0 %v696, 110
  %v813 = vpop.permute.xlu0 %812
  %814 = vrot.lane.b32.xlu0 %v697, 110
  %v815 = vpop.permute.xlu0 %814
  %816 = vrot.lane.b32.xlu0 %v698, 110
  %v817 = vpop.permute.xlu0 %816
  %818 = vrot.lane.b32.xlu0 %v699, 110
  %v819 = vpop.permute.xlu0 %818
  %v820 = vsel %vm302, %v817, %v819
  %v821 = vsel %vm302, %v815, %v817
  %v822 = vsel %vm302, %v813, %v815
  %v823 = vsel %vm302, %v811, %v813
  %v824 = vsel %vm302, %v809, %v811
  %v825 = vsel %vm302, %v819, %v809
  %826 = vrot.lane.b32.xlu0 %v694, 109
  %v827 = vpop.permute.xlu0 %826
  %828 = vrot.lane.b32.xlu0 %v695, 109
  %v829 = vpop.permute.xlu0 %828
  %830 = vrot.lane.b32.xlu0 %v696, 109
  %v831 = vpop.permute.xlu0 %830
  %832 = vrot.lane.b32.xlu0 %v697, 109
  %v833 = vpop.permute.xlu0 %832
  %834 = vrot.lane.b32.xlu0 %v698, 109
  %v835 = vpop.permute.xlu0 %834
  %836 = vrot.lane.b32.xlu0 %v699, 109
  %v837 = vpop.permute.xlu0 %836
  %v838 = vsel %vm339, %v835, %v837
  %v839 = vsel %vm339, %v833, %v835
  %v840 = vsel %vm339, %v831, %v833
  %v841 = vsel %vm339, %v829, %v831
  %v842 = vsel %vm339, %v827, %v829
  %v843 = vsel %vm339, %v837, %v827
  %vm844 = vcmask 588800
  %v846 = vsel %vm844, %v62, 0
  %848 = vmatpush.msra.mxu0 0.0
  %849 = vmatpush.msra.mxu0 0.0
  %850 = vmatpush.msra.mxu0 0.0
  %851 = vmatpush.msra.mxu0 0.0
  %852 = vmatpush.msra.mxu0 0.0
  %853 = vmatpush.msra.mxu0 0.0
  %854 = vmatpush.msra.mxu0 0.0
  %855 = vmatpush.msra.mxu0 %v842
  %856 = vmatpush.msra.mxu0 %v824
  %857 = vmatpush.msra.mxu0 %v806
  %858 = vmatpush.msra.mxu0 %v788
  %859 = vmatpush.msra.mxu0 %v694
  %860 = vmatpush.msra.mxu0 %v771
  %861 = vmatpush.msra.mxu0 %v753
  %862 = vmatpush.msra.mxu0 %v735
  %863 = vmatpush.msra.mxu0 %v717
  %864 = vmatmul.f32.gmra.mxu0 %v846
  %v865 = vpop.f32.mrf.mxu0
  %v866 = vadd.f32 0.0, %v865
  %867 = vdwg.mxu0
  %868 = vmatpush.msra.mxu0 0.0
  %869 = vmatpush.msra.mxu0 0.0
  %870 = vmatpush.msra.mxu0 0.0
  %871 = vmatpush.msra.mxu0 0.0
  %872 = vmatpush.msra.mxu0 0.0
  %873 = vmatpush.msra.mxu0 0.0
  %874 = vmatpush.msra.mxu0 0.0
  %875 = vmatpush.msra.mxu0 %v841
  %876 = vmatpush.msra.mxu0 %v823
  %877 = vmatpush.msra.mxu0 %v805
  %878 = vmatpush.msra.mxu0 %v787
  %879 = vmatpush.msra.mxu0 %v695
  %880 = vmatpush.msra.mxu0 %v770
  %881 = vmatpush.msra.mxu0 %v752
  %882 = vmatpush.msra.mxu0 %v734
  %883 = vmatpush.msra.mxu0 %v716
  %884 = vmatmul.f32.gmra.mxu0 %v846
  %v885 = vpop.f32.mrf.mxu0
  %v886 = vadd.f32 0.0, %v885
  %887 = vdwg.mxu0
  %888 = vmatpush.msra.mxu0 0.0
  %889 = vmatpush.msra.mxu0 0.0
  %890 = vmatpush.msra.mxu0 0.0
  %891 = vmatpush.msra.mxu0 0.0
  %892 = vmatpush.msra.mxu0 0.0
  %893 = vmatpush.msra.mxu0 0.0
  %894 = vmatpush.msra.mxu0 0.0
  %895 = vmatpush.msra.mxu0 %v840
  %896 = vmatpush.msra.mxu0 %v822
  %897 = vmatpush.msra.mxu0 %v804
  %898 = vmatpush.msra.mxu0 %v786
  %899 = vmatpush.msra.mxu0 %v696
  %900 = vmatpush.msra.mxu0 %v769
  %901 = vmatpush.msra.mxu0 %v751
  %902 = vmatpush.msra.mxu0 %v733
  %903 = vmatpush.msra.mxu0 %v715
  %904 = vmatmul.f32.gmra.mxu0 %v846
  %v905 = vpop.f32.mrf.mxu0
  %v906 = vadd.f32 0.0, %v905
  %907 = vdwg.mxu0
  %908 = vmatpush.msra.mxu0 0.0
  %909 = vmatpush.msra.mxu0 0.0
  %910 = vmatpush.msra.mxu0 0.0
  %911 = vmatpush.msra.mxu0 0.0
  %912 = vmatpush.msra.mxu0 0.0
  %913 = vmatpush.msra.mxu0 0.0
  %914 = vmatpush.msra.mxu0 0.0
  %915 = vmatpush.msra.mxu0 %v839
  %916 = vmatpush.msra.mxu0 %v821
  %917 = vmatpush.msra.mxu0 %v803
  %918 = vmatpush.msra.mxu0 %v785
  %919 = vmatpush.msra.mxu0 %v697
  %920 = vmatpush.msra.mxu0 %v768
  %921 = vmatpush.msra.mxu0 %v750
  %922 = vmatpush.msra.mxu0 %v732
  %923 = vmatpush.msra.mxu0 %v714
  %924 = vmatmul.f32.gmra.mxu0 %v846
  %v925 = vpop.f32.mrf.mxu0
  %v926 = vadd.f32 0.0, %v925
  %927 = vdwg.mxu0
  %928 = vmatpush.msra.mxu0 0.0
  %929 = vmatpush.msra.mxu0 0.0
  %930 = vmatpush.msra.mxu0 0.0
  %931 = vmatpush.msra.mxu0 0.0
  %932 = vmatpush.msra.mxu0 0.0
  %933 = vmatpush.msra.mxu0 0.0
  %934 = vmatpush.msra.mxu0 0.0
  %935 = vmatpush.msra.mxu0 %v838
  %936 = vmatpush.msra.mxu0 %v820
  %937 = vmatpush.msra.mxu0 %v802
  %938 = vmatpush.msra.mxu0 %v784
  %939 = vmatpush.msra.mxu0 %v698
  %940 = vmatpush.msra.mxu0 %v767
  %941 = vmatpush.msra.mxu0 %v749
  %942 = vmatpush.msra.mxu0 %v731
  %943 = vmatpush.msra.mxu0 %v713
  %944 = vmatmul.f32.gmra.mxu0 %v846
  %v945 = vpop.f32.mrf.mxu0
  %v946 = vadd.f32 0.0, %v945
  %947 = vdwg.mxu0
  %948 = vmatpush.msra.mxu0 0.0
  %949 = vmatpush.msra.mxu0 0.0
  %950 = vmatpush.msra.mxu0 0.0
  %951 = vmatpush.msra.mxu0 0.0
  %952 = vmatpush.msra.mxu0 0.0
  %953 = vmatpush.msra.mxu0 0.0
  %954 = vmatpush.msra.mxu0 0.0
  %955 = vmatpush.msra.mxu0 %v843
  %956 = vmatpush.msra.mxu0 %v825
  %957 = vmatpush.msra.mxu0 %v807
  %958 = vmatpush.msra.mxu0 %v789
  %959 = vmatpush.msra.mxu0 %v699
  %960 = vmatpush.msra.mxu0 %v766
  %961 = vmatpush.msra.mxu0 %v748
  %962 = vmatpush.msra.mxu0 %v730
  %963 = vmatpush.msra.mxu0 %v712
  %964 = vmatmul.f32.gmra.mxu0 %v846
  %v965 = vpop.f32.mrf.mxu0
  %v966 = vadd.f32 0.0, %v965
  %967 = vdwg.mxu0
  %v968 = vmul.f32 %v866, %v609
  %v969 = vmul.f32 %v886, %v610
  %v970 = vmul.f32 %v906, %v611
  %v971 = vmul.f32 %v926, %v612
  %v972 = vmul.f32 %v946, %v613
  %v973 = vmul.f32 %v966, %v614
  %v974 = vadd.f32 %v968, %v969
  %v975 = vadd.f32 %v974, %v970
  %v976 = vadd.f32 %v975, %v971
  %v977 = vadd.f32 %v976, %v972
  %v978 = vadd.f32 %v977, %v973
  %979 = vadd.xlane.f32.xlu0 %v978
  %v980 = vpop.xlane.xlu0 %979
  %v981 = vmul.f32 %v968, %v866
  %v982 = vmul.f32 %v969, %v886
  %v983 = vmul.f32 %v970, %v906
  %v984 = vmul.f32 %v971, %v926
  %v985 = vmul.f32 %v972, %v946
  %v986 = vmul.f32 %v973, %v966
  %v987 = vadd.f32 %v981, %v982
  %v988 = vadd.f32 %v987, %v983
  %v989 = vadd.f32 %v988, %v984
  %v990 = vadd.f32 %v989, %v985
  %v991 = vadd.f32 %v990, %v986
  %992 = vadd.xlane.f32.xlu0 %v991
  %v993 = vpop.xlane.xlu0 %992
  %v994 = vmul.f32 %v980, 0.001953125
  %v995 = vmul.f32 %v993, 0.001953125
  %v996 = vmul.f32 %v994, %v994
  %v997 = vsub.f32 %v995, %v996
  %v998 = vmax.f32 %v997, 0.0
  %v999 = vadd.f32 %v998, 1e-05
  %v1000 = vrsqrt.pop %v999
  %v1001 = vmul.f32 %v1000, %v999
  %v1002 = vmul.f32 %v1001, %v1000
  %v1003 = vmul.f32 0.5, %v1002
  %v1004 = vsub.f32 1.5, %v1003
  %v1005 = vmul.f32 %v1000, %v1004
  %vm1006 = vweird.f32 %v999
  %vm1007 = vweird.f32 %v1000
  %vm1008 = vmor %vm1006, %vm1007
  %v1009 = vsel %vm1008, %v1000, %v1005
  %v1010 = vmul.f32 %v1009, %v63
  %v1011 = vmul.f32 %v994, %v1010
  %v1012 = vsub.f32 %v64, %v1011
  %1014 = vset.pattern.permute.xlu0 0
  %1015 = vperm.xlu0 %1014, %v1010
  %v1016 = vpop.permute.xlu0 %1015
  %v1018 = vmul.f32 %v866, %v1016
  %v1019 = vmul.f32 %v886, %v1016
  %v1020 = vmul.f32 %v906, %v1016
  %v1021 = vmul.f32 %v926, %v1016
  %v1022 = vmul.f32 %v946, %v1016
  %v1023 = vmul.f32 %v966, %v1016
  %1025 = vset.pattern.permute.xlu0 0
  %1026 = vperm.xlu0 %1025, %v1012
  %v1027 = vpop.permute.xlu0 %1026
  %v1029 = vadd.f32 %v1018, %v1027
  %v1030 = vadd.f32 %v1019, %v1027
  %v1031 = vadd.f32 %v1020, %v1027
  %v1032 = vadd.f32 %v1021, %v1027
  %v1033 = vadd.f32 %v1022, %v1027
  %v1034 = vadd.f32 %v1023, %v1027
  %v1035 = vmax.f32 %v1029, 0.0
  %v1036 = vmax.f32 %v1030, 0.0
  %v1037 = vmax.f32 %v1031, 0.0
  %v1038 = vmax.f32 %v1032, 0.0
  %v1039 = vmax.f32 %v1033, 0.0
  %v1040 = vmax.f32 %v1034, 0.0
  %v1041 = vmul.f32 %v1035, %v609
  %v1042 = vmul.f32 %v1036, %v610
  %v1043 = vmul.f32 %v1037, %v611
  %v1044 = vmul.f32 %v1038, %v612
  %v1045 = vmul.f32 %v1039, %v613
  %v1046 = vmul.f32 %v1040, %v614
  %v1047 = vld [vmem:[%s9] sm:$0x1]
  %v1048 = vld [vmem:[#allocation2] sm:$0x1]
  %1050 = vset.pattern.permute.xlu0 0
  %1051 = vperm.xlu0 %1050, %v1048
  %v1052 = vpop.permute.xlu0 %1051
  %v1054 = vperm.slane %v1052, 0
  %vm1055 = vcmask 64512
  %v1057 = vsel %vm1055, %v1047, 0
  %1059 = vmatpush.msra.mxu0 0.0
  %1060 = vmatpush.msra.mxu0 0.0
  %1061 = vmatpush.msra.mxu0 0.0
  %1062 = vmatpush.msra.mxu0 0.0
  %1063 = vmatpush.msra.mxu0 0.0
  %1064 = vmatpush.msra.mxu0 0.0
  %1065 = vmatpush.msra.mxu0 0.0
  %1066 = vmatpush.msra.mxu0 0.0
  %1067 = vmatpush.msra.mxu0 0.0
  %1068 = vmatpush.msra.mxu0 0.0
  %1069 = vmatpush.msra.mxu0 0.0
  %1070 = vmatpush.msra.mxu0 0.0
  %1071 = vmatpush.msra.mxu0 0.0
  %1072 = vmatpush.msra.mxu0 0.0
  %1073 = vmatpush.msra.mxu0 0.0
  %1074 = vmatpush.msra.mxu0 %v1041
  %1075 = vmatmul.f32.gmra.mxu0 %v1057
  %v1076 = vpop.f32.mrf.mxu0
  %v1077 = vadd.f32 %v1054, %v1076
  %1078 = vdwg.mxu0
  %1079 = vmatpush.msra.mxu0 0.0
  %1080 = vmatpush.msra.mxu0 0.0
  %1081 = vmatpush.msra.mxu0 0.0
  %1082 = vmatpush.msra.mxu0 0.0
  %1083 = vmatpush.msra.mxu0 0.0
  %1084 = vmatpush.msra.mxu0 0.0
  %1085 = vmatpush.msra.mxu0 0.0
  %1086 = vmatpush.msra.mxu0 0.0
  %1087 = vmatpush.msra.mxu0 0.0
  %1088 = vmatpush.msra.mxu0 0.0
  %1089 = vmatpush.msra.mxu0 0.0
  %1090 = vmatpush.msra.mxu0 0.0
  %1091 = vmatpush.msra.mxu0 0.0
  %1092 = vmatpush.msra.mxu0 0.0
  %1093 = vmatpush.msra.mxu0 0.0
  %1094 = vmatpush.msra.mxu0 %v1042
  %1095 = vmatmul.f32.gmra.mxu0 %v1057
  %v1096 = vpop.f32.mrf.mxu0
  %v1097 = vadd.f32 %v1054, %v1096
  %1098 = vdwg.mxu0
  %1099 = vmatpush.msra.mxu0 0.0
  %1100 = vmatpush.msra.mxu0 0.0
  %1101 = vmatpush.msra.mxu0 0.0
  %1102 = vmatpush.msra.mxu0 0.0
  %1103 = vmatpush.msra.mxu0 0.0
  %1104 = vmatpush.msra.mxu0 0.0
  %1105 = vmatpush.msra.mxu0 0.0
  %1106 = vmatpush.msra.mxu0 0.0
  %1107 = vmatpush.msra.mxu0 0.0
  %1108 = vmatpush.msra.mxu0 0.0
  %1109 = vmatpush.msra.mxu0 0.0
  %1110 = vmatpush.msra.mxu0 0.0
  %1111 = vmatpush.msra.mxu0 0.0
  %1112 = vmatpush.msra.mxu0 0.0
  %1113 = vmatpush.msra.mxu0 0.0
  %1114 = vmatpush.msra.mxu0 %v1043
  %1115 = vmatmul.f32.gmra.mxu0 %v1057
  %v1116 = vpop.f32.mrf.mxu0
  %v1117 = vadd.f32 %v1054, %v1116
  %1118 = vdwg.mxu0
  %1119 = vmatpush.msra.mxu0 0.0
  %1120 = vmatpush.msra.mxu0 0.0
  %1121 = vmatpush.msra.mxu0 0.0
  %1122 = vmatpush.msra.mxu0 0.0
  %1123 = vmatpush.msra.mxu0 0.0
  %1124 = vmatpush.msra.mxu0 0.0
  %1125 = vmatpush.msra.mxu0 0.0
  %1126 = vmatpush.msra.mxu0 0.0
  %1127 = vmatpush.msra.mxu0 0.0
  %1128 = vmatpush.msra.mxu0 0.0
  %1129 = vmatpush.msra.mxu0 0.0
  %1130 = vmatpush.msra.mxu0 0.0
  %1131 = vmatpush.msra.mxu0 0.0
  %1132 = vmatpush.msra.mxu0 0.0
  %1133 = vmatpush.msra.mxu0 0.0
  %1134 = vmatpush.msra.mxu0 %v1044
  %1135 = vmatmul.f32.gmra.mxu0 %v1057
  %v1136 = vpop.f32.mrf.mxu0
  %v1137 = vadd.f32 %v1054, %v1136
  %1138 = vdwg.mxu0
  %1139 = vmatpush.msra.mxu0 0.0
  %1140 = vmatpush.msra.mxu0 0.0
  %1141 = vmatpush.msra.mxu0 0.0
  %1142 = vmatpush.msra.mxu0 0.0
  %1143 = vmatpush.msra.mxu0 0.0
  %1144 = vmatpush.msra.mxu0 0.0
  %1145 = vmatpush.msra.mxu0 0.0
  %1146 = vmatpush.msra.mxu0 0.0
  %1147 = vmatpush.msra.mxu0 0.0
  %1148 = vmatpush.msra.mxu0 0.0
  %1149 = vmatpush.msra.mxu0 0.0
  %1150 = vmatpush.msra.mxu0 0.0
  %1151 = vmatpush.msra.mxu0 0.0
  %1152 = vmatpush.msra.mxu0 0.0
  %1153 = vmatpush.msra.mxu0 0.0
  %1154 = vmatpush.msra.mxu0 %v1045
  %1155 = vmatmul.f32.gmra.mxu0 %v1057
  %v1156 = vpop.f32.mrf.mxu0
  %v1157 = vadd.f32 %v1054, %v1156
  %1158 = vdwg.mxu0
  %1159 = vmatpush.msra.mxu0 0.0
  %1160 = vmatpush.msra.mxu0 0.0
  %1161 = vmatpush.msra.mxu0 0.0
  %1162 = vmatpush.msra.mxu0 0.0
  %1163 = vmatpush.msra.mxu0 0.0
  %1164 = vmatpush.msra.mxu0 0.0
  %1165 = vmatpush.msra.mxu0 0.0
  %1166 = vmatpush.msra.mxu0 0.0
  %1167 = vmatpush.msra.mxu0 0.0
  %1168 = vmatpush.msra.mxu0 0.0
  %1169 = vmatpush.msra.mxu0 0.0
  %1170 = vmatpush.msra.mxu0 0.0
  %1171 = vmatpush.msra.mxu0 0.0
  %1172 = vmatpush.msra.mxu0 0.0
  %1173 = vmatpush.msra.mxu0 0.0
  %1174 = vmatpush.msra.mxu0 %v1046
  %1175 = vmatmul.f32.gmra.mxu0 %v1057
  %v1176 = vpop.f32.mrf.mxu0
  %v1177 = vadd.f32 %v1054, %v1176
  %1178 = vdwg.mxu0
  %v1179 = vsub.f32 0.0, %v1077
  %v1180 = vsub.f32 0.0, %v1097
  %v1181 = vsub.f32 0.0, %v1117
  %v1182 = vsub.f32 0.0, %v1137
  %v1183 = vsub.f32 0.0, %v1157
  %v1184 = vsub.f32 0.0, %v1177
  %v1185 = vmul.f32 %v1179, 1.442695
  %v1186 = vpow.pop %v1185
  %v1187 = vmul.f32 %v1180, 1.442695
  %v1188 = vpow.pop %v1187
  %v1189 = vmul.f32 %v1181, 1.442695
  %v1190 = vpow.pop %v1189
  %v1191 = vmul.f32 %v1182, 1.442695
  %v1192 = vpow.pop %v1191
  %v1193 = vmul.f32 %v1183, 1.442695
  %v1194 = vpow.pop %v1193
  %v1195 = vmul.f32 %v1184, 1.442695
  %v1196 = vpow.pop %v1195
  %v1197 = vadd.f32 %v1186, 1.0
  %v1198 = vadd.f32 %v1188, 1.0
  %v1199 = vadd.f32 %v1190, 1.0
  %v1200 = vadd.f32 %v1192, 1.0
  %v1201 = vadd.f32 %v1194, 1.0
  %v1202 = vadd.f32 %v1196, 1.0
  %v1203 = vrcp.pop %v1197
  %v1204 = vmul.f32 %v1197, %v1203
  %v1205 = vsub.f32 1.0, %v1204
  %v1206 = vmul.f32 %v1203, %v1205
  %v1207 = vadd.f32 %v1203, %v1206
  %vm1208 = vweird.f32 %v1197
  %vm1209 = vweird.f32 %v1203
  %vm1210 = vmor %vm1208, %vm1209
  %v1211 = vsel %vm1210, %v1203, %v1207
  %v1212 = vand.u32 2147483647, %v1197
  %vm1213 = vcmp.eq.f32.partialorder %v1212, 8.507059e+37
  %v1214 = vand.u32 %v1197, 2147483648
  %v1215 = vor.u32 1.1754944e-38, %v1214
  %v1216 = vsel %vm1213, %v1215, %v1211
  %v1217 = vmul.f32 1.0, %v1216
  %v1218 = vrcp.pop %v1198
  %v1219 = vmul.f32 %v1198, %v1218
  %v1220 = vsub.f32 1.0, %v1219
  %v1221 = vmul.f32 %v1218, %v1220
  %v1222 = vadd.f32 %v1218, %v1221
  %vm1223 = vweird.f32 %v1198
  %vm1224 = vweird.f32 %v1218
  %vm1225 = vmor %vm1223, %vm1224
  %v1226 = vsel %vm1225, %v1218, %v1222
  %v1227 = vand.u32 2147483647, %v1198
  %vm1228 = vcmp.eq.f32.partialorder %v1227, 8.507059e+37
  %v1229 = vand.u32 %v1198, 2147483648
  %v1230 = vor.u32 1.1754944e-38, %v1229
  %v1231 = vsel %vm1228, %v1230, %v1226
  %v1232 = vmul.f32 1.0, %v1231
  %v1233 = vrcp.pop %v1199
  %v1234 = vmul.f32 %v1199, %v1233
  %v1235 = vsub.f32 1.0, %v1234
  %v1236 = vmul.f32 %v1233, %v1235
  %v1237 = vadd.f32 %v1233, %v1236
  %vm1238 = vweird.f32 %v1199
  %vm1239 = vweird.f32 %v1233
  %vm1240 = vmor %vm1238, %vm1239
  %v1241 = vsel %vm1240, %v1233, %v1237
  %v1242 = vand.u32 2147483647, %v1199
  %vm1243 = vcmp.eq.f32.partialorder %v1242, 8.507059e+37
  %v1244 = vand.u32 %v1199, 2147483648
  %v1245 = vor.u32 1.1754944e-38, %v1244
  %v1246 = vsel %vm1243, %v1245, %v1241
  %v1247 = vmul.f32 1.0, %v1246
  %v1248 = vrcp.pop %v1200
  %v1249 = vmul.f32 %v1200, %v1248
  %v1250 = vsub.f32 1.0, %v1249
  %v1251 = vmul.f32 %v1248, %v1250
  %v1252 = vadd.f32 %v1248, %v1251
  %vm1253 = vweird.f32 %v1200
  %vm1254 = vweird.f32 %v1248
  %vm1255 = vmor %vm1253, %vm1254
  %v1256 = vsel %vm1255, %v1248, %v1252
  %v1257 = vand.u32 2147483647, %v1200
  %vm1258 = vcmp.eq.f32.partialorder %v1257, 8.507059e+37
  %v1259 = vand.u32 %v1200, 2147483648
  %v1260 = vor.u32 1.1754944e-38, %v1259
  %v1261 = vsel %vm1258, %v1260, %v1256
  %v1262 = vmul.f32 1.0, %v1261
  %v1263 = vrcp.pop %v1201
  %v1264 = vmul.f32 %v1201, %v1263
  %v1265 = vsub.f32 1.0, %v1264
  %v1266 = vmul.f32 %v1263, %v1265
  %v1267 = vadd.f32 %v1263, %v1266
  %vm1268 = vweird.f32 %v1201
  %vm1269 = vweird.f32 %v1263
  %vm1270 = vmor %vm1268, %vm1269
  %v1271 = vsel %vm1270, %v1263, %v1267
  %v1272 = vand.u32 2147483647, %v1201
  %vm1273 = vcmp.eq.f32.partialorder %v1272, 8.507059e+37
  %v1274 = vand.u32 %v1201, 2147483648
  %v1275 = vor.u32 1.1754944e-38, %v1274
  %v1276 = vsel %vm1273, %v1275, %v1271
  %v1277 = vmul.f32 1.0, %v1276
  %v1278 = vrcp.pop %v1202
  %v1279 = vmul.f32 %v1202, %v1278
  %v1280 = vsub.f32 1.0, %v1279
  %v1281 = vmul.f32 %v1278, %v1280
  %v1282 = vadd.f32 %v1278, %v1281
  %vm1283 = vweird.f32 %v1202
  %vm1284 = vweird.f32 %v1278
  %vm1285 = vmor %vm1283, %vm1284
  %v1286 = vsel %vm1285, %v1278, %v1282
  %v1287 = vand.u32 2147483647, %v1202
  %vm1288 = vcmp.eq.f32.partialorder %v1287, 8.507059e+37
  %v1289 = vand.u32 %v1202, 2147483648
  %v1290 = vor.u32 1.1754944e-38, %v1289
  %v1291 = vsel %vm1288, %v1290, %v1286
  %v1292 = vmul.f32 1.0, %v1291
  %v1299 = vrot.slane %v1232, 7
  %v1300 = vrot.slane %v1247, 6
  %v1301 = vrot.slane %v1262, 5
  %v1302 = vrot.slane %v1277, 4
  %v1303 = vrot.slane %v1292, 3
  %vm1304 = vcmask 1040384
  %v1305 = vsel %vm1304, %v1217, %v1299
  %vm1306 = vcmask 1041408
  %v1307 = vsel %vm1306, %v1305, %v1300
  %vm1308 = vcmask 1043459
  %v1309 = vsel %vm1308, %v1301, %v1302
  %vm1310 = vcmask 1044483
  %v1311 = vsel %vm1310, %v1309, %v1303
  %vm1312 = vcmask 1042432
  %v1313 = vsel %vm1312, %v1307, %v1311
  %v1315 = vlaneseq
  %vm1316 = vcmp.ge.s32.totalorder %v1315, 0
  %vm1317 = vcmp.lt.s32.totalorder %v1315, 768
  %vm1318 = vmand %vm1316, %vm1317
  %1319 = vst.msk [vmem:[%s11] sm:$0x3f] %vm1318, %v1313
  // Predicated region
  $region46: #{unet_forward.9} parent=0 // pred_check
    _
  $region47: #{unet_forward.9} parent=0 // pred_check_branch
    %1321 = sbr.rel (0) target = $region49
  $region48: #{unet_forward.9} parent=0 // pred_region
    _
  $region49: #{unet_forward.9} parent=0 // pred_fallthru
    _
  // Predicated region
  $region50: #{unet_forward.9} parent=0 // pred_check
    _
  $region51: #{unet_forward.9} parent=0 // pred_check_branch
    %1323 = sbr.rel (0) target = $region53
  $region52: #{unet_forward.9} parent=0 // pred_region
    _
  $region53: #{unet_forward.9} parent=0 // pred_fallthru
    _

</llo_original>
